<compile_context>
chip_gen: v7x
topology: tpu7x:2x2x1
jax: 0.10.0
libtpu: 0.0.40
codegen_flags: <defaults>
</compile_context>

<pallas_src>
import math
import jax
import jax.numpy as jnp
from jax import lax
from jax.experimental import pallas as pl
from jax.experimental.pallas import tpu as pltpu

# ---------------- synthetic BERT config (small) ----------------
VOCAB = 64
HIDDEN = 32
NUM_HEADS = 4
HEAD_DIM = HIDDEN // NUM_HEADS
INTERMEDIATE = 64
NUM_LAYERS = 2
NUM_CLASSES = 5
MAX_POS = 16
LN_EPS = 1e-12
PAD_CLASSES = 128          # lane-dense classifier output (sliced back to NUM_CLASSES)


# ---------------- shared math helpers (pure jnp, usable in-kernel) ----------------
def _layernorm(x, g, b):
    mu = jnp.mean(x, axis=-1, keepdims=True)
    var = jnp.mean(jnp.square(x - mu), axis=-1, keepdims=True)
    return (x - mu) * jax.lax.rsqrt(var + LN_EPS) * g + b


def _gelu(x):
    # TODO(synk): HF BERT uses exact erf-GELU; tanh approximation is used here
    # (kernel and reference use the same function so they match each other).
    c = math.sqrt(2.0 / math.pi)
    return 0.5 * x * (1.0 + jnp.tanh(c * (x + 0.044715 * x * x * x)))


# ---------------- fused Pallas kernel (whole forward, per batch element) ----------------
def fused_bert_kernel(emb_ref, abias_ref, embg_ref, embb_ref,
                      wqkv_ref, bqkv_ref, wo_ref, bo_ref,
                      ln1g_ref, ln1b_ref, wi_ref, bi_ref,
                      wff_ref, bff_ref, ln2g_ref, ln2b_ref,
                      fcw_ref, fcb_ref, o_ref):
    S = emb_ref.shape[1]
    scale = 1.0 / math.sqrt(HEAD_DIM)

    # embedding LayerNorm
    x = _layernorm(emb_ref[0], embg_ref[...], embb_ref[...])          # (S, H)
    key_bias = abias_ref[0]                                           # (1, S) additive mask (per key)

    # statically unrolled encoder layers; activation stays resident in VMEM/vregs
    for l in range(NUM_LAYERS):
        # fused QKV projection: one (S,H) x (H,3H) matmul
        qkv = jnp.dot(x, wqkv_ref[l],
                      preferred_element_type=jnp.float32) + bqkv_ref[l]   # (S, 3H)
        wo_l = wo_ref[l]                                                  # (H, H)

        # per-head attention, statically unrolled (pure 2D MXU matmuls, no reshapes,
        # no batched dot_general, no explicit transposes, no lane-axis concat)
        attn_proj = None
        for h in range(NUM_HEADS):
            lo = h * HEAD_DIM
            qh = qkv[:, lo:lo + HEAD_DIM]                                  # (S, D)
            kh = qkv[:, HIDDEN + lo:HIDDEN + lo + HEAD_DIM]                # (S, D)
            vh = qkv[:, 2 * HIDDEN + lo:2 * HIDDEN + lo + HEAD_DIM]        # (S, D)
            # q @ k^T via transposed-RHS contraction (trans_b matmul)
            s = lax.dot_general(qh, kh, (((1,), (1,)), ((), ())),
                                preferred_element_type=jnp.float32)
            s = s * scale + key_bias                                       # (S, S) + (1, S)
            s = s - jnp.max(s, axis=-1, keepdims=True)
            p = jnp.exp(s)
            p = p * pl.reciprocal(jnp.sum(p, axis=-1, keepdims=True), approx=True)
            ctx_h = jnp.dot(p, vh, preferred_element_type=jnp.float32)     # (S, D)
            # fold head directly into the output projection: ctx @ W_O == sum_h ctx_h @ W_O[h]
            contrib = jnp.dot(ctx_h, wo_l[lo:lo + HEAD_DIM, :],
                              preferred_element_type=jnp.float32)          # (S, H)
            attn_proj = contrib if attn_proj is None else attn_proj + contrib

        attn_out = attn_proj + bo_ref[l]
        h1 = _layernorm(x + attn_out, ln1g_ref[l], ln1b_ref[l])

        ffn = _gelu(jnp.dot(h1, wi_ref[l],
                            preferred_element_type=jnp.float32) + bi_ref[l])
        ffn = jnp.dot(ffn, wff_ref[l],
                      preferred_element_type=jnp.float32) + bff_ref[l]
        x = _layernorm(h1 + ffn, ln2g_ref[l], ln2b_ref[l])

    # lane-dense (padded-to-128) classifier output
    o_ref[0] = jnp.dot(x, fcw_ref[...],
                       preferred_element_type=jnp.float32) + fcb_ref[...]


# ---------------- pallas_call wrapper ----------------
def _bcast_spec(shape):
    n = len(shape)
    return pl.BlockSpec(shape, lambda i, _n=n: (0,) * _n)


_WEIGHT_ORDER = ("emb_ln_g", "emb_ln_b",
                 "wqkv", "bqkv", "wo", "bo",
                 "ln1g", "ln1b", "wi", "bi",
                 "wff", "bff", "ln2g", "ln2b",
                 "fc_w_pad", "fc_b_pad")


def fused_forward_call(emb, attn_bias, pp):
    B, S, H = emb.shape
    weights = [pp[name] for name in _WEIGHT_ORDER]
    w_specs = [_bcast_spec(w.shape) for w in weights]
    out = pl.pallas_call(
        fused_bert_kernel,
        out_shape=jax.ShapeDtypeStruct((B, S, PAD_CLASSES), jnp.float32),
        grid=(B,),
        in_specs=[pl.BlockSpec((1, S, H), lambda i: (i, 0, 0)),
                  pl.BlockSpec((1, 1, S), lambda i: (i, 0, 0))] + w_specs,
        out_specs=pl.BlockSpec((1, S, PAD_CLASSES), lambda i: (i, 0, 0)),
        compiler_params=pltpu.CompilerParams(
            dimension_semantics=("parallel",),          # lets v7x split batch over its 2 TCs
            vmem_limit_bytes=32 * 1024 * 1024),
    )(emb, attn_bias, *weights)
    return out[..., :NUM_CLASSES]


# ---------------- parameters ----------------
def init_params(key):
    def nrm(k, shape):
        return jax.random.normal(k, shape, dtype=jnp.float32) * 0.02

    keys = iter(jax.random.split(key, 8 + NUM_LAYERS * 16))
    params = {
        "word_emb": nrm(next(keys), (VOCAB, HIDDEN)),
        "pos_emb": nrm(next(keys), (MAX_POS, HIDDEN)),
        "type_emb": nrm(next(keys), (2, HIDDEN)),
        "emb_ln_g": jnp.ones((1, HIDDEN), jnp.float32),
        "emb_ln_b": jnp.zeros((1, HIDDEN), jnp.float32),
        "fc_w": nrm(next(keys), (HIDDEN, NUM_CLASSES)),
        "fc_b": jnp.zeros((1, NUM_CLASSES), jnp.float32),
        "layers": [],
    }
    for _ in range(NUM_LAYERS):
        layer = [
            nrm(next(keys), (HIDDEN, HIDDEN)), jnp.zeros((1, HIDDEN), jnp.float32),   # wq, bq
            nrm(next(keys), (HIDDEN, HIDDEN)), jnp.zeros((1, HIDDEN), jnp.float32),   # wk, bk
            nrm(next(keys), (HIDDEN, HIDDEN)), jnp.zeros((1, HIDDEN), jnp.float32),   # wv, bv
            nrm(next(keys), (HIDDEN, HIDDEN)), jnp.zeros((1, HIDDEN), jnp.float32),   # wo, bo
            jnp.ones((1, HIDDEN), jnp.float32), jnp.zeros((1, HIDDEN), jnp.float32),  # ln1
            nrm(next(keys), (HIDDEN, INTERMEDIATE)), jnp.zeros((1, INTERMEDIATE), jnp.float32),  # wi, bi
            nrm(next(keys), (INTERMEDIATE, HIDDEN)), jnp.zeros((1, HIDDEN), jnp.float32),        # wff, bff
            jnp.ones((1, HIDDEN), jnp.float32), jnp.zeros((1, HIDDEN), jnp.float32),  # ln2
        ]
        params["layers"].append(layer)
    return params


def prepare_pallas_params(params):
    """Stack per-layer weights into (NUM_LAYERS, ...) arrays and fuse QKV."""
    layers = params["layers"]

    def stack(idx):
        return jnp.stack([l[idx] for l in layers], axis=0)

    wq, bq, wk, bk, wv, bv = stack(0), stack(1), stack(2), stack(3), stack(4), stack(5)
    fc_w_pad = jnp.zeros((HIDDEN, PAD_CLASSES), jnp.float32).at[:, :NUM_CLASSES].set(params["fc_w"])
    fc_b_pad = jnp.zeros((1, PAD_CLASSES), jnp.float32).at[:, :NUM_CLASSES].set(params["fc_b"])
    return {
        "emb_ln_g": params["emb_ln_g"], "emb_ln_b": params["emb_ln_b"],
        "wqkv": jnp.concatenate([wq, wk, wv], axis=-1),      # (L, H, 3H)
        "bqkv": jnp.concatenate([bq, bk, bv], axis=-1),      # (L, 1, 3H)
        "wo": stack(6), "bo": stack(7),
        "ln1g": stack(8), "ln1b": stack(9),
        "wi": stack(10), "bi": stack(11),
        "wff": stack(12), "bff": stack(13),
        "ln2g": stack(14), "ln2b": stack(15),
        "fc_w_pad": fc_w_pad, "fc_b_pad": fc_b_pad,
    }


# ---------------- forward (embedding gather in JAX, everything else fused in Pallas) ----------------
def forward(params, input_ids, mask=None, pallas_params=None):
    B, S = input_ids.shape
    if mask is None:
        mask = jnp.ones((B, S), jnp.float32)
    if pallas_params is None:
        pallas_params = prepare_pallas_params(params)
    # TODO(synk): the embedding-table gather stays in plain JAX (data-dependent
    # row gather; no clean rectangular BlockSpec equivalent at this tiny scale).
    emb = (params["word_emb"][input_ids]
           + params["pos_emb"][:S][None, :, :]
           + params["type_emb"][0][None, None, :])
    attn_bias = ((1.0 - mask) * -10000.0)[:, None, :]       # (B, 1, S) additive mask
    return fused_forward_call(emb, attn_bias, pallas_params)


# ---------------- pure-JAX reference ----------------
def reference_forward(params, input_ids, mask=None):
    B, S = input_ids.shape
    if mask is None:
        mask = jnp.ones((B, S), jnp.float32)
    x = (params["word_emb"][input_ids]
         + params["pos_emb"][:S][None, :, :]
         + params["type_emb"][0][None, None, :])
    x = _layernorm(x, params["emb_ln_g"], params["emb_ln_b"])
    attn_bias = ((1.0 - mask) * -10000.0)[:, None, None, :]   # (B,1,1,S)
    for p in params["layers"]:
        (wq, bq, wk, bk, wv, bv, wo, bo, ln1g, ln1b,
         wi, bi, wff, bff, ln2g, ln2b) = p
        q = (x @ wq + bq).reshape(B, S, NUM_HEADS, HEAD_DIM)
        k = (x @ wk + bk).reshape(B, S, NUM_HEADS, HEAD_DIM)
        v = (x @ wv + bv).reshape(B, S, NUM_HEADS, HEAD_DIM)
        s = jnp.einsum("bqhd,bkhd->bhqk", q, k) / math.sqrt(HEAD_DIM) + attn_bias
        s = s - jnp.max(s, axis=-1, keepdims=True)
        pr = jnp.exp(s)
        pr = pr / jnp.sum(pr, axis=-1, keepdims=True)
        ctx = jnp.einsum("bhqk,bkhd->bqhd", pr, v).reshape(B, S, HIDDEN)
        attn_out = ctx @ wo + bo
        h1 = _layernorm(x + attn_out, ln1g, ln1b)
        ffn = _gelu(h1 @ wi + bi) @ wff + bff
        x = _layernorm(h1 + ffn, ln2g, ln2b)
    return x @ params["fc_w"] + params["fc_b"]


if __name__ == "__main__":
    key = jax.random.PRNGKey(0)
    pkey, dkey = jax.random.split(key)
    params = init_params(pkey)
    pallas_params = prepare_pallas_params(params)

    B, S = 2, 8
    input_ids = jax.random.randint(dkey, (B, S), 0, VOCAB, dtype=jnp.int32)
    mask = jnp.ones((B, S), jnp.float32).at[1, 6:].set(0.0)   # second sequence padded

    out = forward(params, input_ids, mask, pallas_params)
    out = jax.block_until_ready(out)

    assert out.shape == (B, S, NUM_CLASSES), out.shape
    assert bool(jnp.all(jnp.isfinite(out)))
    ref = reference_forward(params, input_ids, mask)
    assert bool(jnp.allclose(out, ref, atol=1e-2, rtol=1e-2)), \
        float(jnp.max(jnp.abs(out - ref)))
    print("KERNEL_OK")
</pallas_src>

<mosaic_0001>
module attributes {stable_mosaic.version = 11 : i64} {
  func.func @fused_bert_kernel(%arg0: i32, %arg1: memref<1x8x32xf32, #tpu.memory_space<vmem>>, %arg2: memref<1x1x8xf32, #tpu.memory_space<vmem>>, %arg3: memref<1x32xf32, #tpu.memory_space<vmem>>, %arg4: memref<1x32xf32, #tpu.memory_space<vmem>>, %arg5: memref<2x32x96xf32, #tpu.memory_space<vmem>>, %arg6: memref<2x1x96xf32, #tpu.memory_space<vmem>>, %arg7: memref<2x32x32xf32, #tpu.memory_space<vmem>>, %arg8: memref<2x1x32xf32, #tpu.memory_space<vmem>>, %arg9: memref<2x1x32xf32, #tpu.memory_space<vmem>>, %arg10: memref<2x1x32xf32, #tpu.memory_space<vmem>>, %arg11: memref<2x32x64xf32, #tpu.memory_space<vmem>>, %arg12: memref<2x1x64xf32, #tpu.memory_space<vmem>>, %arg13: memref<2x64x32xf32, #tpu.memory_space<vmem>>, %arg14: memref<2x1x32xf32, #tpu.memory_space<vmem>>, %arg15: memref<2x1x32xf32, #tpu.memory_space<vmem>>, %arg16: memref<2x1x32xf32, #tpu.memory_space<vmem>>, %arg17: memref<32x128xf32, #tpu.memory_space<vmem>>, %arg18: memref<1x128xf32, #tpu.memory_space<vmem>>, %arg19: memref<1x8x128xf32, #tpu.memory_space<vmem>>) attributes {dimension_semantics = [#tpu.dimension_semantics<parallel>], iteration_bounds = array<i64: 2>, scalar_prefetch = 0 : i64, scratch_operands = 0 : i64, tpu.core_type = #tpu.core_type<tc>, window_params = [{transform_indices = @transform_0, window_bounds = array<i64: 1, 8, 32>}, {transform_indices = @transform_1, window_bounds = array<i64: 1, 1, 8>}, {pipeline_mode = #tpu.pipeline_mode<synchronous>, transform_indices = @transform_2, window_bounds = array<i64: 1, 32>}, {pipeline_mode = #tpu.pipeline_mode<synchronous>, transform_indices = @transform_3, window_bounds = array<i64: 1, 32>}, {pipeline_mode = #tpu.pipeline_mode<synchronous>, transform_indices = @transform_4, window_bounds = array<i64: 2, 32, 96>}, {pipeline_mode = #tpu.pipeline_mode<synchronous>, transform_indices = @transform_5, window_bounds = array<i64: 2, 1, 96>}, {pipeline_mode = #tpu.pipeline_mode<synchronous>, transform_indices = @transform_6, window_bounds = array<i64: 2, 32, 32>}, {pipeline_mode = #tpu.pipeline_mode<synchronous>, transform_indices = @transform_7, window_bounds = array<i64: 2, 1, 32>}, {pipeline_mode = #tpu.pipeline_mode<synchronous>, transform_indices = @transform_8, window_bounds = array<i64: 2, 1, 32>}, {pipeline_mode = #tpu.pipeline_mode<synchronous>, transform_indices = @transform_9, window_bounds = array<i64: 2, 1, 32>}, {pipeline_mode = #tpu.pipeline_mode<synchronous>, transform_indices = @transform_10, window_bounds = array<i64: 2, 32, 64>}, {pipeline_mode = #tpu.pipeline_mode<synchronous>, transform_indices = @transform_11, window_bounds = array<i64: 2, 1, 64>}, {pipeline_mode = #tpu.pipeline_mode<synchronous>, transform_indices = @transform_12, window_bounds = array<i64: 2, 64, 32>}, {pipeline_mode = #tpu.pipeline_mode<synchronous>, transform_indices = @transform_13, window_bounds = array<i64: 2, 1, 32>}, {pipeline_mode = #tpu.pipeline_mode<synchronous>, transform_indices = @transform_14, window_bounds = array<i64: 2, 1, 32>}, {pipeline_mode = #tpu.pipeline_mode<synchronous>, transform_indices = @transform_15, window_bounds = array<i64: 2, 1, 32>}, {pipeline_mode = #tpu.pipeline_mode<synchronous>, transform_indices = @transform_16, window_bounds = array<i64: 32, 128>}, {pipeline_mode = #tpu.pipeline_mode<synchronous>, transform_indices = @transform_17, window_bounds = array<i64: 1, 128>}, {transform_indices = @transform_18, window_bounds = array<i64: 1, 8, 128>}]} {
    %c0 = arith.constant 0 : index
    %c0_0 = arith.constant 0 : index
    %c0_1 = arith.constant 0 : index
    %0 = vector.load %arg1[%c0, %c0_0, %c0_1] : memref<1x8x32xf32, #tpu.memory_space<vmem>>, vector<1x8x32xf32>
    %1 = vector.shape_cast %0 : vector<1x8x32xf32> to vector<8x32xf32>
    %c0_2 = arith.constant 0 : index
    %c0_3 = arith.constant 0 : index
    %2 = vector.load %arg3[%c0_2, %c0_3] : memref<1x32xf32, #tpu.memory_space<vmem>>, vector<1x32xf32>
    %c0_4 = arith.constant 0 : index
    %c0_5 = arith.constant 0 : index
    %3 = vector.load %arg4[%c0_4, %c0_5] : memref<1x32xf32, #tpu.memory_space<vmem>>, vector<1x32xf32>
    %cst = arith.constant dense<0.000000e+00> : vector<8xf32>
    %4 = vector.multi_reduction <add>, %1, %cst [1] : vector<8x32xf32> to vector<8xf32>
    %5 = vector.shape_cast %4 : vector<8xf32> to vector<8x1xf32>
    %cst_6 = arith.constant 3.200000e+01 : f32
    %6 = vector.broadcast %cst_6 : f32 to vector<8x1xf32>
    %7 = arith.divf %5, %6 : vector<8x1xf32>
    %8 = vector.broadcast %7 : vector<8x1xf32> to vector<8x32xf32>
    %9 = arith.subf %1, %8 : vector<8x32xf32>
    %10 = arith.mulf %9, %9 : vector<8x32xf32>
    %cst_7 = arith.constant dense<0.000000e+00> : vector<8xf32>
    %11 = vector.multi_reduction <add>, %10, %cst_7 [1] : vector<8x32xf32> to vector<8xf32>
    %12 = vector.shape_cast %11 : vector<8xf32> to vector<8x1xf32>
    %cst_8 = arith.constant 3.200000e+01 : f32
    %13 = vector.broadcast %cst_8 : f32 to vector<8x1xf32>
    %14 = arith.divf %12, %13 : vector<8x1xf32>
    %15 = vector.broadcast %7 : vector<8x1xf32> to vector<8x32xf32>
    %16 = arith.subf %1, %15 : vector<8x32xf32>
    %cst_9 = arith.constant 9.99999996E-13 : f32
    %17 = vector.broadcast %cst_9 : f32 to vector<8x1xf32>
    %18 = arith.addf %14, %17 : vector<8x1xf32>
    %19 = math.rsqrt %18 : vector<8x1xf32>
    %20 = vector.broadcast %19 : vector<8x1xf32> to vector<8x32xf32>
    %21 = arith.mulf %16, %20 : vector<8x32xf32>
    %22 = vector.broadcast %2 : vector<1x32xf32> to vector<8x32xf32>
    %23 = arith.mulf %21, %22 : vector<8x32xf32>
    %24 = vector.broadcast %3 : vector<1x32xf32> to vector<8x32xf32>
    %25 = arith.addf %23, %24 : vector<8x32xf32>
    %c0_10 = arith.constant 0 : index
    %c0_11 = arith.constant 0 : index
    %c0_12 = arith.constant 0 : index
    %26 = vector.load %arg2[%c0_10, %c0_11, %c0_12] : memref<1x1x8xf32, #tpu.memory_space<vmem>>, vector<1x1x8xf32>
    %27 = vector.shape_cast %26 : vector<1x1x8xf32> to vector<1x8xf32>
    %c0_13 = arith.constant 0 : index
    %c0_14 = arith.constant 0 : index
    %c0_15 = arith.constant 0 : index
    %28 = vector.load %arg5[%c0_13, %c0_14, %c0_15] : memref<2x32x96xf32, #tpu.memory_space<vmem>>, vector<1x32x96xf32>
    %29 = vector.shape_cast %28 : vector<1x32x96xf32> to vector<32x96xf32>
    %cst_16 = arith.constant dense<0.000000e+00> : vector<8x96xf32>
    %30 = tpu.matmul %25, %29, %cst_16 {dimension_numbers = #tpu.dot_dimension_numbers<[1], [0], [0], [1], [0, 0, 1, 1], [], []>} : vector<8x32xf32>, vector<32x96xf32>, vector<8x96xf32> -> vector<8x96xf32>
    %c0_17 = arith.constant 0 : index
    %c0_18 = arith.constant 0 : index
    %c0_19 = arith.constant 0 : index
    %31 = vector.load %arg6[%c0_17, %c0_18, %c0_19] : memref<2x1x96xf32, #tpu.memory_space<vmem>>, vector<1x1x96xf32>
    %32 = vector.shape_cast %31 : vector<1x1x96xf32> to vector<1x96xf32>
    %33 = vector.broadcast %32 : vector<1x96xf32> to vector<8x96xf32>
    %34 = arith.addf %30, %33 : vector<8x96xf32>
    %c0_20 = arith.constant 0 : index
    %c0_21 = arith.constant 0 : index
    %c0_22 = arith.constant 0 : index
    %35 = vector.load %arg7[%c0_20, %c0_21, %c0_22] : memref<2x32x32xf32, #tpu.memory_space<vmem>>, vector<1x32x32xf32>
    %36 = vector.shape_cast %35 : vector<1x32x32xf32> to vector<32x32xf32>
    %37 = vector.extract_strided_slice %34 {offsets = [0, 0], sizes = [8, 8], strides = [1, 1]} : vector<8x96xf32> to vector<8x8xf32>
    %38 = vector.extract_strided_slice %34 {offsets = [0, 32], sizes = [8, 8], strides = [1, 1]} : vector<8x96xf32> to vector<8x8xf32>
    %39 = vector.extract_strided_slice %34 {offsets = [0, 64], sizes = [8, 8], strides = [1, 1]} : vector<8x96xf32> to vector<8x8xf32>
    %cst_23 = arith.constant dense<0.000000e+00> : vector<8x8xf32>
    %40 = tpu.matmul %37, %38, %cst_23 {dimension_numbers = #tpu.dot_dimension_numbers<[1], [1], [0], [0], [0, 0, 1, 0], [], []>} : vector<8x8xf32>, vector<8x8xf32>, vector<8x8xf32> -> vector<8x8xf32>
    %cst_24 = arith.constant 0.353553385 : f32
    %41 = vector.broadcast %cst_24 : f32 to vector<8x8xf32>
    %42 = arith.mulf %40, %41 : vector<8x8xf32>
    %43 = vector.broadcast %27 : vector<1x8xf32> to vector<8x8xf32>
    %44 = arith.addf %42, %43 : vector<8x8xf32>
    %cst_25 = arith.constant dense<0xFF800000> : vector<8xf32>
    %45 = vector.multi_reduction <maximumf>, %44, %cst_25 [1] : vector<8x8xf32> to vector<8xf32>
    %46 = vector.shape_cast %45 : vector<8xf32> to vector<8x1xf32>
    %47 = vector.broadcast %46 : vector<8x1xf32> to vector<8x8xf32>
    %48 = arith.subf %44, %47 : vector<8x8xf32>
    %49 = math.exp %48 : vector<8x8xf32>
    %cst_26 = arith.constant dense<0.000000e+00> : vector<8xf32>
    %50 = vector.multi_reduction <add>, %49, %cst_26 [1] : vector<8x8xf32> to vector<8xf32>
    %51 = vector.shape_cast %50 : vector<8xf32> to vector<8x1xf32>
    %52 = tpu.reciprocal %51 {approx = true} : vector<8x1xf32> -> vector<8x1xf32>
    %53 = vector.broadcast %52 : vector<8x1xf32> to vector<8x8xf32>
    %54 = arith.mulf %49, %53 : vector<8x8xf32>
    %cst_27 = arith.constant dense<0.000000e+00> : vector<8x8xf32>
    %55 = tpu.matmul %54, %39, %cst_27 {dimension_numbers = #tpu.dot_dimension_numbers<[1], [0], [0], [1], [0, 0, 1, 1], [], []>} : vector<8x8xf32>, vector<8x8xf32>, vector<8x8xf32> -> vector<8x8xf32>
    %56 = vector.extract_strided_slice %36 {offsets = [0, 0], sizes = [8, 32], strides = [1, 1]} : vector<32x32xf32> to vector<8x32xf32>
    %cst_28 = arith.constant dense<0.000000e+00> : vector<8x32xf32>
    %57 = tpu.matmul %55, %56, %cst_28 {dimension_numbers = #tpu.dot_dimension_numbers<[1], [0], [0], [1], [0, 0, 1, 1], [], []>} : vector<8x8xf32>, vector<8x32xf32>, vector<8x32xf32> -> vector<8x32xf32>
    %58 = vector.extract_strided_slice %34 {offsets = [0, 8], sizes = [8, 8], strides = [1, 1]} : vector<8x96xf32> to vector<8x8xf32>
    %59 = vector.extract_strided_slice %34 {offsets = [0, 40], sizes = [8, 8], strides = [1, 1]} : vector<8x96xf32> to vector<8x8xf32>
    %60 = vector.extract_strided_slice %34 {offsets = [0, 72], sizes = [8, 8], strides = [1, 1]} : vector<8x96xf32> to vector<8x8xf32>
    %cst_29 = arith.constant dense<0.000000e+00> : vector<8x8xf32>
    %61 = tpu.matmul %58, %59, %cst_29 {dimension_numbers = #tpu.dot_dimension_numbers<[1], [1], [0], [0], [0, 0, 1, 0], [], []>} : vector<8x8xf32>, vector<8x8xf32>, vector<8x8xf32> -> vector<8x8xf32>
    %cst_30 = arith.constant 0.353553385 : f32
    %62 = vector.broadcast %cst_30 : f32 to vector<8x8xf32>
    %63 = arith.mulf %61, %62 : vector<8x8xf32>
    %64 = vector.broadcast %27 : vector<1x8xf32> to vector<8x8xf32>
    %65 = arith.addf %63, %64 : vector<8x8xf32>
    %cst_31 = arith.constant dense<0xFF800000> : vector<8xf32>
    %66 = vector.multi_reduction <maximumf>, %65, %cst_31 [1] : vector<8x8xf32> to vector<8xf32>
    %67 = vector.shape_cast %66 : vector<8xf32> to vector<8x1xf32>
    %68 = vector.broadcast %67 : vector<8x1xf32> to vector<8x8xf32>
    %69 = arith.subf %65, %68 : vector<8x8xf32>
    %70 = math.exp %69 : vector<8x8xf32>
    %cst_32 = arith.constant dense<0.000000e+00> : vector<8xf32>
    %71 = vector.multi_reduction <add>, %70, %cst_32 [1] : vector<8x8xf32> to vector<8xf32>
    %72 = vector.shape_cast %71 : vector<8xf32> to vector<8x1xf32>
    %73 = tpu.reciprocal %72 {approx = true} : vector<8x1xf32> -> vector<8x1xf32>
    %74 = vector.broadcast %73 : vector<8x1xf32> to vector<8x8xf32>
    %75 = arith.mulf %70, %74 : vector<8x8xf32>
    %cst_33 = arith.constant dense<0.000000e+00> : vector<8x8xf32>
    %76 = tpu.matmul %75, %60, %cst_33 {dimension_numbers = #tpu.dot_dimension_numbers<[1], [0], [0], [1], [0, 0, 1, 1], [], []>} : vector<8x8xf32>, vector<8x8xf32>, vector<8x8xf32> -> vector<8x8xf32>
    %77 = vector.extract_strided_slice %36 {offsets = [8, 0], sizes = [8, 32], strides = [1, 1]} : vector<32x32xf32> to vector<8x32xf32>
    %cst_34 = arith.constant dense<0.000000e+00> : vector<8x32xf32>
    %78 = tpu.matmul %76, %77, %cst_34 {dimension_numbers = #tpu.dot_dimension_numbers<[1], [0], [0], [1], [0, 0, 1, 1], [], []>} : vector<8x8xf32>, vector<8x32xf32>, vector<8x32xf32> -> vector<8x32xf32>
    %79 = arith.addf %57, %78 : vector<8x32xf32>
    %80 = vector.extract_strided_slice %34 {offsets = [0, 16], sizes = [8, 8], strides = [1, 1]} : vector<8x96xf32> to vector<8x8xf32>
    %81 = vector.extract_strided_slice %34 {offsets = [0, 48], sizes = [8, 8], strides = [1, 1]} : vector<8x96xf32> to vector<8x8xf32>
    %82 = vector.extract_strided_slice %34 {offsets = [0, 80], sizes = [8, 8], strides = [1, 1]} : vector<8x96xf32> to vector<8x8xf32>
    %cst_35 = arith.constant dense<0.000000e+00> : vector<8x8xf32>
    %83 = tpu.matmul %80, %81, %cst_35 {dimension_numbers = #tpu.dot_dimension_numbers<[1], [1], [0], [0], [0, 0, 1, 0], [], []>} : vector<8x8xf32>, vector<8x8xf32>, vector<8x8xf32> -> vector<8x8xf32>
    %cst_36 = arith.constant 0.353553385 : f32
    %84 = vector.broadcast %cst_36 : f32 to vector<8x8xf32>
    %85 = arith.mulf %83, %84 : vector<8x8xf32>
    %86 = vector.broadcast %27 : vector<1x8xf32> to vector<8x8xf32>
    %87 = arith.addf %85, %86 : vector<8x8xf32>
    %cst_37 = arith.constant dense<0xFF800000> : vector<8xf32>
    %88 = vector.multi_reduction <maximumf>, %87, %cst_37 [1] : vector<8x8xf32> to vector<8xf32>
    %89 = vector.shape_cast %88 : vector<8xf32> to vector<8x1xf32>
    %90 = vector.broadcast %89 : vector<8x1xf32> to vector<8x8xf32>
    %91 = arith.subf %87, %90 : vector<8x8xf32>
    %92 = math.exp %91 : vector<8x8xf32>
    %cst_38 = arith.constant dense<0.000000e+00> : vector<8xf32>
    %93 = vector.multi_reduction <add>, %92, %cst_38 [1] : vector<8x8xf32> to vector<8xf32>
    %94 = vector.shape_cast %93 : vector<8xf32> to vector<8x1xf32>
    %95 = tpu.reciprocal %94 {approx = true} : vector<8x1xf32> -> vector<8x1xf32>
    %96 = vector.broadcast %95 : vector<8x1xf32> to vector<8x8xf32>
    %97 = arith.mulf %92, %96 : vector<8x8xf32>
    %cst_39 = arith.constant dense<0.000000e+00> : vector<8x8xf32>
    %98 = tpu.matmul %97, %82, %cst_39 {dimension_numbers = #tpu.dot_dimension_numbers<[1], [0], [0], [1], [0, 0, 1, 1], [], []>} : vector<8x8xf32>, vector<8x8xf32>, vector<8x8xf32> -> vector<8x8xf32>
    %99 = vector.extract_strided_slice %36 {offsets = [16, 0], sizes = [8, 32], strides = [1, 1]} : vector<32x32xf32> to vector<8x32xf32>
    %cst_40 = arith.constant dense<0.000000e+00> : vector<8x32xf32>
    %100 = tpu.matmul %98, %99, %cst_40 {dimension_numbers = #tpu.dot_dimension_numbers<[1], [0], [0], [1], [0, 0, 1, 1], [], []>} : vector<8x8xf32>, vector<8x32xf32>, vector<8x32xf32> -> vector<8x32xf32>
    %101 = arith.addf %79, %100 : vector<8x32xf32>
    %102 = vector.extract_strided_slice %34 {offsets = [0, 24], sizes = [8, 8], strides = [1, 1]} : vector<8x96xf32> to vector<8x8xf32>
    %103 = vector.extract_strided_slice %34 {offsets = [0, 56], sizes = [8, 8], strides = [1, 1]} : vector<8x96xf32> to vector<8x8xf32>
    %104 = vector.extract_strided_slice %34 {offsets = [0, 88], sizes = [8, 8], strides = [1, 1]} : vector<8x96xf32> to vector<8x8xf32>
    %cst_41 = arith.constant dense<0.000000e+00> : vector<8x8xf32>
    %105 = tpu.matmul %102, %103, %cst_41 {dimension_numbers = #tpu.dot_dimension_numbers<[1], [1], [0], [0], [0, 0, 1, 0], [], []>} : vector<8x8xf32>, vector<8x8xf32>, vector<8x8xf32> -> vector<8x8xf32>
    %cst_42 = arith.constant 0.353553385 : f32
    %106 = vector.broadcast %cst_42 : f32 to vector<8x8xf32>
    %107 = arith.mulf %105, %106 : vector<8x8xf32>
    %108 = vector.broadcast %27 : vector<1x8xf32> to vector<8x8xf32>
    %109 = arith.addf %107, %108 : vector<8x8xf32>
    %cst_43 = arith.constant dense<0xFF800000> : vector<8xf32>
    %110 = vector.multi_reduction <maximumf>, %109, %cst_43 [1] : vector<8x8xf32> to vector<8xf32>
    %111 = vector.shape_cast %110 : vector<8xf32> to vector<8x1xf32>
    %112 = vector.broadcast %111 : vector<8x1xf32> to vector<8x8xf32>
    %113 = arith.subf %109, %112 : vector<8x8xf32>
    %114 = math.exp %113 : vector<8x8xf32>
    %cst_44 = arith.constant dense<0.000000e+00> : vector<8xf32>
    %115 = vector.multi_reduction <add>, %114, %cst_44 [1] : vector<8x8xf32> to vector<8xf32>
    %116 = vector.shape_cast %115 : vector<8xf32> to vector<8x1xf32>
    %117 = tpu.reciprocal %116 {approx = true} : vector<8x1xf32> -> vector<8x1xf32>
    %118 = vector.broadcast %117 : vector<8x1xf32> to vector<8x8xf32>
    %119 = arith.mulf %114, %118 : vector<8x8xf32>
    %cst_45 = arith.constant dense<0.000000e+00> : vector<8x8xf32>
    %120 = tpu.matmul %119, %104, %cst_45 {dimension_numbers = #tpu.dot_dimension_numbers<[1], [0], [0], [1], [0, 0, 1, 1], [], []>} : vector<8x8xf32>, vector<8x8xf32>, vector<8x8xf32> -> vector<8x8xf32>
    %121 = vector.extract_strided_slice %36 {offsets = [24, 0], sizes = [8, 32], strides = [1, 1]} : vector<32x32xf32> to vector<8x32xf32>
    %cst_46 = arith.constant dense<0.000000e+00> : vector<8x32xf32>
    %122 = tpu.matmul %120, %121, %cst_46 {dimension_numbers = #tpu.dot_dimension_numbers<[1], [0], [0], [1], [0, 0, 1, 1], [], []>} : vector<8x8xf32>, vector<8x32xf32>, vector<8x32xf32> -> vector<8x32xf32>
    %123 = arith.addf %101, %122 : vector<8x32xf32>
    %c0_47 = arith.constant 0 : index
    %c0_48 = arith.constant 0 : index
    %c0_49 = arith.constant 0 : index
    %124 = vector.load %arg8[%c0_47, %c0_48, %c0_49] : memref<2x1x32xf32, #tpu.memory_space<vmem>>, vector<1x1x32xf32>
    %125 = vector.shape_cast %124 : vector<1x1x32xf32> to vector<1x32xf32>
    %126 = vector.broadcast %125 : vector<1x32xf32> to vector<8x32xf32>
    %127 = arith.addf %123, %126 : vector<8x32xf32>
    %128 = arith.addf %25, %127 : vector<8x32xf32>
    %c0_50 = arith.constant 0 : index
    %c0_51 = arith.constant 0 : index
    %c0_52 = arith.constant 0 : index
    %129 = vector.load %arg9[%c0_50, %c0_51, %c0_52] : memref<2x1x32xf32, #tpu.memory_space<vmem>>, vector<1x1x32xf32>
    %130 = vector.shape_cast %129 : vector<1x1x32xf32> to vector<1x32xf32>
    %c0_53 = arith.constant 0 : index
    %c0_54 = arith.constant 0 : index
    %c0_55 = arith.constant 0 : index
    %131 = vector.load %arg10[%c0_53, %c0_54, %c0_55] : memref<2x1x32xf32, #tpu.memory_space<vmem>>, vector<1x1x32xf32>
    %132 = vector.shape_cast %131 : vector<1x1x32xf32> to vector<1x32xf32>
    %cst_56 = arith.constant dense<0.000000e+00> : vector<8xf32>
    %133 = vector.multi_reduction <add>, %128, %cst_56 [1] : vector<8x32xf32> to vector<8xf32>
    %134 = vector.shape_cast %133 : vector<8xf32> to vector<8x1xf32>
    %cst_57 = arith.constant 3.200000e+01 : f32
    %135 = vector.broadcast %cst_57 : f32 to vector<8x1xf32>
    %136 = arith.divf %134, %135 : vector<8x1xf32>
    %137 = vector.broadcast %136 : vector<8x1xf32> to vector<8x32xf32>
    %138 = arith.subf %128, %137 : vector<8x32xf32>
    %139 = arith.mulf %138, %138 : vector<8x32xf32>
    %cst_58 = arith.constant dense<0.000000e+00> : vector<8xf32>
    %140 = vector.multi_reduction <add>, %139, %cst_58 [1] : vector<8x32xf32> to vector<8xf32>
    %141 = vector.shape_cast %140 : vector<8xf32> to vector<8x1xf32>
    %cst_59 = arith.constant 3.200000e+01 : f32
    %142 = vector.broadcast %cst_59 : f32 to vector<8x1xf32>
    %143 = arith.divf %141, %142 : vector<8x1xf32>
    %144 = vector.broadcast %136 : vector<8x1xf32> to vector<8x32xf32>
    %145 = arith.subf %128, %144 : vector<8x32xf32>
    %cst_60 = arith.constant 9.99999996E-13 : f32
    %146 = vector.broadcast %cst_60 : f32 to vector<8x1xf32>
    %147 = arith.addf %143, %146 : vector<8x1xf32>
    %148 = math.rsqrt %147 : vector<8x1xf32>
    %149 = vector.broadcast %148 : vector<8x1xf32> to vector<8x32xf32>
    %150 = arith.mulf %145, %149 : vector<8x32xf32>
    %151 = vector.broadcast %130 : vector<1x32xf32> to vector<8x32xf32>
    %152 = arith.mulf %150, %151 : vector<8x32xf32>
    %153 = vector.broadcast %132 : vector<1x32xf32> to vector<8x32xf32>
    %154 = arith.addf %152, %153 : vector<8x32xf32>
    %c0_61 = arith.constant 0 : index
    %c0_62 = arith.constant 0 : index
    %c0_63 = arith.constant 0 : index
    %155 = vector.load %arg11[%c0_61, %c0_62, %c0_63] : memref<2x32x64xf32, #tpu.memory_space<vmem>>, vector<1x32x64xf32>
    %156 = vector.shape_cast %155 : vector<1x32x64xf32> to vector<32x64xf32>
    %cst_64 = arith.constant dense<0.000000e+00> : vector<8x64xf32>
    %157 = tpu.matmul %154, %156, %cst_64 {dimension_numbers = #tpu.dot_dimension_numbers<[1], [0], [0], [1], [0, 0, 1, 1], [], []>} : vector<8x32xf32>, vector<32x64xf32>, vector<8x64xf32> -> vector<8x64xf32>
    %c0_65 = arith.constant 0 : index
    %c0_66 = arith.constant 0 : index
    %c0_67 = arith.constant 0 : index
    %158 = vector.load %arg12[%c0_65, %c0_66, %c0_67] : memref<2x1x64xf32, #tpu.memory_space<vmem>>, vector<1x1x64xf32>
    %159 = vector.shape_cast %158 : vector<1x1x64xf32> to vector<1x64xf32>
    %160 = vector.broadcast %159 : vector<1x64xf32> to vector<8x64xf32>
    %161 = arith.addf %157, %160 : vector<8x64xf32>
    %cst_68 = arith.constant 5.000000e-01 : f32
    %162 = vector.broadcast %cst_68 : f32 to vector<8x64xf32>
    %163 = arith.mulf %162, %161 : vector<8x64xf32>
    %cst_69 = arith.constant 4.471500e-02 : f32
    %164 = vector.broadcast %cst_69 : f32 to vector<8x64xf32>
    %165 = arith.mulf %164, %161 : vector<8x64xf32>
    %166 = arith.mulf %165, %161 : vector<8x64xf32>
    %167 = arith.mulf %166, %161 : vector<8x64xf32>
    %168 = arith.addf %161, %167 : vector<8x64xf32>
    %cst_70 = arith.constant 0.797884583 : f32
    %169 = vector.broadcast %cst_70 : f32 to vector<8x64xf32>
    %170 = arith.mulf %169, %168 : vector<8x64xf32>
    %171 = math.tanh %170 : vector<8x64xf32>
    %cst_71 = arith.constant 1.000000e+00 : f32
    %172 = vector.broadcast %cst_71 : f32 to vector<8x64xf32>
    %173 = arith.addf %172, %171 : vector<8x64xf32>
    %174 = arith.mulf %163, %173 : vector<8x64xf32>
    %c0_72 = arith.constant 0 : index
    %c0_73 = arith.constant 0 : index
    %c0_74 = arith.constant 0 : index
    %175 = vector.load %arg13[%c0_72, %c0_73, %c0_74] : memref<2x64x32xf32, #tpu.memory_space<vmem>>, vector<1x64x32xf32>
    %176 = vector.shape_cast %175 : vector<1x64x32xf32> to vector<64x32xf32>
    %cst_75 = arith.constant dense<0.000000e+00> : vector<8x32xf32>
    %177 = tpu.matmul %174, %176, %cst_75 {dimension_numbers = #tpu.dot_dimension_numbers<[1], [0], [0], [1], [0, 0, 1, 1], [], []>} : vector<8x64xf32>, vector<64x32xf32>, vector<8x32xf32> -> vector<8x32xf32>
    %c0_76 = arith.constant 0 : index
    %c0_77 = arith.constant 0 : index
    %c0_78 = arith.constant 0 : index
    %178 = vector.load %arg14[%c0_76, %c0_77, %c0_78] : memref<2x1x32xf32, #tpu.memory_space<vmem>>, vector<1x1x32xf32>
    %179 = vector.shape_cast %178 : vector<1x1x32xf32> to vector<1x32xf32>
    %180 = vector.broadcast %179 : vector<1x32xf32> to vector<8x32xf32>
    %181 = arith.addf %177, %180 : vector<8x32xf32>
    %182 = arith.addf %154, %181 : vector<8x32xf32>
    %c0_79 = arith.constant 0 : index
    %c0_80 = arith.constant 0 : index
    %c0_81 = arith.constant 0 : index
    %183 = vector.load %arg15[%c0_79, %c0_80, %c0_81] : memref<2x1x32xf32, #tpu.memory_space<vmem>>, vector<1x1x32xf32>
    %184 = vector.shape_cast %183 : vector<1x1x32xf32> to vector<1x32xf32>
    %c0_82 = arith.constant 0 : index
    %c0_83 = arith.constant 0 : index
    %c0_84 = arith.constant 0 : index
    %185 = vector.load %arg16[%c0_82, %c0_83, %c0_84] : memref<2x1x32xf32, #tpu.memory_space<vmem>>, vector<1x1x32xf32>
    %186 = vector.shape_cast %185 : vector<1x1x32xf32> to vector<1x32xf32>
    %cst_85 = arith.constant dense<0.000000e+00> : vector<8xf32>
    %187 = vector.multi_reduction <add>, %182, %cst_85 [1] : vector<8x32xf32> to vector<8xf32>
    %188 = vector.shape_cast %187 : vector<8xf32> to vector<8x1xf32>
    %cst_86 = arith.constant 3.200000e+01 : f32
    %189 = vector.broadcast %cst_86 : f32 to vector<8x1xf32>
    %190 = arith.divf %188, %189 : vector<8x1xf32>
    %191 = vector.broadcast %190 : vector<8x1xf32> to vector<8x32xf32>
    %192 = arith.subf %182, %191 : vector<8x32xf32>
    %193 = arith.mulf %192, %192 : vector<8x32xf32>
    %cst_87 = arith.constant dense<0.000000e+00> : vector<8xf32>
    %194 = vector.multi_reduction <add>, %193, %cst_87 [1] : vector<8x32xf32> to vector<8xf32>
    %195 = vector.shape_cast %194 : vector<8xf32> to vector<8x1xf32>
    %cst_88 = arith.constant 3.200000e+01 : f32
    %196 = vector.broadcast %cst_88 : f32 to vector<8x1xf32>
    %197 = arith.divf %195, %196 : vector<8x1xf32>
    %198 = vector.broadcast %190 : vector<8x1xf32> to vector<8x32xf32>
    %199 = arith.subf %182, %198 : vector<8x32xf32>
    %cst_89 = arith.constant 9.99999996E-13 : f32
    %200 = vector.broadcast %cst_89 : f32 to vector<8x1xf32>
    %201 = arith.addf %197, %200 : vector<8x1xf32>
    %202 = math.rsqrt %201 : vector<8x1xf32>
    %203 = vector.broadcast %202 : vector<8x1xf32> to vector<8x32xf32>
    %204 = arith.mulf %199, %203 : vector<8x32xf32>
    %205 = vector.broadcast %184 : vector<1x32xf32> to vector<8x32xf32>
    %206 = arith.mulf %204, %205 : vector<8x32xf32>
    %207 = vector.broadcast %186 : vector<1x32xf32> to vector<8x32xf32>
    %208 = arith.addf %206, %207 : vector<8x32xf32>
    %c1 = arith.constant 1 : index
    %c0_90 = arith.constant 0 : index
    %c0_91 = arith.constant 0 : index
    %209 = vector.load %arg5[%c1, %c0_90, %c0_91] : memref<2x32x96xf32, #tpu.memory_space<vmem>>, vector<1x32x96xf32>
    %210 = vector.shape_cast %209 : vector<1x32x96xf32> to vector<32x96xf32>
    %cst_92 = arith.constant dense<0.000000e+00> : vector<8x96xf32>
    %211 = tpu.matmul %208, %210, %cst_92 {dimension_numbers = #tpu.dot_dimension_numbers<[1], [0], [0], [1], [0, 0, 1, 1], [], []>} : vector<8x32xf32>, vector<32x96xf32>, vector<8x96xf32> -> vector<8x96xf32>
    %c1_93 = arith.constant 1 : index
    %c0_94 = arith.constant 0 : index
    %c0_95 = arith.constant 0 : index
    %212 = vector.load %arg6[%c1_93, %c0_94, %c0_95] : memref<2x1x96xf32, #tpu.memory_space<vmem>>, vector<1x1x96xf32>
    %213 = vector.shape_cast %212 : vector<1x1x96xf32> to vector<1x96xf32>
    %214 = vector.broadcast %213 : vector<1x96xf32> to vector<8x96xf32>
    %215 = arith.addf %211, %214 : vector<8x96xf32>
    %c1_96 = arith.constant 1 : index
    %c0_97 = arith.constant 0 : index
    %c0_98 = arith.constant 0 : index
    %216 = vector.load %arg7[%c1_96, %c0_97, %c0_98] : memref<2x32x32xf32, #tpu.memory_space<vmem>>, vector<1x32x32xf32>
    %217 = vector.shape_cast %216 : vector<1x32x32xf32> to vector<32x32xf32>
    %218 = vector.extract_strided_slice %215 {offsets = [0, 0], sizes = [8, 8], strides = [1, 1]} : vector<8x96xf32> to vector<8x8xf32>
    %219 = vector.extract_strided_slice %215 {offsets = [0, 32], sizes = [8, 8], strides = [1, 1]} : vector<8x96xf32> to vector<8x8xf32>
    %220 = vector.extract_strided_slice %215 {offsets = [0, 64], sizes = [8, 8], strides = [1, 1]} : vector<8x96xf32> to vector<8x8xf32>
    %cst_99 = arith.constant dense<0.000000e+00> : vector<8x8xf32>
    %221 = tpu.matmul %218, %219, %cst_99 {dimension_numbers = #tpu.dot_dimension_numbers<[1], [1], [0], [0], [0, 0, 1, 0], [], []>} : vector<8x8xf32>, vector<8x8xf32>, vector<8x8xf32> -> vector<8x8xf32>
    %cst_100 = arith.constant 0.353553385 : f32
    %222 = vector.broadcast %cst_100 : f32 to vector<8x8xf32>
    %223 = arith.mulf %221, %222 : vector<8x8xf32>
    %224 = vector.broadcast %27 : vector<1x8xf32> to vector<8x8xf32>
    %225 = arith.addf %223, %224 : vector<8x8xf32>
    %cst_101 = arith.constant dense<0xFF800000> : vector<8xf32>
    %226 = vector.multi_reduction <maximumf>, %225, %cst_101 [1] : vector<8x8xf32> to vector<8xf32>
    %227 = vector.shape_cast %226 : vector<8xf32> to vector<8x1xf32>
    %228 = vector.broadcast %227 : vector<8x1xf32> to vector<8x8xf32>
    %229 = arith.subf %225, %228 : vector<8x8xf32>
    %230 = math.exp %229 : vector<8x8xf32>
    %cst_102 = arith.constant dense<0.000000e+00> : vector<8xf32>
    %231 = vector.multi_reduction <add>, %230, %cst_102 [1] : vector<8x8xf32> to vector<8xf32>
    %232 = vector.shape_cast %231 : vector<8xf32> to vector<8x1xf32>
    %233 = tpu.reciprocal %232 {approx = true} : vector<8x1xf32> -> vector<8x1xf32>
    %234 = vector.broadcast %233 : vector<8x1xf32> to vector<8x8xf32>
    %235 = arith.mulf %230, %234 : vector<8x8xf32>
    %cst_103 = arith.constant dense<0.000000e+00> : vector<8x8xf32>
    %236 = tpu.matmul %235, %220, %cst_103 {dimension_numbers = #tpu.dot_dimension_numbers<[1], [0], [0], [1], [0, 0, 1, 1], [], []>} : vector<8x8xf32>, vector<8x8xf32>, vector<8x8xf32> -> vector<8x8xf32>
    %237 = vector.extract_strided_slice %217 {offsets = [0, 0], sizes = [8, 32], strides = [1, 1]} : vector<32x32xf32> to vector<8x32xf32>
    %cst_104 = arith.constant dense<0.000000e+00> : vector<8x32xf32>
    %238 = tpu.matmul %236, %237, %cst_104 {dimension_numbers = #tpu.dot_dimension_numbers<[1], [0], [0], [1], [0, 0, 1, 1], [], []>} : vector<8x8xf32>, vector<8x32xf32>, vector<8x32xf32> -> vector<8x32xf32>
    %239 = vector.extract_strided_slice %215 {offsets = [0, 8], sizes = [8, 8], strides = [1, 1]} : vector<8x96xf32> to vector<8x8xf32>
    %240 = vector.extract_strided_slice %215 {offsets = [0, 40], sizes = [8, 8], strides = [1, 1]} : vector<8x96xf32> to vector<8x8xf32>
    %241 = vector.extract_strided_slice %215 {offsets = [0, 72], sizes = [8, 8], strides = [1, 1]} : vector<8x96xf32> to vector<8x8xf32>
    %cst_105 = arith.constant dense<0.000000e+00> : vector<8x8xf32>
    %242 = tpu.matmul %239, %240, %cst_105 {dimension_numbers = #tpu.dot_dimension_numbers<[1], [1], [0], [0], [0, 0, 1, 0], [], []>} : vector<8x8xf32>, vector<8x8xf32>, vector<8x8xf32> -> vector<8x8xf32>
    %cst_106 = arith.constant 0.353553385 : f32
    %243 = vector.broadcast %cst_106 : f32 to vector<8x8xf32>
    %244 = arith.mulf %242, %243 : vector<8x8xf32>
    %245 = vector.broadcast %27 : vector<1x8xf32> to vector<8x8xf32>
    %246 = arith.addf %244, %245 : vector<8x8xf32>
    %cst_107 = arith.constant dense<0xFF800000> : vector<8xf32>
    %247 = vector.multi_reduction <maximumf>, %246, %cst_107 [1] : vector<8x8xf32> to vector<8xf32>
    %248 = vector.shape_cast %247 : vector<8xf32> to vector<8x1xf32>
    %249 = vector.broadcast %248 : vector<8x1xf32> to vector<8x8xf32>
    %250 = arith.subf %246, %249 : vector<8x8xf32>
    %251 = math.exp %250 : vector<8x8xf32>
    %cst_108 = arith.constant dense<0.000000e+00> : vector<8xf32>
    %252 = vector.multi_reduction <add>, %251, %cst_108 [1] : vector<8x8xf32> to vector<8xf32>
    %253 = vector.shape_cast %252 : vector<8xf32> to vector<8x1xf32>
    %254 = tpu.reciprocal %253 {approx = true} : vector<8x1xf32> -> vector<8x1xf32>
    %255 = vector.broadcast %254 : vector<8x1xf32> to vector<8x8xf32>
    %256 = arith.mulf %251, %255 : vector<8x8xf32>
    %cst_109 = arith.constant dense<0.000000e+00> : vector<8x8xf32>
    %257 = tpu.matmul %256, %241, %cst_109 {dimension_numbers = #tpu.dot_dimension_numbers<[1], [0], [0], [1], [0, 0, 1, 1], [], []>} : vector<8x8xf32>, vector<8x8xf32>, vector<8x8xf32> -> vector<8x8xf32>
    %258 = vector.extract_strided_slice %217 {offsets = [8, 0], sizes = [8, 32], strides = [1, 1]} : vector<32x32xf32> to vector<8x32xf32>
    %cst_110 = arith.constant dense<0.000000e+00> : vector<8x32xf32>
    %259 = tpu.matmul %257, %258, %cst_110 {dimension_numbers = #tpu.dot_dimension_numbers<[1], [0], [0], [1], [0, 0, 1, 1], [], []>} : vector<8x8xf32>, vector<8x32xf32>, vector<8x32xf32> -> vector<8x32xf32>
    %260 = arith.addf %238, %259 : vector<8x32xf32>
    %261 = vector.extract_strided_slice %215 {offsets = [0, 16], sizes = [8, 8], strides = [1, 1]} : vector<8x96xf32> to vector<8x8xf32>
    %262 = vector.extract_strided_slice %215 {offsets = [0, 48], sizes = [8, 8], strides = [1, 1]} : vector<8x96xf32> to vector<8x8xf32>
    %263 = vector.extract_strided_slice %215 {offsets = [0, 80], sizes = [8, 8], strides = [1, 1]} : vector<8x96xf32> to vector<8x8xf32>
    %cst_111 = arith.constant dense<0.000000e+00> : vector<8x8xf32>
    %264 = tpu.matmul %261, %262, %cst_111 {dimension_numbers = #tpu.dot_dimension_numbers<[1], [1], [0], [0], [0, 0, 1, 0], [], []>} : vector<8x8xf32>, vector<8x8xf32>, vector<8x8xf32> -> vector<8x8xf32>
    %cst_112 = arith.constant 0.353553385 : f32
    %265 = vector.broadcast %cst_112 : f32 to vector<8x8xf32>
    %266 = arith.mulf %264, %265 : vector<8x8xf32>
    %267 = vector.broadcast %27 : vector<1x8xf32> to vector<8x8xf32>
    %268 = arith.addf %266, %267 : vector<8x8xf32>
    %cst_113 = arith.constant dense<0xFF800000> : vector<8xf32>
    %269 = vector.multi_reduction <maximumf>, %268, %cst_113 [1] : vector<8x8xf32> to vector<8xf32>
    %270 = vector.shape_cast %269 : vector<8xf32> to vector<8x1xf32>
    %271 = vector.broadcast %270 : vector<8x1xf32> to vector<8x8xf32>
    %272 = arith.subf %268, %271 : vector<8x8xf32>
    %273 = math.exp %272 : vector<8x8xf32>
    %cst_114 = arith.constant dense<0.000000e+00> : vector<8xf32>
    %274 = vector.multi_reduction <add>, %273, %cst_114 [1] : vector<8x8xf32> to vector<8xf32>
    %275 = vector.shape_cast %274 : vector<8xf32> to vector<8x1xf32>
    %276 = tpu.reciprocal %275 {approx = true} : vector<8x1xf32> -> vector<8x1xf32>
    %277 = vector.broadcast %276 : vector<8x1xf32> to vector<8x8xf32>
    %278 = arith.mulf %273, %277 : vector<8x8xf32>
    %cst_115 = arith.constant dense<0.000000e+00> : vector<8x8xf32>
    %279 = tpu.matmul %278, %263, %cst_115 {dimension_numbers = #tpu.dot_dimension_numbers<[1], [0], [0], [1], [0, 0, 1, 1], [], []>} : vector<8x8xf32>, vector<8x8xf32>, vector<8x8xf32> -> vector<8x8xf32>
    %280 = vector.extract_strided_slice %217 {offsets = [16, 0], sizes = [8, 32], strides = [1, 1]} : vector<32x32xf32> to vector<8x32xf32>
    %cst_116 = arith.constant dense<0.000000e+00> : vector<8x32xf32>
    %281 = tpu.matmul %279, %280, %cst_116 {dimension_numbers = #tpu.dot_dimension_numbers<[1], [0], [0], [1], [0, 0, 1, 1], [], []>} : vector<8x8xf32>, vector<8x32xf32>, vector<8x32xf32> -> vector<8x32xf32>
    %282 = arith.addf %260, %281 : vector<8x32xf32>
    %283 = vector.extract_strided_slice %215 {offsets = [0, 24], sizes = [8, 8], strides = [1, 1]} : vector<8x96xf32> to vector<8x8xf32>
    %284 = vector.extract_strided_slice %215 {offsets = [0, 56], sizes = [8, 8], strides = [1, 1]} : vector<8x96xf32> to vector<8x8xf32>
    %285 = vector.extract_strided_slice %215 {offsets = [0, 88], sizes = [8, 8], strides = [1, 1]} : vector<8x96xf32> to vector<8x8xf32>
    %cst_117 = arith.constant dense<0.000000e+00> : vector<8x8xf32>
    %286 = tpu.matmul %283, %284, %cst_117 {dimension_numbers = #tpu.dot_dimension_numbers<[1], [1], [0], [0], [0, 0, 1, 0], [], []>} : vector<8x8xf32>, vector<8x8xf32>, vector<8x8xf32> -> vector<8x8xf32>
    %cst_118 = arith.constant 0.353553385 : f32
    %287 = vector.broadcast %cst_118 : f32 to vector<8x8xf32>
    %288 = arith.mulf %286, %287 : vector<8x8xf32>
    %289 = vector.broadcast %27 : vector<1x8xf32> to vector<8x8xf32>
    %290 = arith.addf %288, %289 : vector<8x8xf32>
    %cst_119 = arith.constant dense<0xFF800000> : vector<8xf32>
    %291 = vector.multi_reduction <maximumf>, %290, %cst_119 [1] : vector<8x8xf32> to vector<8xf32>
    %292 = vector.shape_cast %291 : vector<8xf32> to vector<8x1xf32>
    %293 = vector.broadcast %292 : vector<8x1xf32> to vector<8x8xf32>
    %294 = arith.subf %290, %293 : vector<8x8xf32>
    %295 = math.exp %294 : vector<8x8xf32>
    %cst_120 = arith.constant dense<0.000000e+00> : vector<8xf32>
    %296 = vector.multi_reduction <add>, %295, %cst_120 [1] : vector<8x8xf32> to vector<8xf32>
    %297 = vector.shape_cast %296 : vector<8xf32> to vector<8x1xf32>
    %298 = tpu.reciprocal %297 {approx = true} : vector<8x1xf32> -> vector<8x1xf32>
    %299 = vector.broadcast %298 : vector<8x1xf32> to vector<8x8xf32>
    %300 = arith.mulf %295, %299 : vector<8x8xf32>
    %cst_121 = arith.constant dense<0.000000e+00> : vector<8x8xf32>
    %301 = tpu.matmul %300, %285, %cst_121 {dimension_numbers = #tpu.dot_dimension_numbers<[1], [0], [0], [1], [0, 0, 1, 1], [], []>} : vector<8x8xf32>, vector<8x8xf32>, vector<8x8xf32> -> vector<8x8xf32>
    %302 = vector.extract_strided_slice %217 {offsets = [24, 0], sizes = [8, 32], strides = [1, 1]} : vector<32x32xf32> to vector<8x32xf32>
    %cst_122 = arith.constant dense<0.000000e+00> : vector<8x32xf32>
    %303 = tpu.matmul %301, %302, %cst_122 {dimension_numbers = #tpu.dot_dimension_numbers<[1], [0], [0], [1], [0, 0, 1, 1], [], []>} : vector<8x8xf32>, vector<8x32xf32>, vector<8x32xf32> -> vector<8x32xf32>
    %304 = arith.addf %282, %303 : vector<8x32xf32>
    %c1_123 = arith.constant 1 : index
    %c0_124 = arith.constant 0 : index
    %c0_125 = arith.constant 0 : index
    %305 = vector.load %arg8[%c1_123, %c0_124, %c0_125] : memref<2x1x32xf32, #tpu.memory_space<vmem>>, vector<1x1x32xf32>
    %306 = vector.shape_cast %305 : vector<1x1x32xf32> to vector<1x32xf32>
    %307 = vector.broadcast %306 : vector<1x32xf32> to vector<8x32xf32>
    %308 = arith.addf %304, %307 : vector<8x32xf32>
    %309 = arith.addf %208, %308 : vector<8x32xf32>
    %c1_126 = arith.constant 1 : index
    %c0_127 = arith.constant 0 : index
    %c0_128 = arith.constant 0 : index
    %310 = vector.load %arg9[%c1_126, %c0_127, %c0_128] : memref<2x1x32xf32, #tpu.memory_space<vmem>>, vector<1x1x32xf32>
    %311 = vector.shape_cast %310 : vector<1x1x32xf32> to vector<1x32xf32>
    %c1_129 = arith.constant 1 : index
    %c0_130 = arith.constant 0 : index
    %c0_131 = arith.constant 0 : index
    %312 = vector.load %arg10[%c1_129, %c0_130, %c0_131] : memref<2x1x32xf32, #tpu.memory_space<vmem>>, vector<1x1x32xf32>
    %313 = vector.shape_cast %312 : vector<1x1x32xf32> to vector<1x32xf32>
    %cst_132 = arith.constant dense<0.000000e+00> : vector<8xf32>
    %314 = vector.multi_reduction <add>, %309, %cst_132 [1] : vector<8x32xf32> to vector<8xf32>
    %315 = vector.shape_cast %314 : vector<8xf32> to vector<8x1xf32>
    %cst_133 = arith.constant 3.200000e+01 : f32
    %316 = vector.broadcast %cst_133 : f32 to vector<8x1xf32>
    %317 = arith.divf %315, %316 : vector<8x1xf32>
    %318 = vector.broadcast %317 : vector<8x1xf32> to vector<8x32xf32>
    %319 = arith.subf %309, %318 : vector<8x32xf32>
    %320 = arith.mulf %319, %319 : vector<8x32xf32>
    %cst_134 = arith.constant dense<0.000000e+00> : vector<8xf32>
    %321 = vector.multi_reduction <add>, %320, %cst_134 [1] : vector<8x32xf32> to vector<8xf32>
    %322 = vector.shape_cast %321 : vector<8xf32> to vector<8x1xf32>
    %cst_135 = arith.constant 3.200000e+01 : f32
    %323 = vector.broadcast %cst_135 : f32 to vector<8x1xf32>
    %324 = arith.divf %322, %323 : vector<8x1xf32>
    %325 = vector.broadcast %317 : vector<8x1xf32> to vector<8x32xf32>
    %326 = arith.subf %309, %325 : vector<8x32xf32>
    %cst_136 = arith.constant 9.99999996E-13 : f32
    %327 = vector.broadcast %cst_136 : f32 to vector<8x1xf32>
    %328 = arith.addf %324, %327 : vector<8x1xf32>
    %329 = math.rsqrt %328 : vector<8x1xf32>
    %330 = vector.broadcast %329 : vector<8x1xf32> to vector<8x32xf32>
    %331 = arith.mulf %326, %330 : vector<8x32xf32>
    %332 = vector.broadcast %311 : vector<1x32xf32> to vector<8x32xf32>
    %333 = arith.mulf %331, %332 : vector<8x32xf32>
    %334 = vector.broadcast %313 : vector<1x32xf32> to vector<8x32xf32>
    %335 = arith.addf %333, %334 : vector<8x32xf32>
    %c1_137 = arith.constant 1 : index
    %c0_138 = arith.constant 0 : index
    %c0_139 = arith.constant 0 : index
    %336 = vector.load %arg11[%c1_137, %c0_138, %c0_139] : memref<2x32x64xf32, #tpu.memory_space<vmem>>, vector<1x32x64xf32>
    %337 = vector.shape_cast %336 : vector<1x32x64xf32> to vector<32x64xf32>
    %cst_140 = arith.constant dense<0.000000e+00> : vector<8x64xf32>
    %338 = tpu.matmul %335, %337, %cst_140 {dimension_numbers = #tpu.dot_dimension_numbers<[1], [0], [0], [1], [0, 0, 1, 1], [], []>} : vector<8x32xf32>, vector<32x64xf32>, vector<8x64xf32> -> vector<8x64xf32>
    %c1_141 = arith.constant 1 : index
    %c0_142 = arith.constant 0 : index
    %c0_143 = arith.constant 0 : index
    %339 = vector.load %arg12[%c1_141, %c0_142, %c0_143] : memref<2x1x64xf32, #tpu.memory_space<vmem>>, vector<1x1x64xf32>
    %340 = vector.shape_cast %339 : vector<1x1x64xf32> to vector<1x64xf32>
    %341 = vector.broadcast %340 : vector<1x64xf32> to vector<8x64xf32>
    %342 = arith.addf %338, %341 : vector<8x64xf32>
    %cst_144 = arith.constant 5.000000e-01 : f32
    %343 = vector.broadcast %cst_144 : f32 to vector<8x64xf32>
    %344 = arith.mulf %343, %342 : vector<8x64xf32>
    %cst_145 = arith.constant 4.471500e-02 : f32
    %345 = vector.broadcast %cst_145 : f32 to vector<8x64xf32>
    %346 = arith.mulf %345, %342 : vector<8x64xf32>
    %347 = arith.mulf %346, %342 : vector<8x64xf32>
    %348 = arith.mulf %347, %342 : vector<8x64xf32>
    %349 = arith.addf %342, %348 : vector<8x64xf32>
    %cst_146 = arith.constant 0.797884583 : f32
    %350 = vector.broadcast %cst_146 : f32 to vector<8x64xf32>
    %351 = arith.mulf %350, %349 : vector<8x64xf32>
    %352 = math.tanh %351 : vector<8x64xf32>
    %cst_147 = arith.constant 1.000000e+00 : f32
    %353 = vector.broadcast %cst_147 : f32 to vector<8x64xf32>
    %354 = arith.addf %353, %352 : vector<8x64xf32>
    %355 = arith.mulf %344, %354 : vector<8x64xf32>
    %c1_148 = arith.constant 1 : index
    %c0_149 = arith.constant 0 : index
    %c0_150 = arith.constant 0 : index
    %356 = vector.load %arg13[%c1_148, %c0_149, %c0_150] : memref<2x64x32xf32, #tpu.memory_space<vmem>>, vector<1x64x32xf32>
    %357 = vector.shape_cast %356 : vector<1x64x32xf32> to vector<64x32xf32>
    %cst_151 = arith.constant dense<0.000000e+00> : vector<8x32xf32>
    %358 = tpu.matmul %355, %357, %cst_151 {dimension_numbers = #tpu.dot_dimension_numbers<[1], [0], [0], [1], [0, 0, 1, 1], [], []>} : vector<8x64xf32>, vector<64x32xf32>, vector<8x32xf32> -> vector<8x32xf32>
    %c1_152 = arith.constant 1 : index
    %c0_153 = arith.constant 0 : index
    %c0_154 = arith.constant 0 : index
    %359 = vector.load %arg14[%c1_152, %c0_153, %c0_154] : memref<2x1x32xf32, #tpu.memory_space<vmem>>, vector<1x1x32xf32>
    %360 = vector.shape_cast %359 : vector<1x1x32xf32> to vector<1x32xf32>
    %361 = vector.broadcast %360 : vector<1x32xf32> to vector<8x32xf32>
    %362 = arith.addf %358, %361 : vector<8x32xf32>
    %363 = arith.addf %335, %362 : vector<8x32xf32>
    %c1_155 = arith.constant 1 : index
    %c0_156 = arith.constant 0 : index
    %c0_157 = arith.constant 0 : index
    %364 = vector.load %arg15[%c1_155, %c0_156, %c0_157] : memref<2x1x32xf32, #tpu.memory_space<vmem>>, vector<1x1x32xf32>
    %365 = vector.shape_cast %364 : vector<1x1x32xf32> to vector<1x32xf32>
    %c1_158 = arith.constant 1 : index
    %c0_159 = arith.constant 0 : index
    %c0_160 = arith.constant 0 : index
    %366 = vector.load %arg16[%c1_158, %c0_159, %c0_160] : memref<2x1x32xf32, #tpu.memory_space<vmem>>, vector<1x1x32xf32>
    %367 = vector.shape_cast %366 : vector<1x1x32xf32> to vector<1x32xf32>
    %cst_161 = arith.constant dense<0.000000e+00> : vector<8xf32>
    %368 = vector.multi_reduction <add>, %363, %cst_161 [1] : vector<8x32xf32> to vector<8xf32>
    %369 = vector.shape_cast %368 : vector<8xf32> to vector<8x1xf32>
    %cst_162 = arith.constant 3.200000e+01 : f32
    %370 = vector.broadcast %cst_162 : f32 to vector<8x1xf32>
    %371 = arith.divf %369, %370 : vector<8x1xf32>
    %372 = vector.broadcast %371 : vector<8x1xf32> to vector<8x32xf32>
    %373 = arith.subf %363, %372 : vector<8x32xf32>
    %374 = arith.mulf %373, %373 : vector<8x32xf32>
    %cst_163 = arith.constant dense<0.000000e+00> : vector<8xf32>
    %375 = vector.multi_reduction <add>, %374, %cst_163 [1] : vector<8x32xf32> to vector<8xf32>
    %376 = vector.shape_cast %375 : vector<8xf32> to vector<8x1xf32>
    %cst_164 = arith.constant 3.200000e+01 : f32
    %377 = vector.broadcast %cst_164 : f32 to vector<8x1xf32>
    %378 = arith.divf %376, %377 : vector<8x1xf32>
    %379 = vector.broadcast %371 : vector<8x1xf32> to vector<8x32xf32>
    %380 = arith.subf %363, %379 : vector<8x32xf32>
    %cst_165 = arith.constant 9.99999996E-13 : f32
    %381 = vector.broadcast %cst_165 : f32 to vector<8x1xf32>
    %382 = arith.addf %378, %381 : vector<8x1xf32>
    %383 = math.rsqrt %382 : vector<8x1xf32>
    %384 = vector.broadcast %383 : vector<8x1xf32> to vector<8x32xf32>
    %385 = arith.mulf %380, %384 : vector<8x32xf32>
    %386 = vector.broadcast %365 : vector<1x32xf32> to vector<8x32xf32>
    %387 = arith.mulf %385, %386 : vector<8x32xf32>
    %388 = vector.broadcast %367 : vector<1x32xf32> to vector<8x32xf32>
    %389 = arith.addf %387, %388 : vector<8x32xf32>
    %c0_166 = arith.constant 0 : index
    %c0_167 = arith.constant 0 : index
    %390 = vector.load %arg17[%c0_166, %c0_167] : memref<32x128xf32, #tpu.memory_space<vmem>>, vector<32x128xf32>
    %cst_168 = arith.constant dense<0.000000e+00> : vector<8x128xf32>
    %391 = tpu.matmul %389, %390, %cst_168 {dimension_numbers = #tpu.dot_dimension_numbers<[1], [0], [0], [1], [0, 0, 1, 1], [], []>} : vector<8x32xf32>, vector<32x128xf32>, vector<8x128xf32> -> vector<8x128xf32>
    %c0_169 = arith.constant 0 : index
    %c0_170 = arith.constant 0 : index
    %392 = vector.load %arg18[%c0_169, %c0_170] : memref<1x128xf32, #tpu.memory_space<vmem>>, vector<1x128xf32>
    %393 = vector.broadcast %392 : vector<1x128xf32> to vector<8x128xf32>
    %394 = arith.addf %391, %393 : vector<8x128xf32>
    %c0_171 = arith.constant 0 : index
    %c0_172 = arith.constant 0 : index
    %c0_173 = arith.constant 0 : index
    %395 = vector.load %arg19[%c0_171, %c0_172, %c0_173] : memref<1x8x128xf32, #tpu.memory_space<vmem>>, vector<1x8x128xf32>
    %396 = vector.shape_cast %395 : vector<1x8x128xf32> to vector<8x128xf32>
    %397 = vector.shape_cast %394 : vector<8x128xf32> to vector<1x8x128xf32>
    tpu.vector_store %arg19[%c0_171, %c0_172, %c0_173], %397 {strides = array<i32>} : memref<1x8x128xf32, #tpu.memory_space<vmem>>, vector<1x8x128xf32>,
    return
  }
  func.func @transform_0(%arg0: i32) -> (i32, i32, i32) {
    %c0_i32 = arith.constant 0 : i32
    %c0_i32_0 = arith.constant 0 : i32
    %c0_i32_1 = arith.constant 0 : i32
    return %arg0, %c0_i32, %c0_i32_0 : i32, i32, i32
  }
  func.func @transform_1(%arg0: i32) -> (i32, i32, i32) {
    %c0_i32 = arith.constant 0 : i32
    %c0_i32_0 = arith.constant 0 : i32
    %c0_i32_1 = arith.constant 0 : i32
    return %arg0, %c0_i32, %c0_i32_0 : i32, i32, i32
  }
  func.func @transform_2(%arg0: i32) -> (i32, i32) {
    %c0_i32 = arith.constant 0 : i32
    %c0_i32_0 = arith.constant 0 : i32
    %c0_i32_1 = arith.constant 0 : i32
    return %c0_i32, %c0_i32_0 : i32, i32
  }
  func.func @transform_3(%arg0: i32) -> (i32, i32) {
    %c0_i32 = arith.constant 0 : i32
    %c0_i32_0 = arith.constant 0 : i32
    %c0_i32_1 = arith.constant 0 : i32
    return %c0_i32, %c0_i32_0 : i32, i32
  }
  func.func @transform_4(%arg0: i32) -> (i32, i32, i32) {
    %c0_i32 = arith.constant 0 : i32
    %c0_i32_0 = arith.constant 0 : i32
    %c0_i32_1 = arith.constant 0 : i32
    %c0_i32_2 = arith.constant 0 : i32
    return %c0_i32, %c0_i32_0, %c0_i32_1 : i32, i32, i32
  }
  func.func @transform_5(%arg0: i32) -> (i32, i32, i32) {
    %c0_i32 = arith.constant 0 : i32
    %c0_i32_0 = arith.constant 0 : i32
    %c0_i32_1 = arith.constant 0 : i32
    %c0_i32_2 = arith.constant 0 : i32
    return %c0_i32, %c0_i32_0, %c0_i32_1 : i32, i32, i32
  }
  func.func @transform_6(%arg0: i32) -> (i32, i32, i32) {
    %c0_i32 = arith.constant 0 : i32
    %c0_i32_0 = arith.constant 0 : i32
    %c0_i32_1 = arith.constant 0 : i32
    %c0_i32_2 = arith.constant 0 : i32
    return %c0_i32, %c0_i32_0, %c0_i32_1 : i32, i32, i32
  }
  func.func @transform_7(%arg0: i32) -> (i32, i32, i32) {
    %c0_i32 = arith.constant 0 : i32
    %c0_i32_0 = arith.constant 0 : i32
    %c0_i32_1 = arith.constant 0 : i32
    %c0_i32_2 = arith.constant 0 : i32
    return %c0_i32, %c0_i32_0, %c0_i32_1 : i32, i32, i32
  }
  func.func @transform_8(%arg0: i32) -> (i32, i32, i32) {
    %c0_i32 = arith.constant 0 : i32
    %c0_i32_0 = arith.constant 0 : i32
    %c0_i32_1 = arith.constant 0 : i32
    %c0_i32_2 = arith.constant 0 : i32
    return %c0_i32, %c0_i32_0, %c0_i32_1 : i32, i32, i32
  }
  func.func @transform_9(%arg0: i32) -> (i32, i32, i32) {
    %c0_i32 = arith.constant 0 : i32
    %c0_i32_0 = arith.constant 0 : i32
    %c0_i32_1 = arith.constant 0 : i32
    %c0_i32_2 = arith.constant 0 : i32
    return %c0_i32, %c0_i32_0, %c0_i32_1 : i32, i32, i32
  }
  func.func @transform_10(%arg0: i32) -> (i32, i32, i32) {
    %c0_i32 = arith.constant 0 : i32
    %c0_i32_0 = arith.constant 0 : i32
    %c0_i32_1 = arith.constant 0 : i32
    %c0_i32_2 = arith.constant 0 : i32
    return %c0_i32, %c0_i32_0, %c0_i32_1 : i32, i32, i32
  }
  func.func @transform_11(%arg0: i32) -> (i32, i32, i32) {
    %c0_i32 = arith.constant 0 : i32
    %c0_i32_0 = arith.constant 0 : i32
    %c0_i32_1 = arith.constant 0 : i32
    %c0_i32_2 = arith.constant 0 : i32
    return %c0_i32, %c0_i32_0, %c0_i32_1 : i32, i32, i32
  }
  func.func @transform_12(%arg0: i32) -> (i32, i32, i32) {
    %c0_i32 = arith.constant 0 : i32
    %c0_i32_0 = arith.constant 0 : i32
    %c0_i32_1 = arith.constant 0 : i32
    %c0_i32_2 = arith.constant 0 : i32
    return %c0_i32, %c0_i32_0, %c0_i32_1 : i32, i32, i32
  }
  func.func @transform_13(%arg0: i32) -> (i32, i32, i32) {
    %c0_i32 = arith.constant 0 : i32
    %c0_i32_0 = arith.constant 0 : i32
    %c0_i32_1 = arith.constant 0 : i32
    %c0_i32_2 = arith.constant 0 : i32
    return %c0_i32, %c0_i32_0, %c0_i32_1 : i32, i32, i32
  }
  func.func @transform_14(%arg0: i32) -> (i32, i32, i32) {
    %c0_i32 = arith.constant 0 : i32
    %c0_i32_0 = arith.constant 0 : i32
    %c0_i32_1 = arith.constant 0 : i32
    %c0_i32_2 = arith.constant 0 : i32
    return %c0_i32, %c0_i32_0, %c0_i32_1 : i32, i32, i32
  }
  func.func @transform_15(%arg0: i32) -> (i32, i32, i32) {
    %c0_i32 = arith.constant 0 : i32
    %c0_i32_0 = arith.constant 0 : i32
    %c0_i32_1 = arith.constant 0 : i32
    %c0_i32_2 = arith.constant 0 : i32
    return %c0_i32, %c0_i32_0, %c0_i32_1 : i32, i32, i32
  }
  func.func @transform_16(%arg0: i32) -> (i32, i32) {
    %c0_i32 = arith.constant 0 : i32
    %c0_i32_0 = arith.constant 0 : i32
    %c0_i32_1 = arith.constant 0 : i32
    return %c0_i32, %c0_i32_0 : i32, i32
  }
  func.func @transform_17(%arg0: i32) -> (i32, i32) {
    %c0_i32 = arith.constant 0 : i32
    %c0_i32_0 = arith.constant 0 : i32
    %c0_i32_1 = arith.constant 0 : i32
    return %c0_i32, %c0_i32_0 : i32, i32
  }
  func.func @transform_18(%arg0: i32) -> (i32, i32, i32) {
    %c0_i32 = arith.constant 0 : i32
    %c0_i32_0 = arith.constant 0 : i32
    %c0_i32_1 = arith.constant 0 : i32
    return %arg0, %c0_i32, %c0_i32_0 : i32, i32, i32
  }
}

</mosaic_0001>

<llo_original>
// kernel: tpu_custom_call.1
$region0: #{tpu_custom_call.1}
  #allocation0 [shape = 'u32[]', space=smem, size = 0x4, offset = 0x4, fixed_abs, tag = 'smem constant byte address 0x4 - core index']
  #allocation1 [shape = 'u32[144,128]{1,0:T(1,128)}', space=vmem, size = 0x12000, scoped, tag = 'internal scratch']
  %s0 = inlined_call_operand.hbm [shape: f32[2,8,32], index: 0, kind: input, shape index: {}]
  %s1 = inlined_call_operand.vmem [shape: f32[2,1,8], index: 1, kind: input, shape index: {}]
  %s2 = inlined_call_operand.hbm [shape: f32[1,32], index: 2, kind: input, shape index: {}]
  %s3 = inlined_call_operand.hbm [shape: f32[1,32], index: 3, kind: input, shape index: {}]
  %s4 = inlined_call_operand.vmem [shape: f32[2,32,96], index: 4, kind: input, shape index: {}]
  %s5 = inlined_call_operand.hbm [shape: f32[2,1,96], index: 5, kind: input, shape index: {}]
  %s6 = inlined_call_operand.vmem [shape: f32[2,32,32], index: 6, kind: input, shape index: {}]
  %s7 = inlined_call_operand.hbm [shape: f32[2,1,32], index: 7, kind: input, shape index: {}]
  %s8 = inlined_call_operand.hbm [shape: f32[2,1,32], index: 8, kind: input, shape index: {}]
  %s9 = inlined_call_operand.hbm [shape: f32[2,1,32], index: 9, kind: input, shape index: {}]
  %s10 = inlined_call_operand.vmem [shape: f32[2,32,64], index: 10, kind: input, shape index: {}]
  %s11 = inlined_call_operand.vmem [shape: f32[2,1,64], index: 11, kind: input, shape index: {}]
  %s12 = inlined_call_operand.vmem [shape: f32[2,64,32], index: 12, kind: input, shape index: {}]
  %s13 = inlined_call_operand.vmem [shape: f32[2,1,32], index: 13, kind: input, shape index: {}]
  %s14 = inlined_call_operand.vmem [shape: f32[2,1,32], index: 14, kind: input, shape index: {}]
  %s15 = inlined_call_operand.vmem [shape: f32[2,1,32], index: 15, kind: input, shape index: {}]
  %s16 = inlined_call_operand.vmem [shape: f32[32,128], index: 16, kind: input, shape index: {}]
  %s17 = inlined_call_operand.vmem [shape: f32[1,128], index: 17, kind: input, shape index: {}]
  %s18 = inlined_call_operand.hbm [shape: f32[2,8,128], index: 18, kind: output, shape index: {}]
  %s19 = sld [smem:[#allocation0]]
  $region133: #{tpu_custom_call.1} parent=0
    _
  %s21 = ssub.s32 1, %s19
  %s22 = scalar_select 0, %s21, %s19
  $region1: #{tpu_custom_call.1} parent=0
    #allocation2 [shape = 'u8[8192]{0}', space=vmem, size = 0x2000, scoped, tag = 'input window, operand 0']
    #allocation3 [shape = 's32[2]{0}', space=sflag, size = 0x8, scoped, tag = 'scoped memory for tpu_custom_call.1']
    #allocation4 [shape = 's32[2]{0}', space=sflag, size = 0x8, scoped, tag = 'scoped memory for tpu_custom_call.1']
    #allocation5 [shape = 'u8[512]{0}', space=vmem, size = 0x400, scoped, tag = 'input window, operand 2, single buffered']
    #allocation6 [shape = 's32[1]{0}', space=sflag, size = 0x4, scoped, tag = 'scoped memory for tpu_custom_call.1']
    #allocation7 [shape = 'u8[512]{0}', space=vmem, size = 0x400, scoped, tag = 'input window, operand 3, single buffered']
    #allocation8 [shape = 'u8[1024]{0}', space=vmem, size = 0x400, scoped, tag = 'input window, operand 5, single buffered']
    #allocation9 [shape = 's32[1]{0}', space=sflag, size = 0x4, scoped, tag = 'scoped memory for tpu_custom_call.1']
    #allocation10 [shape = 'u8[1024]{0}', space=vmem, size = 0x400, scoped, tag = 'input window, operand 7, single buffered']
    #allocation11 [shape = 'u8[1024]{0}', space=vmem, size = 0x400, scoped, tag = 'input window, operand 8, single buffered']
    #allocation12 [shape = 's32[1]{0}', space=sflag, size = 0x4, scoped, tag = 'scoped memory for tpu_custom_call.1']
    #allocation13 [shape = 'u8[1024]{0}', space=vmem, size = 0x400, scoped, tag = 'input window, operand 9, single buffered']
    #allocation14 [shape = 'u8[8192]{0}', space=vmem, size = 0x2000, scoped, tag = 'output window, operand 0']
    %23 = vsyncpa [#allocation3], 0
    %s24 = scalar_lea.sflag [#allocation3], 1
    %25 = vsyncpa %s24, 0
    %26 = vsyncpa [#allocation6], 0
    %27 = vsyncpa [#allocation9], 0
    %28 = vsyncpa [#allocation12], 0
    %29 = vsyncpa [#allocation4], 0
    %s30 = scalar_lea.sflag [#allocation4], 1
    %31 = vsyncpa %s30, 0
    loop: start=0, step=1, limit=4
    $region2: #{tpu_custom_call.1} parent=1 // loop_pre_header
      _
    $region3: #{tpu_custom_call.1} parent=1 // loop_header
      %s33 = sphi 0, %s37
      %p34 = scmp.ge.s32.totalorder %s33, 4
      %s43 = sphi 0, %s45
      %s46 = sphi 0, %s43
      %s47 = sphi 0, %s46
      %s63 = sphi 0, %s47
      %s69 = sphi 0, %s71
      %s72 = sphi 0, %s69
      %s73 = sphi 0, %s72
      %s89 = sphi 0, %s73
      %s93 = sphi 0, %s93
      %s95 = sphi 0, %s93
      %s96 = sphi 0, %s95
      %s110 = sphi 0, %s96
      %s114 = sphi 0, %s114
      %s116 = sphi 0, %s114
      %s117 = sphi 0, %s116
      %s131 = sphi 0, %s117
      %s135 = sphi 0, %s135
      %s137 = sphi 0, %s135
      %s138 = sphi 0, %s137
      %s152 = sphi 0, %s138
      %s156 = sphi 0, %s156
      %s158 = sphi 0, %s156
      %s159 = sphi 0, %s158
      %s173 = sphi 0, %s159
      %s177 = sphi 0, %s177
      %s179 = sphi 0, %s177
      %s180 = sphi 0, %s179
      %s194 = sphi 0, %s180
      %s198 = sphi 0, %s198
      %s200 = sphi 0, %s198
      %s201 = sphi 0, %s200
      %s215 = sphi 0, %s201
      %s219 = sphi 0, %s219
      %s221 = sphi 0, %s219
      %s222 = sphi 0, %s221
      %s236 = sphi 0, %s222
      %s240 = sphi 0, %s240
      %s242 = sphi 0, %s240
      %s243 = sphi 0, %s242
      %s257 = sphi 0, %s243
      %s261 = sphi 0, %s261
      %s263 = sphi 0, %s261
      %s264 = sphi 0, %s263
      %s278 = sphi 0, %s264
      %s282 = sphi 0, %s282
      %s284 = sphi 0, %s282
      %s285 = sphi 0, %s284
      %s299 = sphi 0, %s285
      %s303 = sphi 0, %s303
      %s305 = sphi 0, %s303
      %s306 = sphi 0, %s305
      %s320 = sphi 0, %s306
      %s324 = sphi 0, %s324
      %s326 = sphi 0, %s324
      %s327 = sphi 0, %s326
      %s341 = sphi 0, %s327
      %s345 = sphi 0, %s345
      %s347 = sphi 0, %s345
      %s348 = sphi 0, %s347
      %s362 = sphi 0, %s348
      %s366 = sphi 0, %s366
      %s368 = sphi 0, %s366
      %s369 = sphi 0, %s368
      %s383 = sphi 0, %s369
      %s387 = sphi 0, %s387
      %s389 = sphi 0, %s387
      %s390 = sphi 0, %s389
      %s404 = sphi 0, %s390
      %s408 = sphi 0, %s408
      %s410 = sphi 0, %s408
      %s411 = sphi 0, %s410
      %s425 = sphi 0, %s411
      %s431 = sphi 0, %s433
      %s434 = sphi 0, %s431
      %s435 = sphi 0, %s434
      %s451 = sphi 0, %s435
    $region4: #{tpu_custom_call.1} parent=1 // loop_header_branch
      %36 = sbr.rel (%p34) target = $region8
    $region5: #{tpu_custom_call.1} parent=1 // loop_body
      %s38 = ssub.s32 %s33, 1
      %s39 = ssub.s32 %s33, 2
      %s40 = sadd.s32 %s33, 1
      %s41 = ssub.s32 %s33, %s40
      %p42 = scmp.eq.s32.totalorder %s41, 0
      %s44 = sadd.s32 %s43, 1
      %s45 = scalar_select %p42, %s43, %s44
      %p48 = pneg %p42
      %p49 = scmp.eq.s32.totalorder %s33, 1
      %p50 = por %p48, %p49
      %p51 = scmp.ne.s32.totalorder %s43, %s46
      %p52 = scmp.eq.s32.totalorder %s33, 0
      %p53 = por %p51, %p52
      %p54 = scmp.ne.s32.totalorder %s43, %s46
      %p55 = scmp.eq.s32.totalorder %s38, 1
      %p56 = por %p54, %p55
      %p57 = scmp.ne.s32.totalorder %s46, %s47
      %p58 = scmp.eq.s32.totalorder %s38, 0
      %p59 = por %p57, %p58
      %p60 = scmp.ne.s32.totalorder %s46, %s47
      %p61 = scmp.eq.s32.totalorder %s39, 1
      %p62 = por %p60, %p61
      %p64 = scmp.ne.s32.totalorder %s47, %s63
      %p65 = scmp.eq.s32.totalorder %s39, 0
      %p66 = por %p64, %p65
      %s67 = ssub.s32 %s33, %s40
      %p68 = scmp.eq.s32.totalorder %s67, 0
      %s70 = sadd.s32 %s69, 1
      %s71 = scalar_select %p68, %s69, %s70
      %p74 = pneg %p68
      %p75 = scmp.eq.s32.totalorder %s33, 1
      %p76 = por %p74, %p75
      %p77 = scmp.ne.s32.totalorder %s69, %s72
      %p78 = scmp.eq.s32.totalorder %s33, 0
      %p79 = por %p77, %p78
      %p80 = scmp.ne.s32.totalorder %s69, %s72
      %p81 = scmp.eq.s32.totalorder %s38, 1
      %p82 = por %p80, %p81
      %p83 = scmp.ne.s32.totalorder %s72, %s73
      %p84 = scmp.eq.s32.totalorder %s38, 0
      %p85 = por %p83, %p84
      %p86 = scmp.ne.s32.totalorder %s72, %s73
      %p87 = scmp.eq.s32.totalorder %s39, 1
      %p88 = por %p86, %p87
      %p90 = scmp.ne.s32.totalorder %s73, %s89
      %p91 = scmp.eq.s32.totalorder %s39, 0
      %p92 = por %p90, %p91
      %s94 = sadd.s32 %s93, 1
      %p97 = scmp.eq.s32.totalorder %s33, 1
      %p98 = scmp.ne.s32.totalorder %s93, %s95
      %p99 = scmp.eq.s32.totalorder %s33, 0
      %p100 = por %p98, %p99
      %p101 = scmp.ne.s32.totalorder %s93, %s95
      %p102 = scmp.eq.s32.totalorder %s38, 1
      %p103 = por %p101, %p102
      %p104 = scmp.ne.s32.totalorder %s95, %s96
      %p105 = scmp.eq.s32.totalorder %s38, 0
      %p106 = por %p104, %p105
      %p107 = scmp.ne.s32.totalorder %s95, %s96
      %p108 = scmp.eq.s32.totalorder %s39, 1
      %p109 = por %p107, %p108
      %p111 = scmp.ne.s32.totalorder %s96, %s110
      %p112 = scmp.eq.s32.totalorder %s39, 0
      %p113 = por %p111, %p112
      %s115 = sadd.s32 %s114, 1
      %p118 = scmp.eq.s32.totalorder %s33, 1
      %p119 = scmp.ne.s32.totalorder %s114, %s116
      %p120 = scmp.eq.s32.totalorder %s33, 0
      %p121 = por %p119, %p120
      %p122 = scmp.ne.s32.totalorder %s114, %s116
      %p123 = scmp.eq.s32.totalorder %s38, 1
      %p124 = por %p122, %p123
      %p125 = scmp.ne.s32.totalorder %s116, %s117
      %p126 = scmp.eq.s32.totalorder %s38, 0
      %p127 = por %p125, %p126
      %p128 = scmp.ne.s32.totalorder %s116, %s117
      %p129 = scmp.eq.s32.totalorder %s39, 1
      %p130 = por %p128, %p129
      %p132 = scmp.ne.s32.totalorder %s117, %s131
      %p133 = scmp.eq.s32.totalorder %s39, 0
      %p134 = por %p132, %p133
      %s136 = sadd.s32 %s135, 1
      %p139 = scmp.eq.s32.totalorder %s33, 1
      %p140 = scmp.ne.s32.totalorder %s135, %s137
      %p141 = scmp.eq.s32.totalorder %s33, 0
      %p142 = por %p140, %p141
      %p143 = scmp.ne.s32.totalorder %s135, %s137
      %p144 = scmp.eq.s32.totalorder %s38, 1
      %p145 = por %p143, %p144
      %p146 = scmp.ne.s32.totalorder %s137, %s138
      %p147 = scmp.eq.s32.totalorder %s38, 0
      %p148 = por %p146, %p147
      %p149 = scmp.ne.s32.totalorder %s137, %s138
      %p150 = scmp.eq.s32.totalorder %s39, 1
      %p151 = por %p149, %p150
      %p153 = scmp.ne.s32.totalorder %s138, %s152
      %p154 = scmp.eq.s32.totalorder %s39, 0
      %p155 = por %p153, %p154
      %s157 = sadd.s32 %s156, 1
      %p160 = scmp.eq.s32.totalorder %s33, 1
      %p161 = scmp.ne.s32.totalorder %s156, %s158
      %p162 = scmp.eq.s32.totalorder %s33, 0
      %p163 = por %p161, %p162
      %p164 = scmp.ne.s32.totalorder %s156, %s158
      %p165 = scmp.eq.s32.totalorder %s38, 1
      %p166 = por %p164, %p165
      %p167 = scmp.ne.s32.totalorder %s158, %s159
      %p168 = scmp.eq.s32.totalorder %s38, 0
      %p169 = por %p167, %p168
      %p170 = scmp.ne.s32.totalorder %s158, %s159
      %p171 = scmp.eq.s32.totalorder %s39, 1
      %p172 = por %p170, %p171
      %p174 = scmp.ne.s32.totalorder %s159, %s173
      %p175 = scmp.eq.s32.totalorder %s39, 0
      %p176 = por %p174, %p175
      %s178 = sadd.s32 %s177, 1
      %p181 = scmp.eq.s32.totalorder %s33, 1
      %p182 = scmp.ne.s32.totalorder %s177, %s179
      %p183 = scmp.eq.s32.totalorder %s33, 0
      %p184 = por %p182, %p183
      %p185 = scmp.ne.s32.totalorder %s177, %s179
      %p186 = scmp.eq.s32.totalorder %s38, 1
      %p187 = por %p185, %p186
      %p188 = scmp.ne.s32.totalorder %s179, %s180
      %p189 = scmp.eq.s32.totalorder %s38, 0
      %p190 = por %p188, %p189
      %p191 = scmp.ne.s32.totalorder %s179, %s180
      %p192 = scmp.eq.s32.totalorder %s39, 1
      %p193 = por %p191, %p192
      %p195 = scmp.ne.s32.totalorder %s180, %s194
      %p196 = scmp.eq.s32.totalorder %s39, 0
      %p197 = por %p195, %p196
      %s199 = sadd.s32 %s198, 1
      %p202 = scmp.eq.s32.totalorder %s33, 1
      %p203 = scmp.ne.s32.totalorder %s198, %s200
      %p204 = scmp.eq.s32.totalorder %s33, 0
      %p205 = por %p203, %p204
      %p206 = scmp.ne.s32.totalorder %s198, %s200
      %p207 = scmp.eq.s32.totalorder %s38, 1
      %p208 = por %p206, %p207
      %p209 = scmp.ne.s32.totalorder %s200, %s201
      %p210 = scmp.eq.s32.totalorder %s38, 0
      %p211 = por %p209, %p210
      %p212 = scmp.ne.s32.totalorder %s200, %s201
      %p213 = scmp.eq.s32.totalorder %s39, 1
      %p214 = por %p212, %p213
      %p216 = scmp.ne.s32.totalorder %s201, %s215
      %p217 = scmp.eq.s32.totalorder %s39, 0
      %p218 = por %p216, %p217
      %s220 = sadd.s32 %s219, 1
      %p223 = scmp.eq.s32.totalorder %s33, 1
      %p224 = scmp.ne.s32.totalorder %s219, %s221
      %p225 = scmp.eq.s32.totalorder %s33, 0
      %p226 = por %p224, %p225
      %p227 = scmp.ne.s32.totalorder %s219, %s221
      %p228 = scmp.eq.s32.totalorder %s38, 1
      %p229 = por %p227, %p228
      %p230 = scmp.ne.s32.totalorder %s221, %s222
      %p231 = scmp.eq.s32.totalorder %s38, 0
      %p232 = por %p230, %p231
      %p233 = scmp.ne.s32.totalorder %s221, %s222
      %p234 = scmp.eq.s32.totalorder %s39, 1
      %p235 = por %p233, %p234
      %p237 = scmp.ne.s32.totalorder %s222, %s236
      %p238 = scmp.eq.s32.totalorder %s39, 0
      %p239 = por %p237, %p238
      %s241 = sadd.s32 %s240, 1
      %p244 = scmp.eq.s32.totalorder %s33, 1
      %p245 = scmp.ne.s32.totalorder %s240, %s242
      %p246 = scmp.eq.s32.totalorder %s33, 0
      %p247 = por %p245, %p246
      %p248 = scmp.ne.s32.totalorder %s240, %s242
      %p249 = scmp.eq.s32.totalorder %s38, 1
      %p250 = por %p248, %p249
      %p251 = scmp.ne.s32.totalorder %s242, %s243
      %p252 = scmp.eq.s32.totalorder %s38, 0
      %p253 = por %p251, %p252
      %p254 = scmp.ne.s32.totalorder %s242, %s243
      %p255 = scmp.eq.s32.totalorder %s39, 1
      %p256 = por %p254, %p255
      %p258 = scmp.ne.s32.totalorder %s243, %s257
      %p259 = scmp.eq.s32.totalorder %s39, 0
      %p260 = por %p258, %p259
      %s262 = sadd.s32 %s261, 1
      %p265 = scmp.eq.s32.totalorder %s33, 1
      %p266 = scmp.ne.s32.totalorder %s261, %s263
      %p267 = scmp.eq.s32.totalorder %s33, 0
      %p268 = por %p266, %p267
      %p269 = scmp.ne.s32.totalorder %s261, %s263
      %p270 = scmp.eq.s32.totalorder %s38, 1
      %p271 = por %p269, %p270
      %p272 = scmp.ne.s32.totalorder %s263, %s264
      %p273 = scmp.eq.s32.totalorder %s38, 0
      %p274 = por %p272, %p273
      %p275 = scmp.ne.s32.totalorder %s263, %s264
      %p276 = scmp.eq.s32.totalorder %s39, 1
      %p277 = por %p275, %p276
      %p279 = scmp.ne.s32.totalorder %s264, %s278
      %p280 = scmp.eq.s32.totalorder %s39, 0
      %p281 = por %p279, %p280
      %s283 = sadd.s32 %s282, 1
      %p286 = scmp.eq.s32.totalorder %s33, 1
      %p287 = scmp.ne.s32.totalorder %s282, %s284
      %p288 = scmp.eq.s32.totalorder %s33, 0
      %p289 = por %p287, %p288
      %p290 = scmp.ne.s32.totalorder %s282, %s284
      %p291 = scmp.eq.s32.totalorder %s38, 1
      %p292 = por %p290, %p291
      %p293 = scmp.ne.s32.totalorder %s284, %s285
      %p294 = scmp.eq.s32.totalorder %s38, 0
      %p295 = por %p293, %p294
      %p296 = scmp.ne.s32.totalorder %s284, %s285
      %p297 = scmp.eq.s32.totalorder %s39, 1
      %p298 = por %p296, %p297
      %p300 = scmp.ne.s32.totalorder %s285, %s299
      %p301 = scmp.eq.s32.totalorder %s39, 0
      %p302 = por %p300, %p301
      %s304 = sadd.s32 %s303, 1
      %p307 = scmp.eq.s32.totalorder %s33, 1
      %p308 = scmp.ne.s32.totalorder %s303, %s305
      %p309 = scmp.eq.s32.totalorder %s33, 0
      %p310 = por %p308, %p309
      %p311 = scmp.ne.s32.totalorder %s303, %s305
      %p312 = scmp.eq.s32.totalorder %s38, 1
      %p313 = por %p311, %p312
      %p314 = scmp.ne.s32.totalorder %s305, %s306
      %p315 = scmp.eq.s32.totalorder %s38, 0
      %p316 = por %p314, %p315
      %p317 = scmp.ne.s32.totalorder %s305, %s306
      %p318 = scmp.eq.s32.totalorder %s39, 1
      %p319 = por %p317, %p318
      %p321 = scmp.ne.s32.totalorder %s306, %s320
      %p322 = scmp.eq.s32.totalorder %s39, 0
      %p323 = por %p321, %p322
      %s325 = sadd.s32 %s324, 1
      %p328 = scmp.eq.s32.totalorder %s33, 1
      %p329 = scmp.ne.s32.totalorder %s324, %s326
      %p330 = scmp.eq.s32.totalorder %s33, 0
      %p331 = por %p329, %p330
      %p332 = scmp.ne.s32.totalorder %s324, %s326
      %p333 = scmp.eq.s32.totalorder %s38, 1
      %p334 = por %p332, %p333
      %p335 = scmp.ne.s32.totalorder %s326, %s327
      %p336 = scmp.eq.s32.totalorder %s38, 0
      %p337 = por %p335, %p336
      %p338 = scmp.ne.s32.totalorder %s326, %s327
      %p339 = scmp.eq.s32.totalorder %s39, 1
      %p340 = por %p338, %p339
      %p342 = scmp.ne.s32.totalorder %s327, %s341
      %p343 = scmp.eq.s32.totalorder %s39, 0
      %p344 = por %p342, %p343
      %s346 = sadd.s32 %s345, 1
      %p349 = scmp.eq.s32.totalorder %s33, 1
      %p350 = scmp.ne.s32.totalorder %s345, %s347
      %p351 = scmp.eq.s32.totalorder %s33, 0
      %p352 = por %p350, %p351
      %p353 = scmp.ne.s32.totalorder %s345, %s347
      %p354 = scmp.eq.s32.totalorder %s38, 1
      %p355 = por %p353, %p354
      %p356 = scmp.ne.s32.totalorder %s347, %s348
      %p357 = scmp.eq.s32.totalorder %s38, 0
      %p358 = por %p356, %p357
      %p359 = scmp.ne.s32.totalorder %s347, %s348
      %p360 = scmp.eq.s32.totalorder %s39, 1
      %p361 = por %p359, %p360
      %p363 = scmp.ne.s32.totalorder %s348, %s362
      %p364 = scmp.eq.s32.totalorder %s39, 0
      %p365 = por %p363, %p364
      %s367 = sadd.s32 %s366, 1
      %p370 = scmp.eq.s32.totalorder %s33, 1
      %p371 = scmp.ne.s32.totalorder %s366, %s368
      %p372 = scmp.eq.s32.totalorder %s33, 0
      %p373 = por %p371, %p372
      %p374 = scmp.ne.s32.totalorder %s366, %s368
      %p375 = scmp.eq.s32.totalorder %s38, 1
      %p376 = por %p374, %p375
      %p377 = scmp.ne.s32.totalorder %s368, %s369
      %p378 = scmp.eq.s32.totalorder %s38, 0
      %p379 = por %p377, %p378
      %p380 = scmp.ne.s32.totalorder %s368, %s369
      %p381 = scmp.eq.s32.totalorder %s39, 1
      %p382 = por %p380, %p381
      %p384 = scmp.ne.s32.totalorder %s369, %s383
      %p385 = scmp.eq.s32.totalorder %s39, 0
      %p386 = por %p384, %p385
      %s388 = sadd.s32 %s387, 1
      %p391 = scmp.eq.s32.totalorder %s33, 1
      %p392 = scmp.ne.s32.totalorder %s387, %s389
      %p393 = scmp.eq.s32.totalorder %s33, 0
      %p394 = por %p392, %p393
      %p395 = scmp.ne.s32.totalorder %s387, %s389
      %p396 = scmp.eq.s32.totalorder %s38, 1
      %p397 = por %p395, %p396
      %p398 = scmp.ne.s32.totalorder %s389, %s390
      %p399 = scmp.eq.s32.totalorder %s38, 0
      %p400 = por %p398, %p399
      %p401 = scmp.ne.s32.totalorder %s389, %s390
      %p402 = scmp.eq.s32.totalorder %s39, 1
      %p403 = por %p401, %p402
      %p405 = scmp.ne.s32.totalorder %s390, %s404
      %p406 = scmp.eq.s32.totalorder %s39, 0
      %p407 = por %p405, %p406
      %s409 = sadd.s32 %s408, 1
      %p412 = scmp.eq.s32.totalorder %s33, 1
      %p413 = scmp.ne.s32.totalorder %s408, %s410
      %p414 = scmp.eq.s32.totalorder %s33, 0
      %p415 = por %p413, %p414
      %p416 = scmp.ne.s32.totalorder %s408, %s410
      %p417 = scmp.eq.s32.totalorder %s38, 1
      %p418 = por %p416, %p417
      %p419 = scmp.ne.s32.totalorder %s410, %s411
      %p420 = scmp.eq.s32.totalorder %s38, 0
      %p421 = por %p419, %p420
      %p422 = scmp.ne.s32.totalorder %s410, %s411
      %p423 = scmp.eq.s32.totalorder %s39, 1
      %p424 = por %p422, %p423
      %p426 = scmp.ne.s32.totalorder %s411, %s425
      %p427 = scmp.eq.s32.totalorder %s39, 0
      %p428 = por %p426, %p427
      %s429 = ssub.s32 %s33, %s40
      %p430 = scmp.eq.s32.totalorder %s429, 0
      %s432 = sadd.s32 %s431, 1
      %s433 = scalar_select %p430, %s431, %s432
      %p436 = pneg %p430
      %p437 = scmp.eq.s32.totalorder %s33, 1
      %p438 = por %p436, %p437
      %p439 = scmp.ne.s32.totalorder %s431, %s434
      %p440 = scmp.eq.s32.totalorder %s33, 0
      %p441 = por %p439, %p440
      %p442 = scmp.ne.s32.totalorder %s431, %s434
      %p443 = scmp.eq.s32.totalorder %s38, 1
      %p444 = por %p442, %p443
      %p445 = scmp.ne.s32.totalorder %s434, %s435
      %p446 = scmp.eq.s32.totalorder %s38, 0
      %p447 = por %p445, %p446
      %p448 = scmp.ne.s32.totalorder %s434, %s435
      %p449 = scmp.eq.s32.totalorder %s39, 1
      %p450 = por %p448, %p449
      %p452 = scmp.ne.s32.totalorder %s435, %s451
      %p453 = scmp.eq.s32.totalorder %s39, 0
      %p454 = por %p452, %p453
      %p455 = scmp.le.s32.totalorder 1, %s33
      %p456 = scmp.lt.s32.totalorder %s33, 3
      %p457 = pnand %p455, %p456
      %p458 = pneg %p457
      // Predicated region
      $region9: #{tpu_custom_call.1} parent=5 // pred_check
        _
      $region10: #{tpu_custom_call.1} parent=5 // pred_check_branch
        %460 = sbr.rel (%p457) target = $region12
      $region11: #{tpu_custom_call.1} parent=5 // pred_region
        %s461 = ssub.s32 %s33, 1
        // Predicated region
        $region13: #{tpu_custom_call.1} parent=11 // pred_check
          %p462 = pneg %p106
        $region14: #{tpu_custom_call.1} parent=11 // pred_check_branch
          %464 = sbr.rel (%p462) target = $region16
        $region15: #{tpu_custom_call.1} parent=11 // pred_region
          %s466 = ssub.s32 16, 16
          %467 = vsyncadd [#allocation6], %s466
          %s469 = sshll.u32 [#allocation5], 4
          %s470 = int_to_ptr.vmem [resolvable:$true] %s469
          %472 = dma.hbm_to_vmem [thread:$0]  %s2, 16, %s470, [#allocation6]
        $region16: #{tpu_custom_call.1} parent=11 // pred_fallthru
          _
        // Predicated region
        $region17: #{tpu_custom_call.1} parent=11 // pred_check
          %p473 = pneg %p127
        $region18: #{tpu_custom_call.1} parent=11 // pred_check_branch
          %475 = sbr.rel (%p473) target = $region20
        $region19: #{tpu_custom_call.1} parent=11 // pred_region
          %s477 = ssub.s32 16, 16
          %478 = vsyncadd [#allocation6], %s477
          %s480 = sshll.u32 [#allocation7], 4
          %s481 = int_to_ptr.vmem [resolvable:$true] %s480
          %483 = dma.hbm_to_vmem [thread:$0]  %s3, 16, %s481, [#allocation6]
        $region20: #{tpu_custom_call.1} parent=11 // pred_fallthru
          _
        // Predicated region
        $region21: #{tpu_custom_call.1} parent=11 // pred_check
          %p484 = pneg %p148
        $region22: #{tpu_custom_call.1} parent=11 // pred_check_branch
          %486 = sbr.rel (%p484) target = $region24
        $region23: #{tpu_custom_call.1} parent=11 // pred_region
          _
        $region24: #{tpu_custom_call.1} parent=11 // pred_fallthru
          _
        // Predicated region
        $region25: #{tpu_custom_call.1} parent=11 // pred_check
          %p487 = pneg %p169
        $region26: #{tpu_custom_call.1} parent=11 // pred_check_branch
          %489 = sbr.rel (%p487) target = $region28
        $region27: #{tpu_custom_call.1} parent=11 // pred_region
          %s491 = ssub.s32 32, 32
          %492 = vsyncadd [#allocation9], %s491
          %s493 = sshll.u32 [#allocation8], 4
          %s494 = int_to_ptr.vmem [resolvable:$true] %s493
          %499 = dma.hbm_to_vmem [thread:$0]  %s5, 32, %s494, [#allocation9], 16, 16, 1
        $region28: #{tpu_custom_call.1} parent=11 // pred_fallthru
          _
        // Predicated region
        $region29: #{tpu_custom_call.1} parent=11 // pred_check
          %p500 = pneg %p190
        $region30: #{tpu_custom_call.1} parent=11 // pred_check_branch
          %502 = sbr.rel (%p500) target = $region32
        $region31: #{tpu_custom_call.1} parent=11 // pred_region
          _
        $region32: #{tpu_custom_call.1} parent=11 // pred_fallthru
          _
        // Predicated region
        $region33: #{tpu_custom_call.1} parent=11 // pred_check
          %p503 = pneg %p211
        $region34: #{tpu_custom_call.1} parent=11 // pred_check_branch
          %505 = sbr.rel (%p503) target = $region36
        $region35: #{tpu_custom_call.1} parent=11 // pred_region
          %s507 = ssub.s32 32, 32
          %508 = vsyncadd [#allocation9], %s507
          %s509 = sshll.u32 [#allocation10], 4
          %s510 = int_to_ptr.vmem [resolvable:$true] %s509
          %515 = dma.hbm_to_vmem [thread:$0]  %s7, 32, %s510, [#allocation9], 16, 16, 1
        $region36: #{tpu_custom_call.1} parent=11 // pred_fallthru
          _
        // Predicated region
        $region37: #{tpu_custom_call.1} parent=11 // pred_check
          %p516 = pneg %p232
        $region38: #{tpu_custom_call.1} parent=11 // pred_check_branch
          %518 = sbr.rel (%p516) target = $region40
        $region39: #{tpu_custom_call.1} parent=11 // pred_region
          %s520 = ssub.s32 32, 32
          %521 = vsyncadd [#allocation12], %s520
          %s522 = sshll.u32 [#allocation11], 4
          %s523 = int_to_ptr.vmem [resolvable:$true] %s522
          %528 = dma.hbm_to_vmem [thread:$0]  %s8, 32, %s523, [#allocation12], 16, 16, 1
        $region40: #{tpu_custom_call.1} parent=11 // pred_fallthru
          _
        // Predicated region
        $region41: #{tpu_custom_call.1} parent=11 // pred_check
          %p529 = pneg %p253
        $region42: #{tpu_custom_call.1} parent=11 // pred_check_branch
          %531 = sbr.rel (%p529) target = $region44
        $region43: #{tpu_custom_call.1} parent=11 // pred_region
          %s533 = ssub.s32 32, 32
          %534 = vsyncadd [#allocation12], %s533
          %s535 = sshll.u32 [#allocation13], 4
          %s536 = int_to_ptr.vmem [resolvable:$true] %s535
          %541 = dma.hbm_to_vmem [thread:$0]  %s9, 32, %s536, [#allocation12], 16, 16, 1
        $region44: #{tpu_custom_call.1} parent=11 // pred_fallthru
          _
        // Predicated region
        $region45: #{tpu_custom_call.1} parent=11 // pred_check
          %p542 = pneg %p274
        $region46: #{tpu_custom_call.1} parent=11 // pred_check_branch
          %544 = sbr.rel (%p542) target = $region48
        $region47: #{tpu_custom_call.1} parent=11 // pred_region
          _
        $region48: #{tpu_custom_call.1} parent=11 // pred_fallthru
          _
        // Predicated region
        $region49: #{tpu_custom_call.1} parent=11 // pred_check
          %p545 = pneg %p295
        $region50: #{tpu_custom_call.1} parent=11 // pred_check_branch
          %547 = sbr.rel (%p545) target = $region52
        $region51: #{tpu_custom_call.1} parent=11 // pred_region
          _
        $region52: #{tpu_custom_call.1} parent=11 // pred_fallthru
          _
        // Predicated region
        $region53: #{tpu_custom_call.1} parent=11 // pred_check
          %p548 = pneg %p316
        $region54: #{tpu_custom_call.1} parent=11 // pred_check_branch
          %550 = sbr.rel (%p548) target = $region56
        $region55: #{tpu_custom_call.1} parent=11 // pred_region
          _
        $region56: #{tpu_custom_call.1} parent=11 // pred_fallthru
          _
        // Predicated region
        $region57: #{tpu_custom_call.1} parent=11 // pred_check
          %p551 = pneg %p337
        $region58: #{tpu_custom_call.1} parent=11 // pred_check_branch
          %553 = sbr.rel (%p551) target = $region60
        $region59: #{tpu_custom_call.1} parent=11 // pred_region
          _
        $region60: #{tpu_custom_call.1} parent=11 // pred_fallthru
          _
        // Predicated region
        $region61: #{tpu_custom_call.1} parent=11 // pred_check
          %p554 = pneg %p358
        $region62: #{tpu_custom_call.1} parent=11 // pred_check_branch
          %556 = sbr.rel (%p554) target = $region64
        $region63: #{tpu_custom_call.1} parent=11 // pred_region
          _
        $region64: #{tpu_custom_call.1} parent=11 // pred_fallthru
          _
        // Predicated region
        $region65: #{tpu_custom_call.1} parent=11 // pred_check
          %p557 = pneg %p379
        $region66: #{tpu_custom_call.1} parent=11 // pred_check_branch
          %559 = sbr.rel (%p557) target = $region68
        $region67: #{tpu_custom_call.1} parent=11 // pred_region
          _
        $region68: #{tpu_custom_call.1} parent=11 // pred_fallthru
          _
        // Predicated region
        $region69: #{tpu_custom_call.1} parent=11 // pred_check
          %p560 = pneg %p400
        $region70: #{tpu_custom_call.1} parent=11 // pred_check_branch
          %562 = sbr.rel (%p560) target = $region72
        $region71: #{tpu_custom_call.1} parent=11 // pred_region
          _
        $region72: #{tpu_custom_call.1} parent=11 // pred_fallthru
          _
        // Predicated region
        $region73: #{tpu_custom_call.1} parent=11 // pred_check
          %p563 = pneg %p421
        $region74: #{tpu_custom_call.1} parent=11 // pred_check_branch
          %565 = sbr.rel (%p563) target = $region76
        $region75: #{tpu_custom_call.1} parent=11 // pred_region
          _
        $region76: #{tpu_custom_call.1} parent=11 // pred_fallthru
          _
      $region12: #{tpu_custom_call.1} parent=5 // pred_fallthru
        _
      %p566 = scmp.lt.s32.totalorder %s33, 2
      // Predicated region
      $region77: #{tpu_custom_call.1} parent=5 // pred_check
        %p567 = pneg %p566
      $region78: #{tpu_custom_call.1} parent=5 // pred_check_branch
        %569 = sbr.rel (%p567) target = $region80
      $region79: #{tpu_custom_call.1} parent=5 // pred_region
        // Predicated region
        $region81: #{tpu_custom_call.1} parent=79 // pred_check
          %p570 = pneg %p53
        $region82: #{tpu_custom_call.1} parent=79 // pred_check_branch
          %572 = sbr.rel (%p570) target = $region84
        $region83: #{tpu_custom_call.1} parent=79 // pred_region
          %s573 = sand.u32 %s43, 1
          %s574 = scalar_lea.sflag [#allocation3], %s573
          %s575 = sand.u32 %s43, 1
          %s576 = smul.addr %s575, 8
          %s577 = scalar_lea.vmem [#allocation2], %s576
          %s579 = ssub.s32 128, 128
          %580 = vsyncadd %s574, %s579
          %s581 = smul.addr %s33, 128
          %s582 = scalar_lea.hbm %s0, %s581
          %s584 = sshll.u32 %s577, 4
          %s585 = int_to_ptr.vmem [resolvable:$true] %s584
          %587 = dma.hbm_to_vmem [thread:$0]  %s582, 128, %s585, %s574
        $region84: #{tpu_custom_call.1} parent=79 // pred_fallthru
          _
        // Predicated region
        $region85: #{tpu_custom_call.1} parent=79 // pred_check
          %p588 = pneg %p79
        $region86: #{tpu_custom_call.1} parent=79 // pred_check_branch
          %590 = sbr.rel (%p588) target = $region88
        $region87: #{tpu_custom_call.1} parent=79 // pred_region
          %p591 = scmp.lt.s32.totalorder %s33, 1
          %s592 = scalar_select %p591, %s33, 1
          %s593 = scalar_lea.vmem %s1, %s592
        $region88: #{tpu_custom_call.1} parent=79 // pred_fallthru
          _
      $region80: #{tpu_custom_call.1} parent=5 // pred_fallthru
        _
      %p594 = scmp.le.s32.totalorder 1, %s33
      %p595 = scmp.lt.s32.totalorder %s33, 3
      %p596 = pnand %p594, %p595
      %p597 = pneg %p596
      // Predicated region
      $region89: #{tpu_custom_call.1} parent=5 // pred_check
        _
      $region90: #{tpu_custom_call.1} parent=5 // pred_check_branch
        %599 = sbr.rel (%p596) target = $region92
      $region91: #{tpu_custom_call.1} parent=5 // pred_region
        %s600 = ssub.s32 %s33, 1
        %s601 = sand.u32 %s46, 1
        %s602 = scalar_lea.sflag [#allocation3], %s601
        %s603 = sand.u32 %s46, 1
        %s604 = smul.addr %s603, 8
        %s605 = scalar_lea.vmem [#allocation2], %s604
        // Predicated region
        $region93: #{tpu_custom_call.1} parent=91 // pred_check
          %p606 = pneg %p59
        $region94: #{tpu_custom_call.1} parent=91 // pred_check_branch
          %608 = sbr.rel (%p606) target = $region96
        $region95: #{tpu_custom_call.1} parent=91 // pred_region
          %609 = dma.done %s602, 128
        $region96: #{tpu_custom_call.1} parent=91 // pred_fallthru
          _
        // Predicated region
        $region97: #{tpu_custom_call.1} parent=91 // pred_check
          %p610 = pneg %p106
        $region98: #{tpu_custom_call.1} parent=91 // pred_check_branch
          %612 = sbr.rel (%p610) target = $region100
        $region99: #{tpu_custom_call.1} parent=91 // pred_region
          %613 = dma.done [#allocation6], 16
        $region100: #{tpu_custom_call.1} parent=91 // pred_fallthru
          _
        // Predicated region
        $region101: #{tpu_custom_call.1} parent=91 // pred_check
          %p614 = pneg %p127
        $region102: #{tpu_custom_call.1} parent=91 // pred_check_branch
          %616 = sbr.rel (%p614) target = $region104
        $region103: #{tpu_custom_call.1} parent=91 // pred_region
          %617 = dma.done [#allocation6], 16
        $region104: #{tpu_custom_call.1} parent=91 // pred_fallthru
          _
        // Predicated region
        $region105: #{tpu_custom_call.1} parent=91 // pred_check
          %p618 = pneg %p169
        $region106: #{tpu_custom_call.1} parent=91 // pred_check_branch
          %620 = sbr.rel (%p618) target = $region108
        $region107: #{tpu_custom_call.1} parent=91 // pred_region
          %621 = dma.done [#allocation9], 32
        $region108: #{tpu_custom_call.1} parent=91 // pred_fallthru
          _
        // Predicated region
        $region109: #{tpu_custom_call.1} parent=91 // pred_check
          %p622 = pneg %p211
        $region110: #{tpu_custom_call.1} parent=91 // pred_check_branch
          %624 = sbr.rel (%p622) target = $region112
        $region111: #{tpu_custom_call.1} parent=91 // pred_region
          %625 = dma.done [#allocation9], 32
        $region112: #{tpu_custom_call.1} parent=91 // pred_fallthru
          _
        // Predicated region
        $region113: #{tpu_custom_call.1} parent=91 // pred_check
          %p626 = pneg %p232
        $region114: #{tpu_custom_call.1} parent=91 // pred_check_branch
          %628 = sbr.rel (%p626) target = $region116
        $region115: #{tpu_custom_call.1} parent=91 // pred_region
          %629 = dma.done [#allocation12], 32
        $region116: #{tpu_custom_call.1} parent=91 // pred_fallthru
          _
        // Predicated region
        $region117: #{tpu_custom_call.1} parent=91 // pred_check
          %p630 = pneg %p253
        $region118: #{tpu_custom_call.1} parent=91 // pred_check_branch
          %632 = sbr.rel (%p630) target = $region120
        $region119: #{tpu_custom_call.1} parent=91 // pred_region
          %633 = dma.done [#allocation12], 32
        $region120: #{tpu_custom_call.1} parent=91 // pred_fallthru
          _
        %s634 = sand.u32 %s46, 1
        %s635 = scalar_lea.sflag [#allocation3], %s634
        %s636 = sand.u32 %s46, 1
        %s637 = smul.addr %s636, 8
        %s638 = scalar_lea.vmem [#allocation2], %s637
        %p639 = pneg %p59
        %p640 = pneg %p56
        %p641 = scmp.lt.s32.totalorder %s38, 1
        %s642 = scalar_select %p641, %s38, 1
        %s643 = scalar_lea.vmem %s1, %s642
        %p644 = pneg %p85
        %p645 = pneg %p82
        %p646 = pneg %p106
        %p647 = pneg %p103
        %p648 = pneg %p127
        %p649 = pneg %p124
        %p650 = pneg %p148
        %p651 = pneg %p145
        %p652 = pneg %p169
        %p653 = pneg %p166
        %p654 = pneg %p190
        %p655 = pneg %p187
        %p656 = pneg %p211
        %p657 = pneg %p208
        %p658 = pneg %p232
        %p659 = pneg %p229
        %p660 = pneg %p253
        %p661 = pneg %p250
        %p662 = pneg %p274
        %p663 = pneg %p271
        %p664 = pneg %p295
        %p665 = pneg %p292
        %p666 = pneg %p316
        %p667 = pneg %p313
        %p668 = pneg %p337
        %p669 = pneg %p334
        %p670 = pneg %p358
        %p671 = pneg %p355
        %p672 = pneg %p379
        %p673 = pneg %p376
        %p674 = pneg %p400
        %p675 = pneg %p397
        %p676 = pneg %p421
        %p677 = pneg %p418
        %p678 = pneg %p447
        %p679 = pneg %p444
        %s680 = sand.u32 %s434, 1
        %s681 = scalar_lea.sflag [#allocation4], %s680
        %s682 = sand.u32 %s434, 1
        %s683 = smul.addr %s682, 8
        %s684 = scalar_lea.vmem [#allocation14], %s683
        %p685 = scmp.lt.s32.totalorder %s38, 1
        %s686 = scalar_select %p685, %s38, 1
        %s687 = scalar_lea.vmem %s1, %s686
        %v688 = vld [vmem:[%s605] sm:$0xff]
        %v689 = vld [vmem:[#allocation5] sm:$0x1]
        %v690 = vld [vmem:[#allocation7] sm:$0x1]
        %vm691 = vcmask 261120
        %v692 = vsel %vm691, %v688, 0.0
        %693 = vadd.xlane.f32.xlu0 %v692
        %v694 = vpop.xlane.xlu0 %693
        %v695 = vrcp.pop 32.0
        %v696 = vmul.f32 %v694, %v695
        %v697 = vsub.f32 %v688, %v696
        %v698 = vmul.f32 %v697, %v697
        %v699 = vsel %vm691, %v698, 0.0
        %700 = vadd.xlane.f32.xlu0 %v699
        %v701 = vpop.xlane.xlu0 %700
        %v702 = vmul.f32 %v701, %v695
        %v703 = vadd.f32 %v702, 1e-12
        %v704 = vrsqrt.pop %v703
        %v705 = vmul.f32 %v697, %v704
        %v707 = vlaneseq
        %v708 = vshrl.u32 %v707, 7
        %v709 = vsub.s32 0, %v708
        %v710 = vrot.slane %v689, %v709
        %v712 = vmul.f32 %v705, %v710
        %v714 = vlaneseq
        %v715 = vshrl.u32 %v714, 7
        %v716 = vsub.s32 0, %v715
        %v717 = vrot.slane %v690, %v716
        %v719 = vadd.f32 %v712, %v717
        %v720 = vld [vmem:[%s687] sm:$0x1]
        %v721 = vld [vmem:[%s4] sm:$0xff]
        %v722 = vld [vmem:[%s4 + $0x8] sm:$0xff]
        %v723 = vld [vmem:[%s4 + $0x10] sm:$0xff]
        %v724 = vld [vmem:[%s4 + $0x18] sm:$0xff]
        %v725 = vld [vmem:[#allocation8] sm:$0x1]
        %v727 = vlaneseq
        %v728 = vshrl.u32 %v727, 7
        %v729 = vsub.s32 0, %v728
        %v730 = vrot.slane %v725, %v729
        %v733 = vsel %vm691, %v719, 0
        %735 = vmatprep.subr.mxu0 0.0
        %736 = vmatpush1.msra.mxu0 %v721
        %737 = vmatprep.subr.mxu0 0.0
        %738 = vmatpush1.msra.mxu0 %v722
        %739 = vmatprep.subr.mxu0 0.0
        %740 = vmatpush1.msra.mxu0 %v723
        %741 = vmatprep.subr.mxu0 0.0
        %742 = vmatpush1.msra.mxu0 %v724
        %743 = vmatprep.subr.mxu0 0.0
        %744 = vmatpush1.msra.mxu0 0.0
        %745 = vmatprep.subr.mxu0 0.0
        %746 = vmatpush1.msra.mxu0 0.0
        %747 = vmatprep.subr.mxu0 0.0
        %748 = vmatpush1.msra.mxu0 0.0
        %749 = vmatprep.subr.mxu0 0.0
        %750 = vmatpush1.msra.mxu0 0.0
        %751 = vmatprep.subr.mxu0 0.0
        %752 = vmatpush1.msra.mxu0 0.0
        %753 = vmatprep.subr.mxu0 0.0
        %754 = vmatpush1.msra.mxu0 0.0
        %755 = vmatprep.subr.mxu0 0.0
        %756 = vmatpush1.msra.mxu0 0.0
        %757 = vmatprep.subr.mxu0 0.0
        %758 = vmatpush1.msra.mxu0 0.0
        %759 = vmatprep.subr.mxu0 0.0
        %760 = vmatpush1.msra.mxu0 0.0
        %761 = vmatprep.subr.mxu0 0.0
        %762 = vmatpush1.msra.mxu0 0.0
        %763 = vmatprep.subr.mxu0 0.0
        %764 = vmatpush1.msra.mxu0 0.0
        %765 = vmatprep.subr.mxu0 0.0
        %766 = vmatpush1.msra.mxu0 0.0
        %767 = vmatprep.subr.mxu0 0.0
        %768 = vmatpush1.msra.mxu0 0.0
        %769 = vmatprep.subr.mxu0 0.0
        %770 = vmatpush1.msra.mxu0 0.0
        %771 = vmatprep.subr.mxu0 0.0
        %772 = vmatpush1.msra.mxu0 0.0
        %773 = vmatprep.subr.mxu0 0.0
        %774 = vmatpush1.msra.mxu0 0.0
        %775 = vmatprep.subr.mxu0 0.0
        %776 = vmatpush1.msra.mxu0 0.0
        %777 = vmatprep.subr.mxu0 0.0
        %778 = vmatpush1.msra.mxu0 0.0
        %779 = vmatprep.subr.mxu0 0.0
        %780 = vmatpush1.msra.mxu0 0.0
        %781 = vmatprep.subr.mxu0 0.0
        %782 = vmatpush1.msra.mxu0 0.0
        %783 = vmatprep.subr.mxu0 0.0
        %784 = vmatpush1.msra.mxu0 0.0
        %785 = vmatprep.subr.mxu0 0.0
        %786 = vmatpush1.msra.mxu0 0.0
        %787 = vmatprep.subr.mxu0 0.0
        %788 = vmatpush1.msra.mxu0 0.0
        %789 = vmatprep.subr.mxu0 0.0
        %790 = vmatpush1.msra.mxu0 0.0
        %791 = vmatprep.subr.mxu0 0.0
        %792 = vmatpush1.msra.mxu0 0.0
        %793 = vmatprep.subr.mxu0 0.0
        %794 = vmatpush1.msra.mxu0 0.0
        %795 = vmatprep.subr.mxu0 0.0
        %796 = vmatpush1.msra.mxu0 0.0
        %797 = vmatprep.subr.mxu0 0.0
        %798 = vmatpush1.msra.mxu0 0.0
        %799 = vmatprep.mubr.f32.mxu0 0.0
        %800 = vmatmul.mubr.f32.gmra.mrb[0].mxu0 %v733
        %v801 = vpop.f32.mrb[0].mxu0
        %v802 = vadd.f32 %v730, %v801
        %v803 = vpop.f32.mrb[0].mxu0
        %804 = vdwg.mxu0
        %v805 = vld [vmem:[%s6] sm:$0xff]
        %v806 = vld [vmem:[%s6 + $0x8] sm:$0xff]
        %v807 = vld [vmem:[%s6 + $0x10] sm:$0xff]
        %v808 = vld [vmem:[%s6 + $0x18] sm:$0xff]
        %810 = vrot.lane.b32.xlu0 %v802, 96
        %v811 = vpop.permute.xlu0 %810
        %vm812 = vcmask 64512
        %v813 = vsel %vm812, %v802, 0
        %v815 = vsel %vm812, %v811, 0
        %817 = vmatprep.subr.mxu0 0.0
        %818 = vmatpush1.xpose.msra.mxu0 %v815
        %819 = vmatprep.subr.mxu0 0.0
        %820 = vmatpush1.xpose.msra.mxu0 0.0
        %821 = vmatprep.subr.mxu0 0.0
        %822 = vmatpush1.xpose.msra.mxu0 0.0
        %823 = vmatprep.subr.mxu0 0.0
        %824 = vmatpush1.xpose.msra.mxu0 0.0
        %825 = vmatprep.subr.mxu0 0.0
        %826 = vmatpush1.xpose.msra.mxu0 0.0
        %827 = vmatprep.subr.mxu0 0.0
        %828 = vmatpush1.xpose.msra.mxu0 0.0
        %829 = vmatprep.subr.mxu0 0.0
        %830 = vmatpush1.xpose.msra.mxu0 0.0
        %831 = vmatprep.subr.mxu0 0.0
        %832 = vmatpush1.xpose.msra.mxu0 0.0
        %833 = vmatprep.subr.mxu0 0.0
        %834 = vmatpush1.xpose.msra.mxu0 0.0
        %835 = vmatprep.subr.mxu0 0.0
        %836 = vmatpush1.xpose.msra.mxu0 0.0
        %837 = vmatprep.subr.mxu0 0.0
        %838 = vmatpush1.xpose.msra.mxu0 0.0
        %839 = vmatprep.subr.mxu0 0.0
        %840 = vmatpush1.xpose.msra.mxu0 0.0
        %841 = vmatprep.subr.mxu0 0.0
        %842 = vmatpush1.xpose.msra.mxu0 0.0
        %843 = vmatprep.subr.mxu0 0.0
        %844 = vmatpush1.xpose.msra.mxu0 0.0
        %845 = vmatprep.subr.mxu0 0.0
        %846 = vmatpush1.xpose.msra.mxu0 0.0
        %847 = vmatprep.subr.mxu0 0.0
        %848 = vmatpush1.xpose.msra.mxu0 0.0
        %849 = vmatprep.subr.mxu0 0.0
        %850 = vmatpush1.xpose.msra.mxu0 0.0
        %851 = vmatprep.subr.mxu0 0.0
        %852 = vmatpush1.xpose.msra.mxu0 0.0
        %853 = vmatprep.subr.mxu0 0.0
        %854 = vmatpush1.xpose.msra.mxu0 0.0
        %855 = vmatprep.subr.mxu0 0.0
        %856 = vmatpush1.xpose.msra.mxu0 0.0
        %857 = vmatprep.subr.mxu0 0.0
        %858 = vmatpush1.xpose.msra.mxu0 0.0
        %859 = vmatprep.subr.mxu0 0.0
        %860 = vmatpush1.xpose.msra.mxu0 0.0
        %861 = vmatprep.subr.mxu0 0.0
        %862 = vmatpush1.xpose.msra.mxu0 0.0
        %863 = vmatprep.subr.mxu0 0.0
        %864 = vmatpush1.xpose.msra.mxu0 0.0
        %865 = vmatprep.subr.mxu0 0.0
        %866 = vmatpush1.xpose.msra.mxu0 0.0
        %867 = vmatprep.subr.mxu0 0.0
        %868 = vmatpush1.xpose.msra.mxu0 0.0
        %869 = vmatprep.subr.mxu0 0.0
        %870 = vmatpush1.xpose.msra.mxu0 0.0
        %871 = vmatprep.subr.mxu0 0.0
        %872 = vmatpush1.xpose.msra.mxu0 0.0
        %873 = vmatprep.subr.mxu0 0.0
        %874 = vmatpush1.xpose.msra.mxu0 0.0
        %875 = vmatprep.subr.mxu0 0.0
        %876 = vmatpush1.xpose.msra.mxu0 0.0
        %877 = vmatprep.subr.mxu0 0.0
        %878 = vmatpush1.xpose.msra.mxu0 0.0
        %879 = vmatprep.subr.mxu0 0.0
        %880 = vmatpush1.xpose.msra.mxu0 0.0
        %881 = vmatprep.mubr.f32.mxu0 0.0
        %882 = vmatmul.mubr.f32.gmra.mrb[0].mxu0 %v813
        %v883 = vpop.f32.mrb[0].mxu0
        %v884 = vadd.f32 0.0, %v883
        %v885 = vpop.f32.mrb[0].mxu0
        %886 = vdwg.mxu0
        %v887 = vmul.f32 %v884, 0.35355338
        %v889 = vlaneseq
        %v890 = vshrl.u32 %v889, 7
        %v891 = vsub.s32 0, %v890
        %v892 = vrot.slane %v720, %v891
        %v894 = vadd.f32 %v887, %v892
        %v895 = vsel %vm812, %v894, -inf
        %896 = vmax.xlane.f32.xlu0 %v895
        %v897 = vpop.xlane.xlu0 %896
        %v898 = vsub.f32 %v894, %v897
        %v899 = vmul.f32 %v898, 1.442695
        %v900 = vpow.pop %v899
        %v901 = vsel %vm812, %v900, 0.0
        %902 = vadd.xlane.f32.xlu0 %v901
        %v903 = vpop.xlane.xlu0 %902
        %v904 = vrcp.pop %v903
        %v905 = vmul.f32 %v900, %v904
        %906 = vrot.lane.b32.xlu0 %v802, 64
        %v907 = vpop.permute.xlu0 %906
        %v910 = vsel %vm812, %v905, 0
        %912 = vmatprep.subr.mxu0 0.0
        %913 = vmatpush1.msra.mxu0 %v907
        %914 = vmatprep.subr.mxu0 0.0
        %915 = vmatpush1.msra.mxu0 0.0
        %916 = vmatprep.subr.mxu0 0.0
        %917 = vmatpush1.msra.mxu0 0.0
        %918 = vmatprep.subr.mxu0 0.0
        %919 = vmatpush1.msra.mxu0 0.0
        %920 = vmatprep.subr.mxu0 0.0
        %921 = vmatpush1.msra.mxu0 0.0
        %922 = vmatprep.subr.mxu0 0.0
        %923 = vmatpush1.msra.mxu0 0.0
        %924 = vmatprep.subr.mxu0 0.0
        %925 = vmatpush1.msra.mxu0 0.0
        %926 = vmatprep.subr.mxu0 0.0
        %927 = vmatpush1.msra.mxu0 0.0
        %928 = vmatprep.subr.mxu0 0.0
        %929 = vmatpush1.msra.mxu0 0.0
        %930 = vmatprep.subr.mxu0 0.0
        %931 = vmatpush1.msra.mxu0 0.0
        %932 = vmatprep.subr.mxu0 0.0
        %933 = vmatpush1.msra.mxu0 0.0
        %934 = vmatprep.subr.mxu0 0.0
        %935 = vmatpush1.msra.mxu0 0.0
        %936 = vmatprep.subr.mxu0 0.0
        %937 = vmatpush1.msra.mxu0 0.0
        %938 = vmatprep.subr.mxu0 0.0
        %939 = vmatpush1.msra.mxu0 0.0
        %940 = vmatprep.subr.mxu0 0.0
        %941 = vmatpush1.msra.mxu0 0.0
        %942 = vmatprep.subr.mxu0 0.0
        %943 = vmatpush1.msra.mxu0 0.0
        %944 = vmatprep.subr.mxu0 0.0
        %945 = vmatpush1.msra.mxu0 0.0
        %946 = vmatprep.subr.mxu0 0.0
        %947 = vmatpush1.msra.mxu0 0.0
        %948 = vmatprep.subr.mxu0 0.0
        %949 = vmatpush1.msra.mxu0 0.0
        %950 = vmatprep.subr.mxu0 0.0
        %951 = vmatpush1.msra.mxu0 0.0
        %952 = vmatprep.subr.mxu0 0.0
        %953 = vmatpush1.msra.mxu0 0.0
        %954 = vmatprep.subr.mxu0 0.0
        %955 = vmatpush1.msra.mxu0 0.0
        %956 = vmatprep.subr.mxu0 0.0
        %957 = vmatpush1.msra.mxu0 0.0
        %958 = vmatprep.subr.mxu0 0.0
        %959 = vmatpush1.msra.mxu0 0.0
        %960 = vmatprep.subr.mxu0 0.0
        %961 = vmatpush1.msra.mxu0 0.0
        %962 = vmatprep.subr.mxu0 0.0
        %963 = vmatpush1.msra.mxu0 0.0
        %964 = vmatprep.subr.mxu0 0.0
        %965 = vmatpush1.msra.mxu0 0.0
        %966 = vmatprep.subr.mxu0 0.0
        %967 = vmatpush1.msra.mxu0 0.0
        %968 = vmatprep.subr.mxu0 0.0
        %969 = vmatpush1.msra.mxu0 0.0
        %970 = vmatprep.subr.mxu0 0.0
        %971 = vmatpush1.msra.mxu0 0.0
        %972 = vmatprep.subr.mxu0 0.0
        %973 = vmatpush1.msra.mxu0 0.0
        %974 = vmatprep.subr.mxu0 0.0
        %975 = vmatpush1.msra.mxu0 0.0
        %976 = vmatprep.mubr.f32.mxu0 0.0
        %977 = vmatmul.mubr.f32.gmra.mrb[0].mxu0 %v910
        %v978 = vpop.f32.mrb[0].mxu0
        %v979 = vadd.f32 0.0, %v978
        %v980 = vpop.f32.mrb[0].mxu0
        %981 = vdwg.mxu0
        %982 = vrot.lane.b32.xlu0 %v802, 120
        %v983 = vpop.permute.xlu0 %982
        %984 = vrot.lane.b32.xlu0 %v802, 88
        %v985 = vpop.permute.xlu0 %984
        %v986 = vsel %vm812, %v983, 0
        %v988 = vsel %vm812, %v985, 0
        %990 = vmatprep.subr.mxu0 0.0
        %991 = vmatpush1.xpose.msra.mxu0 %v988
        %992 = vmatprep.subr.mxu0 0.0
        %993 = vmatpush1.xpose.msra.mxu0 0.0
        %994 = vmatprep.subr.mxu0 0.0
        %995 = vmatpush1.xpose.msra.mxu0 0.0
        %996 = vmatprep.subr.mxu0 0.0
        %997 = vmatpush1.xpose.msra.mxu0 0.0
        %998 = vmatprep.subr.mxu0 0.0
        %999 = vmatpush1.xpose.msra.mxu0 0.0
        %1000 = vmatprep.subr.mxu0 0.0
        %1001 = vmatpush1.xpose.msra.mxu0 0.0
        %1002 = vmatprep.subr.mxu0 0.0
        %1003 = vmatpush1.xpose.msra.mxu0 0.0
        %1004 = vmatprep.subr.mxu0 0.0
        %1005 = vmatpush1.xpose.msra.mxu0 0.0
        %1006 = vmatprep.subr.mxu0 0.0
        %1007 = vmatpush1.xpose.msra.mxu0 0.0
        %1008 = vmatprep.subr.mxu0 0.0
        %1009 = vmatpush1.xpose.msra.mxu0 0.0
        %1010 = vmatprep.subr.mxu0 0.0
        %1011 = vmatpush1.xpose.msra.mxu0 0.0
        %1012 = vmatprep.subr.mxu0 0.0
        %1013 = vmatpush1.xpose.msra.mxu0 0.0
        %1014 = vmatprep.subr.mxu0 0.0
        %1015 = vmatpush1.xpose.msra.mxu0 0.0
        %1016 = vmatprep.subr.mxu0 0.0
        %1017 = vmatpush1.xpose.msra.mxu0 0.0
        %1018 = vmatprep.subr.mxu0 0.0
        %1019 = vmatpush1.xpose.msra.mxu0 0.0
        %1020 = vmatprep.subr.mxu0 0.0
        %1021 = vmatpush1.xpose.msra.mxu0 0.0
        %1022 = vmatprep.subr.mxu0 0.0
        %1023 = vmatpush1.xpose.msra.mxu0 0.0
        %1024 = vmatprep.subr.mxu0 0.0
        %1025 = vmatpush1.xpose.msra.mxu0 0.0
        %1026 = vmatprep.subr.mxu0 0.0
        %1027 = vmatpush1.xpose.msra.mxu0 0.0
        %1028 = vmatprep.subr.mxu0 0.0
        %1029 = vmatpush1.xpose.msra.mxu0 0.0
        %1030 = vmatprep.subr.mxu0 0.0
        %1031 = vmatpush1.xpose.msra.mxu0 0.0
        %1032 = vmatprep.subr.mxu0 0.0
        %1033 = vmatpush1.xpose.msra.mxu0 0.0
        %1034 = vmatprep.subr.mxu0 0.0
        %1035 = vmatpush1.xpose.msra.mxu0 0.0
        %1036 = vmatprep.subr.mxu0 0.0
        %1037 = vmatpush1.xpose.msra.mxu0 0.0
        %1038 = vmatprep.subr.mxu0 0.0
        %1039 = vmatpush1.xpose.msra.mxu0 0.0
        %1040 = vmatprep.subr.mxu0 0.0
        %1041 = vmatpush1.xpose.msra.mxu0 0.0
        %1042 = vmatprep.subr.mxu0 0.0
        %1043 = vmatpush1.xpose.msra.mxu0 0.0
        %1044 = vmatprep.subr.mxu0 0.0
        %1045 = vmatpush1.xpose.msra.mxu0 0.0
        %1046 = vmatprep.subr.mxu0 0.0
        %1047 = vmatpush1.xpose.msra.mxu0 0.0
        %1048 = vmatprep.subr.mxu0 0.0
        %1049 = vmatpush1.xpose.msra.mxu0 0.0
        %1050 = vmatprep.subr.mxu0 0.0
        %1051 = vmatpush1.xpose.msra.mxu0 0.0
        %1052 = vmatprep.subr.mxu0 0.0
        %1053 = vmatpush1.xpose.msra.mxu0 0.0
        %1054 = vmatprep.mubr.f32.mxu0 0.0
        %1055 = vmatmul.mubr.f32.gmra.mrb[0].mxu0 %v986
        %v1056 = vpop.f32.mrb[0].mxu0
        %v1057 = vadd.f32 0.0, %v1056
        %v1058 = vpop.f32.mrb[0].mxu0
        %1059 = vdwg.mxu0
        %v1060 = vmul.f32 %v1057, 0.35355338
        %v1061 = vadd.f32 %v1060, %v892
        %v1062 = vsel %vm812, %v1061, -inf
        %1063 = vmax.xlane.f32.xlu0 %v1062
        %v1064 = vpop.xlane.xlu0 %1063
        %v1065 = vsub.f32 %v1061, %v1064
        %v1066 = vmul.f32 %v1065, 1.442695
        %v1067 = vpow.pop %v1066
        %v1068 = vsel %vm812, %v1067, 0.0
        %1069 = vadd.xlane.f32.xlu0 %v1068
        %v1070 = vpop.xlane.xlu0 %1069
        %v1071 = vrcp.pop %v1070
        %v1072 = vmul.f32 %v1067, %v1071
        %1073 = vrot.lane.b32.xlu0 %v802, 56
        %v1074 = vpop.permute.xlu0 %1073
        %v1077 = vsel %vm812, %v1072, 0
        %1079 = vmatprep.subr.mxu0 0.0
        %1080 = vmatpush1.msra.mxu0 %v1074
        %1081 = vmatprep.subr.mxu0 0.0
        %1082 = vmatpush1.msra.mxu0 0.0
        %1083 = vmatprep.subr.mxu0 0.0
        %1084 = vmatpush1.msra.mxu0 0.0
        %1085 = vmatprep.subr.mxu0 0.0
        %1086 = vmatpush1.msra.mxu0 0.0
        %1087 = vmatprep.subr.mxu0 0.0
        %1088 = vmatpush1.msra.mxu0 0.0
        %1089 = vmatprep.subr.mxu0 0.0
        %1090 = vmatpush1.msra.mxu0 0.0
        %1091 = vmatprep.subr.mxu0 0.0
        %1092 = vmatpush1.msra.mxu0 0.0
        %1093 = vmatprep.subr.mxu0 0.0
        %1094 = vmatpush1.msra.mxu0 0.0
        %1095 = vmatprep.subr.mxu0 0.0
        %1096 = vmatpush1.msra.mxu0 0.0
        %1097 = vmatprep.subr.mxu0 0.0
        %1098 = vmatpush1.msra.mxu0 0.0
        %1099 = vmatprep.subr.mxu0 0.0
        %1100 = vmatpush1.msra.mxu0 0.0
        %1101 = vmatprep.subr.mxu0 0.0
        %1102 = vmatpush1.msra.mxu0 0.0
        %1103 = vmatprep.subr.mxu0 0.0
        %1104 = vmatpush1.msra.mxu0 0.0
        %1105 = vmatprep.subr.mxu0 0.0
        %1106 = vmatpush1.msra.mxu0 0.0
        %1107 = vmatprep.subr.mxu0 0.0
        %1108 = vmatpush1.msra.mxu0 0.0
        %1109 = vmatprep.subr.mxu0 0.0
        %1110 = vmatpush1.msra.mxu0 0.0
        %1111 = vmatprep.subr.mxu0 0.0
        %1112 = vmatpush1.msra.mxu0 0.0
        %1113 = vmatprep.subr.mxu0 0.0
        %1114 = vmatpush1.msra.mxu0 0.0
        %1115 = vmatprep.subr.mxu0 0.0
        %1116 = vmatpush1.msra.mxu0 0.0
        %1117 = vmatprep.subr.mxu0 0.0
        %1118 = vmatpush1.msra.mxu0 0.0
        %1119 = vmatprep.subr.mxu0 0.0
        %1120 = vmatpush1.msra.mxu0 0.0
        %1121 = vmatprep.subr.mxu0 0.0
        %1122 = vmatpush1.msra.mxu0 0.0
        %1123 = vmatprep.subr.mxu0 0.0
        %1124 = vmatpush1.msra.mxu0 0.0
        %1125 = vmatprep.subr.mxu0 0.0
        %1126 = vmatpush1.msra.mxu0 0.0
        %1127 = vmatprep.subr.mxu0 0.0
        %1128 = vmatpush1.msra.mxu0 0.0
        %1129 = vmatprep.subr.mxu0 0.0
        %1130 = vmatpush1.msra.mxu0 0.0
        %1131 = vmatprep.subr.mxu0 0.0
        %1132 = vmatpush1.msra.mxu0 0.0
        %1133 = vmatprep.subr.mxu0 0.0
        %1134 = vmatpush1.msra.mxu0 0.0
        %1135 = vmatprep.subr.mxu0 0.0
        %1136 = vmatpush1.msra.mxu0 0.0
        %1137 = vmatprep.subr.mxu0 0.0
        %1138 = vmatpush1.msra.mxu0 0.0
        %1139 = vmatprep.subr.mxu0 0.0
        %1140 = vmatpush1.msra.mxu0 0.0
        %1141 = vmatprep.subr.mxu0 0.0
        %1142 = vmatpush1.msra.mxu0 0.0
        %1143 = vmatprep.mubr.f32.mxu0 0.0
        %1144 = vmatmul.mubr.f32.gmra.mrb[0].mxu0 %v1077
        %v1145 = vpop.f32.mrb[0].mxu0
        %v1146 = vadd.f32 0.0, %v1145
        %v1147 = vpop.f32.mrb[0].mxu0
        %1148 = vdwg.mxu0
        %v1150 = vsel %vm812, %v1146, 0
        %1152 = vmatprep.subr.mxu0 0.0
        %1153 = vmatpush1.msra.mxu0 %v806
        %1154 = vmatprep.subr.mxu0 0.0
        %1155 = vmatpush1.msra.mxu0 0.0
        %1156 = vmatprep.subr.mxu0 0.0
        %1157 = vmatpush1.msra.mxu0 0.0
        %1158 = vmatprep.subr.mxu0 0.0
        %1159 = vmatpush1.msra.mxu0 0.0
        %1160 = vmatprep.subr.mxu0 0.0
        %1161 = vmatpush1.msra.mxu0 0.0
        %1162 = vmatprep.subr.mxu0 0.0
        %1163 = vmatpush1.msra.mxu0 0.0
        %1164 = vmatprep.subr.mxu0 0.0
        %1165 = vmatpush1.msra.mxu0 0.0
        %1166 = vmatprep.subr.mxu0 0.0
        %1167 = vmatpush1.msra.mxu0 0.0
        %1168 = vmatprep.subr.mxu0 0.0
        %1169 = vmatpush1.msra.mxu0 0.0
        %1170 = vmatprep.subr.mxu0 0.0
        %1171 = vmatpush1.msra.mxu0 0.0
        %1172 = vmatprep.subr.mxu0 0.0
        %1173 = vmatpush1.msra.mxu0 0.0
        %1174 = vmatprep.subr.mxu0 0.0
        %1175 = vmatpush1.msra.mxu0 0.0
        %1176 = vmatprep.subr.mxu0 0.0
        %1177 = vmatpush1.msra.mxu0 0.0
        %1178 = vmatprep.subr.mxu0 0.0
        %1179 = vmatpush1.msra.mxu0 0.0
        %1180 = vmatprep.subr.mxu0 0.0
        %1181 = vmatpush1.msra.mxu0 0.0
        %1182 = vmatprep.subr.mxu0 0.0
        %1183 = vmatpush1.msra.mxu0 0.0
        %1184 = vmatprep.subr.mxu0 0.0
        %1185 = vmatpush1.msra.mxu0 0.0
        %1186 = vmatprep.subr.mxu0 0.0
        %1187 = vmatpush1.msra.mxu0 0.0
        %1188 = vmatprep.subr.mxu0 0.0
        %1189 = vmatpush1.msra.mxu0 0.0
        %1190 = vmatprep.subr.mxu0 0.0
        %1191 = vmatpush1.msra.mxu0 0.0
        %1192 = vmatprep.subr.mxu0 0.0
        %1193 = vmatpush1.msra.mxu0 0.0
        %1194 = vmatprep.subr.mxu0 0.0
        %1195 = vmatpush1.msra.mxu0 0.0
        %1196 = vmatprep.subr.mxu0 0.0
        %1197 = vmatpush1.msra.mxu0 0.0
        %1198 = vmatprep.subr.mxu0 0.0
        %1199 = vmatpush1.msra.mxu0 0.0
        %1200 = vmatprep.subr.mxu0 0.0
        %1201 = vmatpush1.msra.mxu0 0.0
        %1202 = vmatprep.subr.mxu0 0.0
        %1203 = vmatpush1.msra.mxu0 0.0
        %1204 = vmatprep.subr.mxu0 0.0
        %1205 = vmatpush1.msra.mxu0 0.0
        %1206 = vmatprep.subr.mxu0 0.0
        %1207 = vmatpush1.msra.mxu0 0.0
        %1208 = vmatprep.subr.mxu0 0.0
        %1209 = vmatpush1.msra.mxu0 0.0
        %1210 = vmatprep.subr.mxu0 0.0
        %1211 = vmatpush1.msra.mxu0 0.0
        %1212 = vmatprep.subr.mxu0 0.0
        %1213 = vmatpush1.msra.mxu0 0.0
        %1214 = vmatprep.subr.mxu0 0.0
        %1215 = vmatpush1.msra.mxu0 0.0
        %1216 = vmatprep.mubr.f32.mxu0 0.0
        %1217 = vmatmul.mubr.f32.gmra.mrb[0].mxu0 %v1150
        %v1218 = vpop.f32.mrb[0].mxu0
        %v1219 = vadd.f32 0.0, %v1218
        %v1220 = vpop.f32.mrb[0].mxu0
        %1221 = vdwg.mxu0
        %v1223 = vsel %vm812, %v979, 0
        %1225 = vmatprep.subr.mxu0 0.0
        %1226 = vmatpush1.msra.mxu0 %v805
        %1227 = vmatprep.subr.mxu0 0.0
        %1228 = vmatpush1.msra.mxu0 0.0
        %1229 = vmatprep.subr.mxu0 0.0
        %1230 = vmatpush1.msra.mxu0 0.0
        %1231 = vmatprep.subr.mxu0 0.0
        %1232 = vmatpush1.msra.mxu0 0.0
        %1233 = vmatprep.subr.mxu0 0.0
        %1234 = vmatpush1.msra.mxu0 0.0
        %1235 = vmatprep.subr.mxu0 0.0
        %1236 = vmatpush1.msra.mxu0 0.0
        %1237 = vmatprep.subr.mxu0 0.0
        %1238 = vmatpush1.msra.mxu0 0.0
        %1239 = vmatprep.subr.mxu0 0.0
        %1240 = vmatpush1.msra.mxu0 0.0
        %1241 = vmatprep.subr.mxu0 0.0
        %1242 = vmatpush1.msra.mxu0 0.0
        %1243 = vmatprep.subr.mxu0 0.0
        %1244 = vmatpush1.msra.mxu0 0.0
        %1245 = vmatprep.subr.mxu0 0.0
        %1246 = vmatpush1.msra.mxu0 0.0
        %1247 = vmatprep.subr.mxu0 0.0
        %1248 = vmatpush1.msra.mxu0 0.0
        %1249 = vmatprep.subr.mxu0 0.0
        %1250 = vmatpush1.msra.mxu0 0.0
        %1251 = vmatprep.subr.mxu0 0.0
        %1252 = vmatpush1.msra.mxu0 0.0
        %1253 = vmatprep.subr.mxu0 0.0
        %1254 = vmatpush1.msra.mxu0 0.0
        %1255 = vmatprep.subr.mxu0 0.0
        %1256 = vmatpush1.msra.mxu0 0.0
        %1257 = vmatprep.subr.mxu0 0.0
        %1258 = vmatpush1.msra.mxu0 0.0
        %1259 = vmatprep.subr.mxu0 0.0
        %1260 = vmatpush1.msra.mxu0 0.0
        %1261 = vmatprep.subr.mxu0 0.0
        %1262 = vmatpush1.msra.mxu0 0.0
        %1263 = vmatprep.subr.mxu0 0.0
        %1264 = vmatpush1.msra.mxu0 0.0
        %1265 = vmatprep.subr.mxu0 0.0
        %1266 = vmatpush1.msra.mxu0 0.0
        %1267 = vmatprep.subr.mxu0 0.0
        %1268 = vmatpush1.msra.mxu0 0.0
        %1269 = vmatprep.subr.mxu0 0.0
        %1270 = vmatpush1.msra.mxu0 0.0
        %1271 = vmatprep.subr.mxu0 0.0
        %1272 = vmatpush1.msra.mxu0 0.0
        %1273 = vmatprep.subr.mxu0 0.0
        %1274 = vmatpush1.msra.mxu0 0.0
        %1275 = vmatprep.subr.mxu0 0.0
        %1276 = vmatpush1.msra.mxu0 0.0
        %1277 = vmatprep.subr.mxu0 0.0
        %1278 = vmatpush1.msra.mxu0 0.0
        %1279 = vmatprep.subr.mxu0 0.0
        %1280 = vmatpush1.msra.mxu0 0.0
        %1281 = vmatprep.subr.mxu0 0.0
        %1282 = vmatpush1.msra.mxu0 0.0
        %1283 = vmatprep.subr.mxu0 0.0
        %1284 = vmatpush1.msra.mxu0 0.0
        %1285 = vmatprep.subr.mxu0 0.0
        %1286 = vmatpush1.msra.mxu0 0.0
        %1287 = vmatprep.subr.mxu0 0.0
        %1288 = vmatpush1.msra.mxu0 0.0
        %1289 = vmatprep.mubr.f32.mxu0 0.0
        %1290 = vmatmul.mubr.f32.gmra.mrb[0].mxu0 %v1223
        %v1291 = vpop.f32.mrb[0].mxu0
        %v1292 = vadd.f32 %v1219, %v1291
        %v1293 = vpop.f32.mrb[0].mxu0
        %1294 = vdwg.mxu0
        %1295 = vrot.lane.b32.xlu0 %v802, 112
        %v1296 = vpop.permute.xlu0 %1295
        %1297 = vrot.lane.b32.xlu0 %v802, 80
        %v1298 = vpop.permute.xlu0 %1297
        %v1299 = vsel %vm812, %v1296, 0
        %v1301 = vsel %vm812, %v1298, 0
        %1303 = vmatprep.subr.mxu0 0.0
        %1304 = vmatpush1.xpose.msra.mxu0 %v1301
        %1305 = vmatprep.subr.mxu0 0.0
        %1306 = vmatpush1.xpose.msra.mxu0 0.0
        %1307 = vmatprep.subr.mxu0 0.0
        %1308 = vmatpush1.xpose.msra.mxu0 0.0
        %1309 = vmatprep.subr.mxu0 0.0
        %1310 = vmatpush1.xpose.msra.mxu0 0.0
        %1311 = vmatprep.subr.mxu0 0.0
        %1312 = vmatpush1.xpose.msra.mxu0 0.0
        %1313 = vmatprep.subr.mxu0 0.0
        %1314 = vmatpush1.xpose.msra.mxu0 0.0
        %1315 = vmatprep.subr.mxu0 0.0
        %1316 = vmatpush1.xpose.msra.mxu0 0.0
        %1317 = vmatprep.subr.mxu0 0.0
        %1318 = vmatpush1.xpose.msra.mxu0 0.0
        %1319 = vmatprep.subr.mxu0 0.0
        %1320 = vmatpush1.xpose.msra.mxu0 0.0
        %1321 = vmatprep.subr.mxu0 0.0
        %1322 = vmatpush1.xpose.msra.mxu0 0.0
        %1323 = vmatprep.subr.mxu0 0.0
        %1324 = vmatpush1.xpose.msra.mxu0 0.0
        %1325 = vmatprep.subr.mxu0 0.0
        %1326 = vmatpush1.xpose.msra.mxu0 0.0
        %1327 = vmatprep.subr.mxu0 0.0
        %1328 = vmatpush1.xpose.msra.mxu0 0.0
        %1329 = vmatprep.subr.mxu0 0.0
        %1330 = vmatpush1.xpose.msra.mxu0 0.0
        %1331 = vmatprep.subr.mxu0 0.0
        %1332 = vmatpush1.xpose.msra.mxu0 0.0
        %1333 = vmatprep.subr.mxu0 0.0
        %1334 = vmatpush1.xpose.msra.mxu0 0.0
        %1335 = vmatprep.subr.mxu0 0.0
        %1336 = vmatpush1.xpose.msra.mxu0 0.0
        %1337 = vmatprep.subr.mxu0 0.0
        %1338 = vmatpush1.xpose.msra.mxu0 0.0
        %1339 = vmatprep.subr.mxu0 0.0
        %1340 = vmatpush1.xpose.msra.mxu0 0.0
        %1341 = vmatprep.subr.mxu0 0.0
        %1342 = vmatpush1.xpose.msra.mxu0 0.0
        %1343 = vmatprep.subr.mxu0 0.0
        %1344 = vmatpush1.xpose.msra.mxu0 0.0
        %1345 = vmatprep.subr.mxu0 0.0
        %1346 = vmatpush1.xpose.msra.mxu0 0.0
        %1347 = vmatprep.subr.mxu0 0.0
        %1348 = vmatpush1.xpose.msra.mxu0 0.0
        %1349 = vmatprep.subr.mxu0 0.0
        %1350 = vmatpush1.xpose.msra.mxu0 0.0
        %1351 = vmatprep.subr.mxu0 0.0
        %1352 = vmatpush1.xpose.msra.mxu0 0.0
        %1353 = vmatprep.subr.mxu0 0.0
        %1354 = vmatpush1.xpose.msra.mxu0 0.0
        %1355 = vmatprep.subr.mxu0 0.0
        %1356 = vmatpush1.xpose.msra.mxu0 0.0
        %1357 = vmatprep.subr.mxu0 0.0
        %1358 = vmatpush1.xpose.msra.mxu0 0.0
        %1359 = vmatprep.subr.mxu0 0.0
        %1360 = vmatpush1.xpose.msra.mxu0 0.0
        %1361 = vmatprep.subr.mxu0 0.0
        %1362 = vmatpush1.xpose.msra.mxu0 0.0
        %1363 = vmatprep.subr.mxu0 0.0
        %1364 = vmatpush1.xpose.msra.mxu0 0.0
        %1365 = vmatprep.subr.mxu0 0.0
        %1366 = vmatpush1.xpose.msra.mxu0 0.0
        %1367 = vmatprep.mubr.f32.mxu0 0.0
        %1368 = vmatmul.mubr.f32.gmra.mrb[0].mxu0 %v1299
        %v1369 = vpop.f32.mrb[0].mxu0
        %v1370 = vadd.f32 0.0, %v1369
        %v1371 = vpop.f32.mrb[0].mxu0
        %1372 = vdwg.mxu0
        %v1373 = vmul.f32 %v1370, 0.35355338
        %v1374 = vadd.f32 %v1373, %v892
        %v1375 = vsel %vm812, %v1374, -inf
        %1376 = vmax.xlane.f32.xlu0 %v1375
        %v1377 = vpop.xlane.xlu0 %1376
        %v1378 = vsub.f32 %v1374, %v1377
        %v1379 = vmul.f32 %v1378, 1.442695
        %v1380 = vpow.pop %v1379
        %v1381 = vsel %vm812, %v1380, 0.0
        %1382 = vadd.xlane.f32.xlu0 %v1381
        %v1383 = vpop.xlane.xlu0 %1382
        %v1384 = vrcp.pop %v1383
        %v1385 = vmul.f32 %v1380, %v1384
        %1386 = vrot.lane.b32.xlu0 %v802, 48
        %v1387 = vpop.permute.xlu0 %1386
        %v1390 = vsel %vm812, %v1385, 0
        %1392 = vmatprep.subr.mxu0 0.0
        %1393 = vmatpush1.msra.mxu0 %v1387
        %1394 = vmatprep.subr.mxu0 0.0
        %1395 = vmatpush1.msra.mxu0 0.0
        %1396 = vmatprep.subr.mxu0 0.0
        %1397 = vmatpush1.msra.mxu0 0.0
        %1398 = vmatprep.subr.mxu0 0.0
        %1399 = vmatpush1.msra.mxu0 0.0
        %1400 = vmatprep.subr.mxu0 0.0
        %1401 = vmatpush1.msra.mxu0 0.0
        %1402 = vmatprep.subr.mxu0 0.0
        %1403 = vmatpush1.msra.mxu0 0.0
        %1404 = vmatprep.subr.mxu0 0.0
        %1405 = vmatpush1.msra.mxu0 0.0
        %1406 = vmatprep.subr.mxu0 0.0
        %1407 = vmatpush1.msra.mxu0 0.0
        %1408 = vmatprep.subr.mxu0 0.0
        %1409 = vmatpush1.msra.mxu0 0.0
        %1410 = vmatprep.subr.mxu0 0.0
        %1411 = vmatpush1.msra.mxu0 0.0
        %1412 = vmatprep.subr.mxu0 0.0
        %1413 = vmatpush1.msra.mxu0 0.0
        %1414 = vmatprep.subr.mxu0 0.0
        %1415 = vmatpush1.msra.mxu0 0.0
        %1416 = vmatprep.subr.mxu0 0.0
        %1417 = vmatpush1.msra.mxu0 0.0
        %1418 = vmatprep.subr.mxu0 0.0
        %1419 = vmatpush1.msra.mxu0 0.0
        %1420 = vmatprep.subr.mxu0 0.0
        %1421 = vmatpush1.msra.mxu0 0.0
        %1422 = vmatprep.subr.mxu0 0.0
        %1423 = vmatpush1.msra.mxu0 0.0
        %1424 = vmatprep.subr.mxu0 0.0
        %1425 = vmatpush1.msra.mxu0 0.0
        %1426 = vmatprep.subr.mxu0 0.0
        %1427 = vmatpush1.msra.mxu0 0.0
        %1428 = vmatprep.subr.mxu0 0.0
        %1429 = vmatpush1.msra.mxu0 0.0
        %1430 = vmatprep.subr.mxu0 0.0
        %1431 = vmatpush1.msra.mxu0 0.0
        %1432 = vmatprep.subr.mxu0 0.0
        %1433 = vmatpush1.msra.mxu0 0.0
        %1434 = vmatprep.subr.mxu0 0.0
        %1435 = vmatpush1.msra.mxu0 0.0
        %1436 = vmatprep.subr.mxu0 0.0
        %1437 = vmatpush1.msra.mxu0 0.0
        %1438 = vmatprep.subr.mxu0 0.0
        %1439 = vmatpush1.msra.mxu0 0.0
        %1440 = vmatprep.subr.mxu0 0.0
        %1441 = vmatpush1.msra.mxu0 0.0
        %1442 = vmatprep.subr.mxu0 0.0
        %1443 = vmatpush1.msra.mxu0 0.0
        %1444 = vmatprep.subr.mxu0 0.0
        %1445 = vmatpush1.msra.mxu0 0.0
        %1446 = vmatprep.subr.mxu0 0.0
        %1447 = vmatpush1.msra.mxu0 0.0
        %1448 = vmatprep.subr.mxu0 0.0
        %1449 = vmatpush1.msra.mxu0 0.0
        %1450 = vmatprep.subr.mxu0 0.0
        %1451 = vmatpush1.msra.mxu0 0.0
        %1452 = vmatprep.subr.mxu0 0.0
        %1453 = vmatpush1.msra.mxu0 0.0
        %1454 = vmatprep.subr.mxu0 0.0
        %1455 = vmatpush1.msra.mxu0 0.0
        %1456 = vmatprep.mubr.f32.mxu0 0.0
        %1457 = vmatmul.mubr.f32.gmra.mrb[0].mxu0 %v1390
        %v1458 = vpop.f32.mrb[0].mxu0
        %v1459 = vadd.f32 0.0, %v1458
        %v1460 = vpop.f32.mrb[0].mxu0
        %1461 = vdwg.mxu0
        %v1463 = vsel %vm812, %v1459, 0
        %1465 = vmatprep.subr.mxu0 0.0
        %1466 = vmatpush1.msra.mxu0 %v807
        %1467 = vmatprep.subr.mxu0 0.0
        %1468 = vmatpush1.msra.mxu0 0.0
        %1469 = vmatprep.subr.mxu0 0.0
        %1470 = vmatpush1.msra.mxu0 0.0
        %1471 = vmatprep.subr.mxu0 0.0
        %1472 = vmatpush1.msra.mxu0 0.0
        %1473 = vmatprep.subr.mxu0 0.0
        %1474 = vmatpush1.msra.mxu0 0.0
        %1475 = vmatprep.subr.mxu0 0.0
        %1476 = vmatpush1.msra.mxu0 0.0
        %1477 = vmatprep.subr.mxu0 0.0
        %1478 = vmatpush1.msra.mxu0 0.0
        %1479 = vmatprep.subr.mxu0 0.0
        %1480 = vmatpush1.msra.mxu0 0.0
        %1481 = vmatprep.subr.mxu0 0.0
        %1482 = vmatpush1.msra.mxu0 0.0
        %1483 = vmatprep.subr.mxu0 0.0
        %1484 = vmatpush1.msra.mxu0 0.0
        %1485 = vmatprep.subr.mxu0 0.0
        %1486 = vmatpush1.msra.mxu0 0.0
        %1487 = vmatprep.subr.mxu0 0.0
        %1488 = vmatpush1.msra.mxu0 0.0
        %1489 = vmatprep.subr.mxu0 0.0
        %1490 = vmatpush1.msra.mxu0 0.0
        %1491 = vmatprep.subr.mxu0 0.0
        %1492 = vmatpush1.msra.mxu0 0.0
        %1493 = vmatprep.subr.mxu0 0.0
        %1494 = vmatpush1.msra.mxu0 0.0
        %1495 = vmatprep.subr.mxu0 0.0
        %1496 = vmatpush1.msra.mxu0 0.0
        %1497 = vmatprep.subr.mxu0 0.0
        %1498 = vmatpush1.msra.mxu0 0.0
        %1499 = vmatprep.subr.mxu0 0.0
        %1500 = vmatpush1.msra.mxu0 0.0
        %1501 = vmatprep.subr.mxu0 0.0
        %1502 = vmatpush1.msra.mxu0 0.0
        %1503 = vmatprep.subr.mxu0 0.0
        %1504 = vmatpush1.msra.mxu0 0.0
        %1505 = vmatprep.subr.mxu0 0.0
        %1506 = vmatpush1.msra.mxu0 0.0
        %1507 = vmatprep.subr.mxu0 0.0
        %1508 = vmatpush1.msra.mxu0 0.0
        %1509 = vmatprep.subr.mxu0 0.0
        %1510 = vmatpush1.msra.mxu0 0.0
        %1511 = vmatprep.subr.mxu0 0.0
        %1512 = vmatpush1.msra.mxu0 0.0
        %1513 = vmatprep.subr.mxu0 0.0
        %1514 = vmatpush1.msra.mxu0 0.0
        %1515 = vmatprep.subr.mxu0 0.0
        %1516 = vmatpush1.msra.mxu0 0.0
        %1517 = vmatprep.subr.mxu0 0.0
        %1518 = vmatpush1.msra.mxu0 0.0
        %1519 = vmatprep.subr.mxu0 0.0
        %1520 = vmatpush1.msra.mxu0 0.0
        %1521 = vmatprep.subr.mxu0 0.0
        %1522 = vmatpush1.msra.mxu0 0.0
        %1523 = vmatprep.subr.mxu0 0.0
        %1524 = vmatpush1.msra.mxu0 0.0
        %1525 = vmatprep.subr.mxu0 0.0
        %1526 = vmatpush1.msra.mxu0 0.0
        %1527 = vmatprep.subr.mxu0 0.0
        %1528 = vmatpush1.msra.mxu0 0.0
        %1529 = vmatprep.mubr.f32.mxu0 0.0
        %1530 = vmatmul.mubr.f32.gmra.mrb[0].mxu0 %v1463
        %v1531 = vpop.f32.mrb[0].mxu0
        %v1532 = vadd.f32 0.0, %v1531
        %v1533 = vpop.f32.mrb[0].mxu0
        %1534 = vdwg.mxu0
        %v1535 = vadd.f32 %v1292, %v1532
        %1536 = vrot.lane.b32.xlu0 %v802, 104
        %v1537 = vpop.permute.xlu0 %1536
        %1538 = vrot.lane.b32.xlu0 %v802, 72
        %v1539 = vpop.permute.xlu0 %1538
        %v1540 = vsel %vm812, %v1537, 0
        %v1542 = vsel %vm812, %v1539, 0
        %1544 = vmatprep.subr.mxu0 0.0
        %1545 = vmatpush1.xpose.msra.mxu0 %v1542
        %1546 = vmatprep.subr.mxu0 0.0
        %1547 = vmatpush1.xpose.msra.mxu0 0.0
        %1548 = vmatprep.subr.mxu0 0.0
        %1549 = vmatpush1.xpose.msra.mxu0 0.0
        %1550 = vmatprep.subr.mxu0 0.0
        %1551 = vmatpush1.xpose.msra.mxu0 0.0
        %1552 = vmatprep.subr.mxu0 0.0
        %1553 = vmatpush1.xpose.msra.mxu0 0.0
        %1554 = vmatprep.subr.mxu0 0.0
        %1555 = vmatpush1.xpose.msra.mxu0 0.0
        %1556 = vmatprep.subr.mxu0 0.0
        %1557 = vmatpush1.xpose.msra.mxu0 0.0
        %1558 = vmatprep.subr.mxu0 0.0
        %1559 = vmatpush1.xpose.msra.mxu0 0.0
        %1560 = vmatprep.subr.mxu0 0.0
        %1561 = vmatpush1.xpose.msra.mxu0 0.0
        %1562 = vmatprep.subr.mxu0 0.0
        %1563 = vmatpush1.xpose.msra.mxu0 0.0
        %1564 = vmatprep.subr.mxu0 0.0
        %1565 = vmatpush1.xpose.msra.mxu0 0.0
        %1566 = vmatprep.subr.mxu0 0.0
        %1567 = vmatpush1.xpose.msra.mxu0 0.0
        %1568 = vmatprep.subr.mxu0 0.0
        %1569 = vmatpush1.xpose.msra.mxu0 0.0
        %1570 = vmatprep.subr.mxu0 0.0
        %1571 = vmatpush1.xpose.msra.mxu0 0.0
        %1572 = vmatprep.subr.mxu0 0.0
        %1573 = vmatpush1.xpose.msra.mxu0 0.0
        %1574 = vmatprep.subr.mxu0 0.0
        %1575 = vmatpush1.xpose.msra.mxu0 0.0
        %1576 = vmatprep.subr.mxu0 0.0
        %1577 = vmatpush1.xpose.msra.mxu0 0.0
        %1578 = vmatprep.subr.mxu0 0.0
        %1579 = vmatpush1.xpose.msra.mxu0 0.0
        %1580 = vmatprep.subr.mxu0 0.0
        %1581 = vmatpush1.xpose.msra.mxu0 0.0
        %1582 = vmatprep.subr.mxu0 0.0
        %1583 = vmatpush1.xpose.msra.mxu0 0.0
        %1584 = vmatprep.subr.mxu0 0.0
        %1585 = vmatpush1.xpose.msra.mxu0 0.0
        %1586 = vmatprep.subr.mxu0 0.0
        %1587 = vmatpush1.xpose.msra.mxu0 0.0
        %1588 = vmatprep.subr.mxu0 0.0
        %1589 = vmatpush1.xpose.msra.mxu0 0.0
        %1590 = vmatprep.subr.mxu0 0.0
        %1591 = vmatpush1.xpose.msra.mxu0 0.0
        %1592 = vmatprep.subr.mxu0 0.0
        %1593 = vmatpush1.xpose.msra.mxu0 0.0
        %1594 = vmatprep.subr.mxu0 0.0
        %1595 = vmatpush1.xpose.msra.mxu0 0.0
        %1596 = vmatprep.subr.mxu0 0.0
        %1597 = vmatpush1.xpose.msra.mxu0 0.0
        %1598 = vmatprep.subr.mxu0 0.0
        %1599 = vmatpush1.xpose.msra.mxu0 0.0
        %1600 = vmatprep.subr.mxu0 0.0
        %1601 = vmatpush1.xpose.msra.mxu0 0.0
        %1602 = vmatprep.subr.mxu0 0.0
        %1603 = vmatpush1.xpose.msra.mxu0 0.0
        %1604 = vmatprep.subr.mxu0 0.0
        %1605 = vmatpush1.xpose.msra.mxu0 0.0
        %1606 = vmatprep.subr.mxu0 0.0
        %1607 = vmatpush1.xpose.msra.mxu0 0.0
        %1608 = vmatprep.mubr.f32.mxu0 0.0
        %1609 = vmatmul.mubr.f32.gmra.mrb[0].mxu0 %v1540
        %v1610 = vpop.f32.mrb[0].mxu0
        %v1611 = vadd.f32 0.0, %v1610
        %v1612 = vpop.f32.mrb[0].mxu0
        %1613 = vdwg.mxu0
        %v1614 = vmul.f32 %v1611, 0.35355338
        %v1615 = vadd.f32 %v1614, %v892
        %v1616 = vsel %vm812, %v1615, -inf
        %1617 = vmax.xlane.f32.xlu0 %v1616
        %v1618 = vpop.xlane.xlu0 %1617
        %v1619 = vsub.f32 %v1615, %v1618
        %v1620 = vmul.f32 %v1619, 1.442695
        %v1621 = vpow.pop %v1620
        %v1622 = vsel %vm812, %v1621, 0.0
        %1623 = vadd.xlane.f32.xlu0 %v1622
        %v1624 = vpop.xlane.xlu0 %1623
        %v1625 = vrcp.pop %v1624
        %v1626 = vmul.f32 %v1621, %v1625
        %1627 = vrot.lane.b32.xlu0 %v802, 40
        %v1628 = vpop.permute.xlu0 %1627
        %v1631 = vsel %vm812, %v1626, 0
        %1633 = vmatprep.subr.mxu0 0.0
        %1634 = vmatpush1.msra.mxu0 %v1628
        %1635 = vmatprep.subr.mxu0 0.0
        %1636 = vmatpush1.msra.mxu0 0.0
        %1637 = vmatprep.subr.mxu0 0.0
        %1638 = vmatpush1.msra.mxu0 0.0
        %1639 = vmatprep.subr.mxu0 0.0
        %1640 = vmatpush1.msra.mxu0 0.0
        %1641 = vmatprep.subr.mxu0 0.0
        %1642 = vmatpush1.msra.mxu0 0.0
        %1643 = vmatprep.subr.mxu0 0.0
        %1644 = vmatpush1.msra.mxu0 0.0
        %1645 = vmatprep.subr.mxu0 0.0
        %1646 = vmatpush1.msra.mxu0 0.0
        %1647 = vmatprep.subr.mxu0 0.0
        %1648 = vmatpush1.msra.mxu0 0.0
        %1649 = vmatprep.subr.mxu0 0.0
        %1650 = vmatpush1.msra.mxu0 0.0
        %1651 = vmatprep.subr.mxu0 0.0
        %1652 = vmatpush1.msra.mxu0 0.0
        %1653 = vmatprep.subr.mxu0 0.0
        %1654 = vmatpush1.msra.mxu0 0.0
        %1655 = vmatprep.subr.mxu0 0.0
        %1656 = vmatpush1.msra.mxu0 0.0
        %1657 = vmatprep.subr.mxu0 0.0
        %1658 = vmatpush1.msra.mxu0 0.0
        %1659 = vmatprep.subr.mxu0 0.0
        %1660 = vmatpush1.msra.mxu0 0.0
        %1661 = vmatprep.subr.mxu0 0.0
        %1662 = vmatpush1.msra.mxu0 0.0
        %1663 = vmatprep.subr.mxu0 0.0
        %1664 = vmatpush1.msra.mxu0 0.0
        %1665 = vmatprep.subr.mxu0 0.0
        %1666 = vmatpush1.msra.mxu0 0.0
        %1667 = vmatprep.subr.mxu0 0.0
        %1668 = vmatpush1.msra.mxu0 0.0
        %1669 = vmatprep.subr.mxu0 0.0
        %1670 = vmatpush1.msra.mxu0 0.0
        %1671 = vmatprep.subr.mxu0 0.0
        %1672 = vmatpush1.msra.mxu0 0.0
        %1673 = vmatprep.subr.mxu0 0.0
        %1674 = vmatpush1.msra.mxu0 0.0
        %1675 = vmatprep.subr.mxu0 0.0
        %1676 = vmatpush1.msra.mxu0 0.0
        %1677 = vmatprep.subr.mxu0 0.0
        %1678 = vmatpush1.msra.mxu0 0.0
        %1679 = vmatprep.subr.mxu0 0.0
        %1680 = vmatpush1.msra.mxu0 0.0
        %1681 = vmatprep.subr.mxu0 0.0
        %1682 = vmatpush1.msra.mxu0 0.0
        %1683 = vmatprep.subr.mxu0 0.0
        %1684 = vmatpush1.msra.mxu0 0.0
        %1685 = vmatprep.subr.mxu0 0.0
        %1686 = vmatpush1.msra.mxu0 0.0
        %1687 = vmatprep.subr.mxu0 0.0
        %1688 = vmatpush1.msra.mxu0 0.0
        %1689 = vmatprep.subr.mxu0 0.0
        %1690 = vmatpush1.msra.mxu0 0.0
        %1691 = vmatprep.subr.mxu0 0.0
        %1692 = vmatpush1.msra.mxu0 0.0
        %1693 = vmatprep.subr.mxu0 0.0
        %1694 = vmatpush1.msra.mxu0 0.0
        %1695 = vmatprep.subr.mxu0 0.0
        %1696 = vmatpush1.msra.mxu0 0.0
        %1697 = vmatprep.mubr.f32.mxu0 0.0
        %1698 = vmatmul.mubr.f32.gmra.mrb[0].mxu0 %v1631
        %v1699 = vpop.f32.mrb[0].mxu0
        %v1700 = vadd.f32 0.0, %v1699
        %v1701 = vpop.f32.mrb[0].mxu0
        %1702 = vdwg.mxu0
        %v1704 = vsel %vm812, %v1700, 0
        %1706 = vmatprep.subr.mxu0 0.0
        %1707 = vmatpush1.msra.mxu0 %v808
        %1708 = vmatprep.subr.mxu0 0.0
        %1709 = vmatpush1.msra.mxu0 0.0
        %1710 = vmatprep.subr.mxu0 0.0
        %1711 = vmatpush1.msra.mxu0 0.0
        %1712 = vmatprep.subr.mxu0 0.0
        %1713 = vmatpush1.msra.mxu0 0.0
        %1714 = vmatprep.subr.mxu0 0.0
        %1715 = vmatpush1.msra.mxu0 0.0
        %1716 = vmatprep.subr.mxu0 0.0
        %1717 = vmatpush1.msra.mxu0 0.0
        %1718 = vmatprep.subr.mxu0 0.0
        %1719 = vmatpush1.msra.mxu0 0.0
        %1720 = vmatprep.subr.mxu0 0.0
        %1721 = vmatpush1.msra.mxu0 0.0
        %1722 = vmatprep.subr.mxu0 0.0
        %1723 = vmatpush1.msra.mxu0 0.0
        %1724 = vmatprep.subr.mxu0 0.0
        %1725 = vmatpush1.msra.mxu0 0.0
        %1726 = vmatprep.subr.mxu0 0.0
        %1727 = vmatpush1.msra.mxu0 0.0
        %1728 = vmatprep.subr.mxu0 0.0
        %1729 = vmatpush1.msra.mxu0 0.0
        %1730 = vmatprep.subr.mxu0 0.0
        %1731 = vmatpush1.msra.mxu0 0.0
        %1732 = vmatprep.subr.mxu0 0.0
        %1733 = vmatpush1.msra.mxu0 0.0
        %1734 = vmatprep.subr.mxu0 0.0
        %1735 = vmatpush1.msra.mxu0 0.0
        %1736 = vmatprep.subr.mxu0 0.0
        %1737 = vmatpush1.msra.mxu0 0.0
        %1738 = vmatprep.subr.mxu0 0.0
        %1739 = vmatpush1.msra.mxu0 0.0
        %1740 = vmatprep.subr.mxu0 0.0
        %1741 = vmatpush1.msra.mxu0 0.0
        %1742 = vmatprep.subr.mxu0 0.0
        %1743 = vmatpush1.msra.mxu0 0.0
        %1744 = vmatprep.subr.mxu0 0.0
        %1745 = vmatpush1.msra.mxu0 0.0
        %1746 = vmatprep.subr.mxu0 0.0
        %1747 = vmatpush1.msra.mxu0 0.0
        %1748 = vmatprep.subr.mxu0 0.0
        %1749 = vmatpush1.msra.mxu0 0.0
        %1750 = vmatprep.subr.mxu0 0.0
        %1751 = vmatpush1.msra.mxu0 0.0
        %1752 = vmatprep.subr.mxu0 0.0
        %1753 = vmatpush1.msra.mxu0 0.0
        %1754 = vmatprep.subr.mxu0 0.0
        %1755 = vmatpush1.msra.mxu0 0.0
        %1756 = vmatprep.subr.mxu0 0.0
        %1757 = vmatpush1.msra.mxu0 0.0
        %1758 = vmatprep.subr.mxu0 0.0
        %1759 = vmatpush1.msra.mxu0 0.0
        %1760 = vmatprep.subr.mxu0 0.0
        %1761 = vmatpush1.msra.mxu0 0.0
        %1762 = vmatprep.subr.mxu0 0.0
        %1763 = vmatpush1.msra.mxu0 0.0
        %1764 = vmatprep.subr.mxu0 0.0
        %1765 = vmatpush1.msra.mxu0 0.0
        %1766 = vmatprep.subr.mxu0 0.0
        %1767 = vmatpush1.msra.mxu0 0.0
        %1768 = vmatprep.subr.mxu0 0.0
        %1769 = vmatpush1.msra.mxu0 0.0
        %1770 = vmatprep.mubr.f32.mxu0 0.0
        %1771 = vmatmul.mubr.f32.gmra.mrb[0].mxu0 %v1704
        %v1772 = vpop.f32.mrb[0].mxu0
        %v1773 = vadd.f32 0.0, %v1772
        %v1774 = vpop.f32.mrb[0].mxu0
        %1775 = vdwg.mxu0
        %v1776 = vadd.f32 %v1535, %v1773
        %v1777 = vld [vmem:[#allocation10] sm:$0x1]
        %v1779 = vlaneseq
        %v1780 = vshrl.u32 %v1779, 7
        %v1781 = vsub.s32 0, %v1780
        %v1782 = vrot.slane %v1777, %v1781
        %v1784 = vadd.f32 %v1776, %v1782
        %v1785 = vadd.f32 %v719, %v1784
        %v1786 = vld [vmem:[#allocation11] sm:$0x1]
        %v1787 = vld [vmem:[#allocation13] sm:$0x1]
        %v1788 = vsel %vm691, %v1785, 0.0
        %1789 = vadd.xlane.f32.xlu0 %v1788
        %v1790 = vpop.xlane.xlu0 %1789
        %v1791 = vmul.f32 %v1790, %v695
        %v1792 = vsub.f32 %v1785, %v1791
        %v1793 = vmul.f32 %v1792, %v1792
        %v1794 = vsel %vm691, %v1793, 0.0
        %1795 = vadd.xlane.f32.xlu0 %v1794
        %v1796 = vpop.xlane.xlu0 %1795
        %v1797 = vmul.f32 %v1796, %v695
        %v1798 = vadd.f32 %v1797, 1e-12
        %v1799 = vrsqrt.pop %v1798
        %v1800 = vmul.f32 %v1792, %v1799
        %v1802 = vlaneseq
        %v1803 = vshrl.u32 %v1802, 7
        %v1804 = vsub.s32 0, %v1803
        %v1805 = vrot.slane %v1786, %v1804
        %v1807 = vmul.f32 %v1800, %v1805
        %v1809 = vlaneseq
        %v1810 = vshrl.u32 %v1809, 7
        %v1811 = vsub.s32 0, %v1810
        %v1812 = vrot.slane %v1787, %v1811
        %v1814 = vadd.f32 %v1807, %v1812
        %v1815 = vld [vmem:[%s10] sm:$0xff]
        %v1816 = vld [vmem:[%s10 + $0x8] sm:$0xff]
        %v1817 = vld [vmem:[%s10 + $0x10] sm:$0xff]
        %v1818 = vld [vmem:[%s10 + $0x18] sm:$0xff]
        %v1819 = vld [vmem:[%s11] sm:$0x1]
        %v1821 = vlaneseq
        %v1822 = vshrl.u32 %v1821, 7
        %v1823 = vsub.s32 0, %v1822
        %v1824 = vrot.slane %v1819, %v1823
        %v1827 = vsel %vm691, %v1814, 0
        %1829 = vmatprep.subr.mxu0 0.0
        %1830 = vmatpush1.msra.mxu0 %v1815
        %1831 = vmatprep.subr.mxu0 0.0
        %1832 = vmatpush1.msra.mxu0 %v1816
        %1833 = vmatprep.subr.mxu0 0.0
        %1834 = vmatpush1.msra.mxu0 %v1817
        %1835 = vmatprep.subr.mxu0 0.0
        %1836 = vmatpush1.msra.mxu0 %v1818
        %1837 = vmatprep.subr.mxu0 0.0
        %1838 = vmatpush1.msra.mxu0 0.0
        %1839 = vmatprep.subr.mxu0 0.0
        %1840 = vmatpush1.msra.mxu0 0.0
        %1841 = vmatprep.subr.mxu0 0.0
        %1842 = vmatpush1.msra.mxu0 0.0
        %1843 = vmatprep.subr.mxu0 0.0
        %1844 = vmatpush1.msra.mxu0 0.0
        %1845 = vmatprep.subr.mxu0 0.0
        %1846 = vmatpush1.msra.mxu0 0.0
        %1847 = vmatprep.subr.mxu0 0.0
        %1848 = vmatpush1.msra.mxu0 0.0
        %1849 = vmatprep.subr.mxu0 0.0
        %1850 = vmatpush1.msra.mxu0 0.0
        %1851 = vmatprep.subr.mxu0 0.0
        %1852 = vmatpush1.msra.mxu0 0.0
        %1853 = vmatprep.subr.mxu0 0.0
        %1854 = vmatpush1.msra.mxu0 0.0
        %1855 = vmatprep.subr.mxu0 0.0
        %1856 = vmatpush1.msra.mxu0 0.0
        %1857 = vmatprep.subr.mxu0 0.0
        %1858 = vmatpush1.msra.mxu0 0.0
        %1859 = vmatprep.subr.mxu0 0.0
        %1860 = vmatpush1.msra.mxu0 0.0
        %1861 = vmatprep.subr.mxu0 0.0
        %1862 = vmatpush1.msra.mxu0 0.0
        %1863 = vmatprep.subr.mxu0 0.0
        %1864 = vmatpush1.msra.mxu0 0.0
        %1865 = vmatprep.subr.mxu0 0.0
        %1866 = vmatpush1.msra.mxu0 0.0
        %1867 = vmatprep.subr.mxu0 0.0
        %1868 = vmatpush1.msra.mxu0 0.0
        %1869 = vmatprep.subr.mxu0 0.0
        %1870 = vmatpush1.msra.mxu0 0.0
        %1871 = vmatprep.subr.mxu0 0.0
        %1872 = vmatpush1.msra.mxu0 0.0
        %1873 = vmatprep.subr.mxu0 0.0
        %1874 = vmatpush1.msra.mxu0 0.0
        %1875 = vmatprep.subr.mxu0 0.0
        %1876 = vmatpush1.msra.mxu0 0.0
        %1877 = vmatprep.subr.mxu0 0.0
        %1878 = vmatpush1.msra.mxu0 0.0
        %1879 = vmatprep.subr.mxu0 0.0
        %1880 = vmatpush1.msra.mxu0 0.0
        %1881 = vmatprep.subr.mxu0 0.0
        %1882 = vmatpush1.msra.mxu0 0.0
        %1883 = vmatprep.subr.mxu0 0.0
        %1884 = vmatpush1.msra.mxu0 0.0
        %1885 = vmatprep.subr.mxu0 0.0
        %1886 = vmatpush1.msra.mxu0 0.0
        %1887 = vmatprep.subr.mxu0 0.0
        %1888 = vmatpush1.msra.mxu0 0.0
        %1889 = vmatprep.subr.mxu0 0.0
        %1890 = vmatpush1.msra.mxu0 0.0
        %1891 = vmatprep.subr.mxu0 0.0
        %1892 = vmatpush1.msra.mxu0 0.0
        %1893 = vmatprep.mubr.f32.mxu0 0.0
        %1894 = vmatmul.mubr.f32.gmra.mrb[0].mxu0 %v1827
        %v1895 = vpop.f32.mrb[0].mxu0
        %v1896 = vadd.f32 %v1824, %v1895
        %v1897 = vpop.f32.mrb[0].mxu0
        %1898 = vdwg.mxu0
        %v1899 = vmul.f32 %v1896, 0.5
        %v1900 = vmul.f32 %v1896, 0.044715
        %v1901 = vmul.f32 %v1900, %v1896
        %v1902 = vmul.f32 %v1901, %v1896
        %v1903 = vadd.f32 %v1896, %v1902
        %v1904 = vmul.f32 %v1903, 0.7978846
        %v1905 = vtanh.pop %v1904
        %v1906 = vadd.f32 %v1905, 1.0
        %v1907 = vmul.f32 %v1899, %v1906
        %v1908 = vld [vmem:[%s12] sm:$0xff]
        %v1909 = vld [vmem:[%s12 + $0x8] sm:$0xff]
        %v1910 = vld [vmem:[%s12 + $0x10] sm:$0xff]
        %v1911 = vld [vmem:[%s12 + $0x18] sm:$0xff]
        %v1912 = vld [vmem:[%s12 + $0x20] sm:$0xff]
        %v1913 = vld [vmem:[%s12 + $0x28] sm:$0xff]
        %v1914 = vld [vmem:[%s12 + $0x30] sm:$0xff]
        %v1915 = vld [vmem:[%s12 + $0x38] sm:$0xff]
        %v1916 = vld [vmem:[%s13] sm:$0x1]
        %v1918 = vlaneseq
        %v1919 = vshrl.u32 %v1918, 7
        %v1920 = vsub.s32 0, %v1919
        %v1921 = vrot.slane %v1916, %v1920
        %vm1923 = vcmask 523264
        %v1925 = vsel %vm1923, %v1907, 0
        %1927 = vmatprep.subr.mxu0 0.0
        %1928 = vmatpush1.msra.mxu0 %v1908
        %1929 = vmatprep.subr.mxu0 0.0
        %1930 = vmatpush1.msra.mxu0 %v1909
        %1931 = vmatprep.subr.mxu0 0.0
        %1932 = vmatpush1.msra.mxu0 %v1910
        %1933 = vmatprep.subr.mxu0 0.0
        %1934 = vmatpush1.msra.mxu0 %v1911
        %1935 = vmatprep.subr.mxu0 0.0
        %1936 = vmatpush1.msra.mxu0 %v1912
        %1937 = vmatprep.subr.mxu0 0.0
        %1938 = vmatpush1.msra.mxu0 %v1913
        %1939 = vmatprep.subr.mxu0 0.0
        %1940 = vmatpush1.msra.mxu0 %v1914
        %1941 = vmatprep.subr.mxu0 0.0
        %1942 = vmatpush1.msra.mxu0 %v1915
        %1943 = vmatprep.subr.mxu0 0.0
        %1944 = vmatpush1.msra.mxu0 0.0
        %1945 = vmatprep.subr.mxu0 0.0
        %1946 = vmatpush1.msra.mxu0 0.0
        %1947 = vmatprep.subr.mxu0 0.0
        %1948 = vmatpush1.msra.mxu0 0.0
        %1949 = vmatprep.subr.mxu0 0.0
        %1950 = vmatpush1.msra.mxu0 0.0
        %1951 = vmatprep.subr.mxu0 0.0
        %1952 = vmatpush1.msra.mxu0 0.0
        %1953 = vmatprep.subr.mxu0 0.0
        %1954 = vmatpush1.msra.mxu0 0.0
        %1955 = vmatprep.subr.mxu0 0.0
        %1956 = vmatpush1.msra.mxu0 0.0
        %1957 = vmatprep.subr.mxu0 0.0
        %1958 = vmatpush1.msra.mxu0 0.0
        %1959 = vmatprep.subr.mxu0 0.0
        %1960 = vmatpush1.msra.mxu0 0.0
        %1961 = vmatprep.subr.mxu0 0.0
        %1962 = vmatpush1.msra.mxu0 0.0
        %1963 = vmatprep.subr.mxu0 0.0
        %1964 = vmatpush1.msra.mxu0 0.0
        %1965 = vmatprep.subr.mxu0 0.0
        %1966 = vmatpush1.msra.mxu0 0.0
        %1967 = vmatprep.subr.mxu0 0.0
        %1968 = vmatpush1.msra.mxu0 0.0
        %1969 = vmatprep.subr.mxu0 0.0
        %1970 = vmatpush1.msra.mxu0 0.0
        %1971 = vmatprep.subr.mxu0 0.0
        %1972 = vmatpush1.msra.mxu0 0.0
        %1973 = vmatprep.subr.mxu0 0.0
        %1974 = vmatpush1.msra.mxu0 0.0
        %1975 = vmatprep.subr.mxu0 0.0
        %1976 = vmatpush1.msra.mxu0 0.0
        %1977 = vmatprep.subr.mxu0 0.0
        %1978 = vmatpush1.msra.mxu0 0.0
        %1979 = vmatprep.subr.mxu0 0.0
        %1980 = vmatpush1.msra.mxu0 0.0
        %1981 = vmatprep.subr.mxu0 0.0
        %1982 = vmatpush1.msra.mxu0 0.0
        %1983 = vmatprep.subr.mxu0 0.0
        %1984 = vmatpush1.msra.mxu0 0.0
        %1985 = vmatprep.subr.mxu0 0.0
        %1986 = vmatpush1.msra.mxu0 0.0
        %1987 = vmatprep.subr.mxu0 0.0
        %1988 = vmatpush1.msra.mxu0 0.0
        %1989 = vmatprep.subr.mxu0 0.0
        %1990 = vmatpush1.msra.mxu0 0.0
        %1991 = vmatprep.mubr.f32.mxu0 0.0
        %1992 = vmatmul.mubr.f32.gmra.mrb[0].mxu0 %v1925
        %v1993 = vpop.f32.mrb[0].mxu0
        %v1994 = vadd.f32 %v1921, %v1993
        %v1995 = vpop.f32.mrb[0].mxu0
        %1996 = vdwg.mxu0
        %v1997 = vadd.f32 %v1814, %v1994
        %v1998 = vld [vmem:[%s14] sm:$0x1]
        %v1999 = vld [vmem:[%s15] sm:$0x1]
        %v2000 = vsel %vm691, %v1997, 0.0
        %2001 = vadd.xlane.f32.xlu0 %v2000
        %v2002 = vpop.xlane.xlu0 %2001
        %v2003 = vmul.f32 %v2002, %v695
        %v2004 = vsub.f32 %v1997, %v2003
        %v2005 = vmul.f32 %v2004, %v2004
        %v2006 = vsel %vm691, %v2005, 0.0
        %2007 = vadd.xlane.f32.xlu0 %v2006
        %v2008 = vpop.xlane.xlu0 %2007
        %v2009 = vmul.f32 %v2008, %v695
        %v2010 = vadd.f32 %v2009, 1e-12
        %v2011 = vrsqrt.pop %v2010
        %v2012 = vmul.f32 %v2004, %v2011
        %v2014 = vlaneseq
        %v2015 = vshrl.u32 %v2014, 7
        %v2016 = vsub.s32 0, %v2015
        %v2017 = vrot.slane %v1998, %v2016
        %v2019 = vmul.f32 %v2012, %v2017
        %v2021 = vlaneseq
        %v2022 = vshrl.u32 %v2021, 7
        %v2023 = vsub.s32 0, %v2022
        %v2024 = vrot.slane %v1999, %v2023
        %v2026 = vadd.f32 %v2019, %v2024
        %s2027 = scalar_lea.vmem %s4, 32
        %v2028 = vld [vmem:[%s2027] sm:$0xff]
        %v2029 = vld [vmem:[%s2027 + $0x8] sm:$0xff]
        %v2030 = vld [vmem:[%s2027 + $0x10] sm:$0xff]
        %v2031 = vld [vmem:[%s2027 + $0x18] sm:$0xff]
        %s2032 = scalar_lea.vmem [#allocation8], 1
        %v2033 = vld [vmem:[%s2032] sm:$0x1]
        %v2035 = vlaneseq
        %v2036 = vshrl.u32 %v2035, 7
        %v2037 = vsub.s32 0, %v2036
        %v2038 = vrot.slane %v2033, %v2037
        %v2041 = vsel %vm691, %v2026, 0
        %2043 = vmatprep.subr.mxu0 0.0
        %2044 = vmatpush1.msra.mxu0 %v2028
        %2045 = vmatprep.subr.mxu0 0.0
        %2046 = vmatpush1.msra.mxu0 %v2029
        %2047 = vmatprep.subr.mxu0 0.0
        %2048 = vmatpush1.msra.mxu0 %v2030
        %2049 = vmatprep.subr.mxu0 0.0
        %2050 = vmatpush1.msra.mxu0 %v2031
        %2051 = vmatprep.subr.mxu0 0.0
        %2052 = vmatpush1.msra.mxu0 0.0
        %2053 = vmatprep.subr.mxu0 0.0
        %2054 = vmatpush1.msra.mxu0 0.0
        %2055 = vmatprep.subr.mxu0 0.0
        %2056 = vmatpush1.msra.mxu0 0.0
        %2057 = vmatprep.subr.mxu0 0.0
        %2058 = vmatpush1.msra.mxu0 0.0
        %2059 = vmatprep.subr.mxu0 0.0
        %2060 = vmatpush1.msra.mxu0 0.0
        %2061 = vmatprep.subr.mxu0 0.0
        %2062 = vmatpush1.msra.mxu0 0.0
        %2063 = vmatprep.subr.mxu0 0.0
        %2064 = vmatpush1.msra.mxu0 0.0
        %2065 = vmatprep.subr.mxu0 0.0
        %2066 = vmatpush1.msra.mxu0 0.0
        %2067 = vmatprep.subr.mxu0 0.0
        %2068 = vmatpush1.msra.mxu0 0.0
        %2069 = vmatprep.subr.mxu0 0.0
        %2070 = vmatpush1.msra.mxu0 0.0
        %2071 = vmatprep.subr.mxu0 0.0
        %2072 = vmatpush1.msra.mxu0 0.0
        %2073 = vmatprep.subr.mxu0 0.0
        %2074 = vmatpush1.msra.mxu0 0.0
        %2075 = vmatprep.subr.mxu0 0.0
        %2076 = vmatpush1.msra.mxu0 0.0
        %2077 = vmatprep.subr.mxu0 0.0
        %2078 = vmatpush1.msra.mxu0 0.0
        %2079 = vmatprep.subr.mxu0 0.0
        %2080 = vmatpush1.msra.mxu0 0.0
        %2081 = vmatprep.subr.mxu0 0.0
        %2082 = vmatpush1.msra.mxu0 0.0
        %2083 = vmatprep.subr.mxu0 0.0
        %2084 = vmatpush1.msra.mxu0 0.0
        %2085 = vmatprep.subr.mxu0 0.0
        %2086 = vmatpush1.msra.mxu0 0.0
        %2087 = vmatprep.subr.mxu0 0.0
        %2088 = vmatpush1.msra.mxu0 0.0
        %2089 = vmatprep.subr.mxu0 0.0
        %2090 = vmatpush1.msra.mxu0 0.0
        %2091 = vmatprep.subr.mxu0 0.0
        %2092 = vmatpush1.msra.mxu0 0.0
        %2093 = vmatprep.subr.mxu0 0.0
        %2094 = vmatpush1.msra.mxu0 0.0
        %2095 = vmatprep.subr.mxu0 0.0
        %2096 = vmatpush1.msra.mxu0 0.0
        %2097 = vmatprep.subr.mxu0 0.0
        %2098 = vmatpush1.msra.mxu0 0.0
        %2099 = vmatprep.subr.mxu0 0.0
        %2100 = vmatpush1.msra.mxu0 0.0
        %2101 = vmatprep.subr.mxu0 0.0
        %2102 = vmatpush1.msra.mxu0 0.0
        %2103 = vmatprep.subr.mxu0 0.0
        %2104 = vmatpush1.msra.mxu0 0.0
        %2105 = vmatprep.subr.mxu0 0.0
        %2106 = vmatpush1.msra.mxu0 0.0
        %2107 = vmatprep.mubr.f32.mxu0 0.0
        %2108 = vmatmul.mubr.f32.gmra.mrb[0].mxu0 %v2041
        %v2109 = vpop.f32.mrb[0].mxu0
        %v2110 = vadd.f32 %v2038, %v2109
        %v2111 = vpop.f32.mrb[0].mxu0
        %2112 = vdwg.mxu0
        %s2113 = scalar_lea.vmem %s6, 32
        %v2114 = vld [vmem:[%s2113] sm:$0xff]
        %v2115 = vld [vmem:[%s2113 + $0x8] sm:$0xff]
        %v2116 = vld [vmem:[%s2113 + $0x10] sm:$0xff]
        %v2117 = vld [vmem:[%s2113 + $0x18] sm:$0xff]
        %2119 = vrot.lane.b32.xlu0 %v2110, 96
        %v2120 = vpop.permute.xlu0 %2119
        %v2121 = vsel %vm812, %v2110, 0
        %v2123 = vsel %vm812, %v2120, 0
        %2125 = vmatprep.subr.mxu0 0.0
        %2126 = vmatpush1.xpose.msra.mxu0 %v2123
        %2127 = vmatprep.subr.mxu0 0.0
        %2128 = vmatpush1.xpose.msra.mxu0 0.0
        %2129 = vmatprep.subr.mxu0 0.0
        %2130 = vmatpush1.xpose.msra.mxu0 0.0
        %2131 = vmatprep.subr.mxu0 0.0
        %2132 = vmatpush1.xpose.msra.mxu0 0.0
        %2133 = vmatprep.subr.mxu0 0.0
        %2134 = vmatpush1.xpose.msra.mxu0 0.0
        %2135 = vmatprep.subr.mxu0 0.0
        %2136 = vmatpush1.xpose.msra.mxu0 0.0
        %2137 = vmatprep.subr.mxu0 0.0
        %2138 = vmatpush1.xpose.msra.mxu0 0.0
        %2139 = vmatprep.subr.mxu0 0.0
        %2140 = vmatpush1.xpose.msra.mxu0 0.0
        %2141 = vmatprep.subr.mxu0 0.0
        %2142 = vmatpush1.xpose.msra.mxu0 0.0
        %2143 = vmatprep.subr.mxu0 0.0
        %2144 = vmatpush1.xpose.msra.mxu0 0.0
        %2145 = vmatprep.subr.mxu0 0.0
        %2146 = vmatpush1.xpose.msra.mxu0 0.0
        %2147 = vmatprep.subr.mxu0 0.0
        %2148 = vmatpush1.xpose.msra.mxu0 0.0
        %2149 = vmatprep.subr.mxu0 0.0
        %2150 = vmatpush1.xpose.msra.mxu0 0.0
        %2151 = vmatprep.subr.mxu0 0.0
        %2152 = vmatpush1.xpose.msra.mxu0 0.0
        %2153 = vmatprep.subr.mxu0 0.0
        %2154 = vmatpush1.xpose.msra.mxu0 0.0
        %2155 = vmatprep.subr.mxu0 0.0
        %2156 = vmatpush1.xpose.msra.mxu0 0.0
        %2157 = vmatprep.subr.mxu0 0.0
        %2158 = vmatpush1.xpose.msra.mxu0 0.0
        %2159 = vmatprep.subr.mxu0 0.0
        %2160 = vmatpush1.xpose.msra.mxu0 0.0
        %2161 = vmatprep.subr.mxu0 0.0
        %2162 = vmatpush1.xpose.msra.mxu0 0.0
        %2163 = vmatprep.subr.mxu0 0.0
        %2164 = vmatpush1.xpose.msra.mxu0 0.0
        %2165 = vmatprep.subr.mxu0 0.0
        %2166 = vmatpush1.xpose.msra.mxu0 0.0
        %2167 = vmatprep.subr.mxu0 0.0
        %2168 = vmatpush1.xpose.msra.mxu0 0.0
        %2169 = vmatprep.subr.mxu0 0.0
        %2170 = vmatpush1.xpose.msra.mxu0 0.0
        %2171 = vmatprep.subr.mxu0 0.0
        %2172 = vmatpush1.xpose.msra.mxu0 0.0
        %2173 = vmatprep.subr.mxu0 0.0
        %2174 = vmatpush1.xpose.msra.mxu0 0.0
        %2175 = vmatprep.subr.mxu0 0.0
        %2176 = vmatpush1.xpose.msra.mxu0 0.0
        %2177 = vmatprep.subr.mxu0 0.0
        %2178 = vmatpush1.xpose.msra.mxu0 0.0
        %2179 = vmatprep.subr.mxu0 0.0
        %2180 = vmatpush1.xpose.msra.mxu0 0.0
        %2181 = vmatprep.subr.mxu0 0.0
        %2182 = vmatpush1.xpose.msra.mxu0 0.0
        %2183 = vmatprep.subr.mxu0 0.0
        %2184 = vmatpush1.xpose.msra.mxu0 0.0
        %2185 = vmatprep.subr.mxu0 0.0
        %2186 = vmatpush1.xpose.msra.mxu0 0.0
        %2187 = vmatprep.subr.mxu0 0.0
        %2188 = vmatpush1.xpose.msra.mxu0 0.0
        %2189 = vmatprep.mubr.f32.mxu0 0.0
        %2190 = vmatmul.mubr.f32.gmra.mrb[0].mxu0 %v2121
        %v2191 = vpop.f32.mrb[0].mxu0
        %v2192 = vadd.f32 0.0, %v2191
        %v2193 = vpop.f32.mrb[0].mxu0
        %2194 = vdwg.mxu0
        %v2195 = vmul.f32 %v2192, 0.35355338
        %v2196 = vadd.f32 %v2195, %v892
        %v2197 = vsel %vm812, %v2196, -inf
        %2198 = vmax.xlane.f32.xlu0 %v2197
        %v2199 = vpop.xlane.xlu0 %2198
        %v2200 = vsub.f32 %v2196, %v2199
        %v2201 = vmul.f32 %v2200, 1.442695
        %v2202 = vpow.pop %v2201
        %v2203 = vsel %vm812, %v2202, 0.0
        %2204 = vadd.xlane.f32.xlu0 %v2203
        %v2205 = vpop.xlane.xlu0 %2204
        %v2206 = vrcp.pop %v2205
        %v2207 = vmul.f32 %v2202, %v2206
        %2208 = vrot.lane.b32.xlu0 %v2110, 64
        %v2209 = vpop.permute.xlu0 %2208
        %v2212 = vsel %vm812, %v2207, 0
        %2214 = vmatprep.subr.mxu0 0.0
        %2215 = vmatpush1.msra.mxu0 %v2209
        %2216 = vmatprep.subr.mxu0 0.0
        %2217 = vmatpush1.msra.mxu0 0.0
        %2218 = vmatprep.subr.mxu0 0.0
        %2219 = vmatpush1.msra.mxu0 0.0
        %2220 = vmatprep.subr.mxu0 0.0
        %2221 = vmatpush1.msra.mxu0 0.0
        %2222 = vmatprep.subr.mxu0 0.0
        %2223 = vmatpush1.msra.mxu0 0.0
        %2224 = vmatprep.subr.mxu0 0.0
        %2225 = vmatpush1.msra.mxu0 0.0
        %2226 = vmatprep.subr.mxu0 0.0
        %2227 = vmatpush1.msra.mxu0 0.0
        %2228 = vmatprep.subr.mxu0 0.0
        %2229 = vmatpush1.msra.mxu0 0.0
        %2230 = vmatprep.subr.mxu0 0.0
        %2231 = vmatpush1.msra.mxu0 0.0
        %2232 = vmatprep.subr.mxu0 0.0
        %2233 = vmatpush1.msra.mxu0 0.0
        %2234 = vmatprep.subr.mxu0 0.0
        %2235 = vmatpush1.msra.mxu0 0.0
        %2236 = vmatprep.subr.mxu0 0.0
        %2237 = vmatpush1.msra.mxu0 0.0
        %2238 = vmatprep.subr.mxu0 0.0
        %2239 = vmatpush1.msra.mxu0 0.0
        %2240 = vmatprep.subr.mxu0 0.0
        %2241 = vmatpush1.msra.mxu0 0.0
        %2242 = vmatprep.subr.mxu0 0.0
        %2243 = vmatpush1.msra.mxu0 0.0
        %2244 = vmatprep.subr.mxu0 0.0
        %2245 = vmatpush1.msra.mxu0 0.0
        %2246 = vmatprep.subr.mxu0 0.0
        %2247 = vmatpush1.msra.mxu0 0.0
        %2248 = vmatprep.subr.mxu0 0.0
        %2249 = vmatpush1.msra.mxu0 0.0
        %2250 = vmatprep.subr.mxu0 0.0
        %2251 = vmatpush1.msra.mxu0 0.0
        %2252 = vmatprep.subr.mxu0 0.0
        %2253 = vmatpush1.msra.mxu0 0.0
        %2254 = vmatprep.subr.mxu0 0.0
        %2255 = vmatpush1.msra.mxu0 0.0
        %2256 = vmatprep.subr.mxu0 0.0
        %2257 = vmatpush1.msra.mxu0 0.0
        %2258 = vmatprep.subr.mxu0 0.0
        %2259 = vmatpush1.msra.mxu0 0.0
        %2260 = vmatprep.subr.mxu0 0.0
        %2261 = vmatpush1.msra.mxu0 0.0
        %2262 = vmatprep.subr.mxu0 0.0
        %2263 = vmatpush1.msra.mxu0 0.0
        %2264 = vmatprep.subr.mxu0 0.0
        %2265 = vmatpush1.msra.mxu0 0.0
        %2266 = vmatprep.subr.mxu0 0.0
        %2267 = vmatpush1.msra.mxu0 0.0
        %2268 = vmatprep.subr.mxu0 0.0
        %2269 = vmatpush1.msra.mxu0 0.0
        %2270 = vmatprep.subr.mxu0 0.0
        %2271 = vmatpush1.msra.mxu0 0.0
        %2272 = vmatprep.subr.mxu0 0.0
        %2273 = vmatpush1.msra.mxu0 0.0
        %2274 = vmatprep.subr.mxu0 0.0
        %2275 = vmatpush1.msra.mxu0 0.0
        %2276 = vmatprep.subr.mxu0 0.0
        %2277 = vmatpush1.msra.mxu0 0.0
        %2278 = vmatprep.mubr.f32.mxu0 0.0
        %2279 = vmatmul.mubr.f32.gmra.mrb[0].mxu0 %v2212
        %v2280 = vpop.f32.mrb[0].mxu0
        %v2281 = vadd.f32 0.0, %v2280
        %v2282 = vpop.f32.mrb[0].mxu0
        %2283 = vdwg.mxu0
        %2284 = vrot.lane.b32.xlu0 %v2110, 120
        %v2285 = vpop.permute.xlu0 %2284
        %2286 = vrot.lane.b32.xlu0 %v2110, 88
        %v2287 = vpop.permute.xlu0 %2286
        %v2288 = vsel %vm812, %v2285, 0
        %v2290 = vsel %vm812, %v2287, 0
        %2292 = vmatprep.subr.mxu0 0.0
        %2293 = vmatpush1.xpose.msra.mxu0 %v2290
        %2294 = vmatprep.subr.mxu0 0.0
        %2295 = vmatpush1.xpose.msra.mxu0 0.0
        %2296 = vmatprep.subr.mxu0 0.0
        %2297 = vmatpush1.xpose.msra.mxu0 0.0
        %2298 = vmatprep.subr.mxu0 0.0
        %2299 = vmatpush1.xpose.msra.mxu0 0.0
        %2300 = vmatprep.subr.mxu0 0.0
        %2301 = vmatpush1.xpose.msra.mxu0 0.0
        %2302 = vmatprep.subr.mxu0 0.0
        %2303 = vmatpush1.xpose.msra.mxu0 0.0
        %2304 = vmatprep.subr.mxu0 0.0
        %2305 = vmatpush1.xpose.msra.mxu0 0.0
        %2306 = vmatprep.subr.mxu0 0.0
        %2307 = vmatpush1.xpose.msra.mxu0 0.0
        %2308 = vmatprep.subr.mxu0 0.0
        %2309 = vmatpush1.xpose.msra.mxu0 0.0
        %2310 = vmatprep.subr.mxu0 0.0
        %2311 = vmatpush1.xpose.msra.mxu0 0.0
        %2312 = vmatprep.subr.mxu0 0.0
        %2313 = vmatpush1.xpose.msra.mxu0 0.0
        %2314 = vmatprep.subr.mxu0 0.0
        %2315 = vmatpush1.xpose.msra.mxu0 0.0
        %2316 = vmatprep.subr.mxu0 0.0
        %2317 = vmatpush1.xpose.msra.mxu0 0.0
        %2318 = vmatprep.subr.mxu0 0.0
        %2319 = vmatpush1.xpose.msra.mxu0 0.0
        %2320 = vmatprep.subr.mxu0 0.0
        %2321 = vmatpush1.xpose.msra.mxu0 0.0
        %2322 = vmatprep.subr.mxu0 0.0
        %2323 = vmatpush1.xpose.msra.mxu0 0.0
        %2324 = vmatprep.subr.mxu0 0.0
        %2325 = vmatpush1.xpose.msra.mxu0 0.0
        %2326 = vmatprep.subr.mxu0 0.0
        %2327 = vmatpush1.xpose.msra.mxu0 0.0
        %2328 = vmatprep.subr.mxu0 0.0
        %2329 = vmatpush1.xpose.msra.mxu0 0.0
        %2330 = vmatprep.subr.mxu0 0.0
        %2331 = vmatpush1.xpose.msra.mxu0 0.0
        %2332 = vmatprep.subr.mxu0 0.0
        %2333 = vmatpush1.xpose.msra.mxu0 0.0
        %2334 = vmatprep.subr.mxu0 0.0
        %2335 = vmatpush1.xpose.msra.mxu0 0.0
        %2336 = vmatprep.subr.mxu0 0.0
        %2337 = vmatpush1.xpose.msra.mxu0 0.0
        %2338 = vmatprep.subr.mxu0 0.0
        %2339 = vmatpush1.xpose.msra.mxu0 0.0
        %2340 = vmatprep.subr.mxu0 0.0
        %2341 = vmatpush1.xpose.msra.mxu0 0.0
        %2342 = vmatprep.subr.mxu0 0.0
        %2343 = vmatpush1.xpose.msra.mxu0 0.0
        %2344 = vmatprep.subr.mxu0 0.0
        %2345 = vmatpush1.xpose.msra.mxu0 0.0
        %2346 = vmatprep.subr.mxu0 0.0
        %2347 = vmatpush1.xpose.msra.mxu0 0.0
        %2348 = vmatprep.subr.mxu0 0.0
        %2349 = vmatpush1.xpose.msra.mxu0 0.0
        %2350 = vmatprep.subr.mxu0 0.0
        %2351 = vmatpush1.xpose.msra.mxu0 0.0
        %2352 = vmatprep.subr.mxu0 0.0
        %2353 = vmatpush1.xpose.msra.mxu0 0.0
        %2354 = vmatprep.subr.mxu0 0.0
        %2355 = vmatpush1.xpose.msra.mxu0 0.0
        %2356 = vmatprep.mubr.f32.mxu0 0.0
        %2357 = vmatmul.mubr.f32.gmra.mrb[0].mxu0 %v2288
        %v2358 = vpop.f32.mrb[0].mxu0
        %v2359 = vadd.f32 0.0, %v2358
        %v2360 = vpop.f32.mrb[0].mxu0
        %2361 = vdwg.mxu0
        %v2362 = vmul.f32 %v2359, 0.35355338
        %v2363 = vadd.f32 %v2362, %v892
        %v2364 = vsel %vm812, %v2363, -inf
        %2365 = vmax.xlane.f32.xlu0 %v2364
        %v2366 = vpop.xlane.xlu0 %2365
        %v2367 = vsub.f32 %v2363, %v2366
        %v2368 = vmul.f32 %v2367, 1.442695
        %v2369 = vpow.pop %v2368
        %v2370 = vsel %vm812, %v2369, 0.0
        %2371 = vadd.xlane.f32.xlu0 %v2370
        %v2372 = vpop.xlane.xlu0 %2371
        %v2373 = vrcp.pop %v2372
        %v2374 = vmul.f32 %v2369, %v2373
        %2375 = vrot.lane.b32.xlu0 %v2110, 56
        %v2376 = vpop.permute.xlu0 %2375
        %v2379 = vsel %vm812, %v2374, 0
        %2381 = vmatprep.subr.mxu0 0.0
        %2382 = vmatpush1.msra.mxu0 %v2376
        %2383 = vmatprep.subr.mxu0 0.0
        %2384 = vmatpush1.msra.mxu0 0.0
        %2385 = vmatprep.subr.mxu0 0.0
        %2386 = vmatpush1.msra.mxu0 0.0
        %2387 = vmatprep.subr.mxu0 0.0
        %2388 = vmatpush1.msra.mxu0 0.0
        %2389 = vmatprep.subr.mxu0 0.0
        %2390 = vmatpush1.msra.mxu0 0.0
        %2391 = vmatprep.subr.mxu0 0.0
        %2392 = vmatpush1.msra.mxu0 0.0
        %2393 = vmatprep.subr.mxu0 0.0
        %2394 = vmatpush1.msra.mxu0 0.0
        %2395 = vmatprep.subr.mxu0 0.0
        %2396 = vmatpush1.msra.mxu0 0.0
        %2397 = vmatprep.subr.mxu0 0.0
        %2398 = vmatpush1.msra.mxu0 0.0
        %2399 = vmatprep.subr.mxu0 0.0
        %2400 = vmatpush1.msra.mxu0 0.0
        %2401 = vmatprep.subr.mxu0 0.0
        %2402 = vmatpush1.msra.mxu0 0.0
        %2403 = vmatprep.subr.mxu0 0.0
        %2404 = vmatpush1.msra.mxu0 0.0
        %2405 = vmatprep.subr.mxu0 0.0
        %2406 = vmatpush1.msra.mxu0 0.0
        %2407 = vmatprep.subr.mxu0 0.0
        %2408 = vmatpush1.msra.mxu0 0.0
        %2409 = vmatprep.subr.mxu0 0.0
        %2410 = vmatpush1.msra.mxu0 0.0
        %2411 = vmatprep.subr.mxu0 0.0
        %2412 = vmatpush1.msra.mxu0 0.0
        %2413 = vmatprep.subr.mxu0 0.0
        %2414 = vmatpush1.msra.mxu0 0.0
        %2415 = vmatprep.subr.mxu0 0.0
        %2416 = vmatpush1.msra.mxu0 0.0
        %2417 = vmatprep.subr.mxu0 0.0
        %2418 = vmatpush1.msra.mxu0 0.0
        %2419 = vmatprep.subr.mxu0 0.0
        %2420 = vmatpush1.msra.mxu0 0.0
        %2421 = vmatprep.subr.mxu0 0.0
        %2422 = vmatpush1.msra.mxu0 0.0
        %2423 = vmatprep.subr.mxu0 0.0
        %2424 = vmatpush1.msra.mxu0 0.0
        %2425 = vmatprep.subr.mxu0 0.0
        %2426 = vmatpush1.msra.mxu0 0.0
        %2427 = vmatprep.subr.mxu0 0.0
        %2428 = vmatpush1.msra.mxu0 0.0
        %2429 = vmatprep.subr.mxu0 0.0
        %2430 = vmatpush1.msra.mxu0 0.0
        %2431 = vmatprep.subr.mxu0 0.0
        %2432 = vmatpush1.msra.mxu0 0.0
        %2433 = vmatprep.subr.mxu0 0.0
        %2434 = vmatpush1.msra.mxu0 0.0
        %2435 = vmatprep.subr.mxu0 0.0
        %2436 = vmatpush1.msra.mxu0 0.0
        %2437 = vmatprep.subr.mxu0 0.0
        %2438 = vmatpush1.msra.mxu0 0.0
        %2439 = vmatprep.subr.mxu0 0.0
        %2440 = vmatpush1.msra.mxu0 0.0
        %2441 = vmatprep.subr.mxu0 0.0
        %2442 = vmatpush1.msra.mxu0 0.0
        %2443 = vmatprep.subr.mxu0 0.0
        %2444 = vmatpush1.msra.mxu0 0.0
        %2445 = vmatprep.mubr.f32.mxu0 0.0
        %2446 = vmatmul.mubr.f32.gmra.mrb[0].mxu0 %v2379
        %v2447 = vpop.f32.mrb[0].mxu0
        %v2448 = vadd.f32 0.0, %v2447
        %v2449 = vpop.f32.mrb[0].mxu0
        %2450 = vdwg.mxu0
        %v2452 = vsel %vm812, %v2448, 0
        %2454 = vmatprep.subr.mxu0 0.0
        %2455 = vmatpush1.msra.mxu0 %v2115
        %2456 = vmatprep.subr.mxu0 0.0
        %2457 = vmatpush1.msra.mxu0 0.0
        %2458 = vmatprep.subr.mxu0 0.0
        %2459 = vmatpush1.msra.mxu0 0.0
        %2460 = vmatprep.subr.mxu0 0.0
        %2461 = vmatpush1.msra.mxu0 0.0
        %2462 = vmatprep.subr.mxu0 0.0
        %2463 = vmatpush1.msra.mxu0 0.0
        %2464 = vmatprep.subr.mxu0 0.0
        %2465 = vmatpush1.msra.mxu0 0.0
        %2466 = vmatprep.subr.mxu0 0.0
        %2467 = vmatpush1.msra.mxu0 0.0
        %2468 = vmatprep.subr.mxu0 0.0
        %2469 = vmatpush1.msra.mxu0 0.0
        %2470 = vmatprep.subr.mxu0 0.0
        %2471 = vmatpush1.msra.mxu0 0.0
        %2472 = vmatprep.subr.mxu0 0.0
        %2473 = vmatpush1.msra.mxu0 0.0
        %2474 = vmatprep.subr.mxu0 0.0
        %2475 = vmatpush1.msra.mxu0 0.0
        %2476 = vmatprep.subr.mxu0 0.0
        %2477 = vmatpush1.msra.mxu0 0.0
        %2478 = vmatprep.subr.mxu0 0.0
        %2479 = vmatpush1.msra.mxu0 0.0
        %2480 = vmatprep.subr.mxu0 0.0
        %2481 = vmatpush1.msra.mxu0 0.0
        %2482 = vmatprep.subr.mxu0 0.0
        %2483 = vmatpush1.msra.mxu0 0.0
        %2484 = vmatprep.subr.mxu0 0.0
        %2485 = vmatpush1.msra.mxu0 0.0
        %2486 = vmatprep.subr.mxu0 0.0
        %2487 = vmatpush1.msra.mxu0 0.0
        %2488 = vmatprep.subr.mxu0 0.0
        %2489 = vmatpush1.msra.mxu0 0.0
        %2490 = vmatprep.subr.mxu0 0.0
        %2491 = vmatpush1.msra.mxu0 0.0
        %2492 = vmatprep.subr.mxu0 0.0
        %2493 = vmatpush1.msra.mxu0 0.0
        %2494 = vmatprep.subr.mxu0 0.0
        %2495 = vmatpush1.msra.mxu0 0.0
        %2496 = vmatprep.subr.mxu0 0.0
        %2497 = vmatpush1.msra.mxu0 0.0
        %2498 = vmatprep.subr.mxu0 0.0
        %2499 = vmatpush1.msra.mxu0 0.0
        %2500 = vmatprep.subr.mxu0 0.0
        %2501 = vmatpush1.msra.mxu0 0.0
        %2502 = vmatprep.subr.mxu0 0.0
        %2503 = vmatpush1.msra.mxu0 0.0
        %2504 = vmatprep.subr.mxu0 0.0
        %2505 = vmatpush1.msra.mxu0 0.0
        %2506 = vmatprep.subr.mxu0 0.0
        %2507 = vmatpush1.msra.mxu0 0.0
        %2508 = vmatprep.subr.mxu0 0.0
        %2509 = vmatpush1.msra.mxu0 0.0
        %2510 = vmatprep.subr.mxu0 0.0
        %2511 = vmatpush1.msra.mxu0 0.0
        %2512 = vmatprep.subr.mxu0 0.0
        %2513 = vmatpush1.msra.mxu0 0.0
        %2514 = vmatprep.subr.mxu0 0.0
        %2515 = vmatpush1.msra.mxu0 0.0
        %2516 = vmatprep.subr.mxu0 0.0
        %2517 = vmatpush1.msra.mxu0 0.0
        %2518 = vmatprep.mubr.f32.mxu0 0.0
        %2519 = vmatmul.mubr.f32.gmra.mrb[0].mxu0 %v2452
        %v2520 = vpop.f32.mrb[0].mxu0
        %v2521 = vadd.f32 0.0, %v2520
        %v2522 = vpop.f32.mrb[0].mxu0
        %2523 = vdwg.mxu0
        %v2525 = vsel %vm812, %v2281, 0
        %2527 = vmatprep.subr.mxu0 0.0
        %2528 = vmatpush1.msra.mxu0 %v2114
        %2529 = vmatprep.subr.mxu0 0.0
        %2530 = vmatpush1.msra.mxu0 0.0
        %2531 = vmatprep.subr.mxu0 0.0
        %2532 = vmatpush1.msra.mxu0 0.0
        %2533 = vmatprep.subr.mxu0 0.0
        %2534 = vmatpush1.msra.mxu0 0.0
        %2535 = vmatprep.subr.mxu0 0.0
        %2536 = vmatpush1.msra.mxu0 0.0
        %2537 = vmatprep.subr.mxu0 0.0
        %2538 = vmatpush1.msra.mxu0 0.0
        %2539 = vmatprep.subr.mxu0 0.0
        %2540 = vmatpush1.msra.mxu0 0.0
        %2541 = vmatprep.subr.mxu0 0.0
        %2542 = vmatpush1.msra.mxu0 0.0
        %2543 = vmatprep.subr.mxu0 0.0
        %2544 = vmatpush1.msra.mxu0 0.0
        %2545 = vmatprep.subr.mxu0 0.0
        %2546 = vmatpush1.msra.mxu0 0.0
        %2547 = vmatprep.subr.mxu0 0.0
        %2548 = vmatpush1.msra.mxu0 0.0
        %2549 = vmatprep.subr.mxu0 0.0
        %2550 = vmatpush1.msra.mxu0 0.0
        %2551 = vmatprep.subr.mxu0 0.0
        %2552 = vmatpush1.msra.mxu0 0.0
        %2553 = vmatprep.subr.mxu0 0.0
        %2554 = vmatpush1.msra.mxu0 0.0
        %2555 = vmatprep.subr.mxu0 0.0
        %2556 = vmatpush1.msra.mxu0 0.0
        %2557 = vmatprep.subr.mxu0 0.0
        %2558 = vmatpush1.msra.mxu0 0.0
        %2559 = vmatprep.subr.mxu0 0.0
        %2560 = vmatpush1.msra.mxu0 0.0
        %2561 = vmatprep.subr.mxu0 0.0
        %2562 = vmatpush1.msra.mxu0 0.0
        %2563 = vmatprep.subr.mxu0 0.0
        %2564 = vmatpush1.msra.mxu0 0.0
        %2565 = vmatprep.subr.mxu0 0.0
        %2566 = vmatpush1.msra.mxu0 0.0
        %2567 = vmatprep.subr.mxu0 0.0
        %2568 = vmatpush1.msra.mxu0 0.0
        %2569 = vmatprep.subr.mxu0 0.0
        %2570 = vmatpush1.msra.mxu0 0.0
        %2571 = vmatprep.subr.mxu0 0.0
        %2572 = vmatpush1.msra.mxu0 0.0
        %2573 = vmatprep.subr.mxu0 0.0
        %2574 = vmatpush1.msra.mxu0 0.0
        %2575 = vmatprep.subr.mxu0 0.0
        %2576 = vmatpush1.msra.mxu0 0.0
        %2577 = vmatprep.subr.mxu0 0.0
        %2578 = vmatpush1.msra.mxu0 0.0
        %2579 = vmatprep.subr.mxu0 0.0
        %2580 = vmatpush1.msra.mxu0 0.0
        %2581 = vmatprep.subr.mxu0 0.0
        %2582 = vmatpush1.msra.mxu0 0.0
        %2583 = vmatprep.subr.mxu0 0.0
        %2584 = vmatpush1.msra.mxu0 0.0
        %2585 = vmatprep.subr.mxu0 0.0
        %2586 = vmatpush1.msra.mxu0 0.0
        %2587 = vmatprep.subr.mxu0 0.0
        %2588 = vmatpush1.msra.mxu0 0.0
        %2589 = vmatprep.subr.mxu0 0.0
        %2590 = vmatpush1.msra.mxu0 0.0
        %2591 = vmatprep.mubr.f32.mxu0 0.0
        %2592 = vmatmul.mubr.f32.gmra.mrb[0].mxu0 %v2525
        %v2593 = vpop.f32.mrb[0].mxu0
        %v2594 = vadd.f32 %v2521, %v2593
        %v2595 = vpop.f32.mrb[0].mxu0
        %2596 = vdwg.mxu0
        %2597 = vrot.lane.b32.xlu0 %v2110, 112
        %v2598 = vpop.permute.xlu0 %2597
        %2599 = vrot.lane.b32.xlu0 %v2110, 80
        %v2600 = vpop.permute.xlu0 %2599
        %v2601 = vsel %vm812, %v2598, 0
        %v2603 = vsel %vm812, %v2600, 0
        %2605 = vmatprep.subr.mxu0 0.0
        %2606 = vmatpush1.xpose.msra.mxu0 %v2603
        %2607 = vmatprep.subr.mxu0 0.0
        %2608 = vmatpush1.xpose.msra.mxu0 0.0
        %2609 = vmatprep.subr.mxu0 0.0
        %2610 = vmatpush1.xpose.msra.mxu0 0.0
        %2611 = vmatprep.subr.mxu0 0.0
        %2612 = vmatpush1.xpose.msra.mxu0 0.0
        %2613 = vmatprep.subr.mxu0 0.0
        %2614 = vmatpush1.xpose.msra.mxu0 0.0
        %2615 = vmatprep.subr.mxu0 0.0
        %2616 = vmatpush1.xpose.msra.mxu0 0.0
        %2617 = vmatprep.subr.mxu0 0.0
        %2618 = vmatpush1.xpose.msra.mxu0 0.0
        %2619 = vmatprep.subr.mxu0 0.0
        %2620 = vmatpush1.xpose.msra.mxu0 0.0
        %2621 = vmatprep.subr.mxu0 0.0
        %2622 = vmatpush1.xpose.msra.mxu0 0.0
        %2623 = vmatprep.subr.mxu0 0.0
        %2624 = vmatpush1.xpose.msra.mxu0 0.0
        %2625 = vmatprep.subr.mxu0 0.0
        %2626 = vmatpush1.xpose.msra.mxu0 0.0
        %2627 = vmatprep.subr.mxu0 0.0
        %2628 = vmatpush1.xpose.msra.mxu0 0.0
        %2629 = vmatprep.subr.mxu0 0.0
        %2630 = vmatpush1.xpose.msra.mxu0 0.0
        %2631 = vmatprep.subr.mxu0 0.0
        %2632 = vmatpush1.xpose.msra.mxu0 0.0
        %2633 = vmatprep.subr.mxu0 0.0
        %2634 = vmatpush1.xpose.msra.mxu0 0.0
        %2635 = vmatprep.subr.mxu0 0.0
        %2636 = vmatpush1.xpose.msra.mxu0 0.0
        %2637 = vmatprep.subr.mxu0 0.0
        %2638 = vmatpush1.xpose.msra.mxu0 0.0
        %2639 = vmatprep.subr.mxu0 0.0
        %2640 = vmatpush1.xpose.msra.mxu0 0.0
        %2641 = vmatprep.subr.mxu0 0.0
        %2642 = vmatpush1.xpose.msra.mxu0 0.0
        %2643 = vmatprep.subr.mxu0 0.0
        %2644 = vmatpush1.xpose.msra.mxu0 0.0
        %2645 = vmatprep.subr.mxu0 0.0
        %2646 = vmatpush1.xpose.msra.mxu0 0.0
        %2647 = vmatprep.subr.mxu0 0.0
        %2648 = vmatpush1.xpose.msra.mxu0 0.0
        %2649 = vmatprep.subr.mxu0 0.0
        %2650 = vmatpush1.xpose.msra.mxu0 0.0
        %2651 = vmatprep.subr.mxu0 0.0
        %2652 = vmatpush1.xpose.msra.mxu0 0.0
        %2653 = vmatprep.subr.mxu0 0.0
        %2654 = vmatpush1.xpose.msra.mxu0 0.0
        %2655 = vmatprep.subr.mxu0 0.0
        %2656 = vmatpush1.xpose.msra.mxu0 0.0
        %2657 = vmatprep.subr.mxu0 0.0
        %2658 = vmatpush1.xpose.msra.mxu0 0.0
        %2659 = vmatprep.subr.mxu0 0.0
        %2660 = vmatpush1.xpose.msra.mxu0 0.0
        %2661 = vmatprep.subr.mxu0 0.0
        %2662 = vmatpush1.xpose.msra.mxu0 0.0
        %2663 = vmatprep.subr.mxu0 0.0
        %2664 = vmatpush1.xpose.msra.mxu0 0.0
        %2665 = vmatprep.subr.mxu0 0.0
        %2666 = vmatpush1.xpose.msra.mxu0 0.0
        %2667 = vmatprep.subr.mxu0 0.0
        %2668 = vmatpush1.xpose.msra.mxu0 0.0
        %2669 = vmatprep.mubr.f32.mxu0 0.0
        %2670 = vmatmul.mubr.f32.gmra.mrb[0].mxu0 %v2601
        %v2671 = vpop.f32.mrb[0].mxu0
        %v2672 = vadd.f32 0.0, %v2671
        %v2673 = vpop.f32.mrb[0].mxu0
        %2674 = vdwg.mxu0
        %v2675 = vmul.f32 %v2672, 0.35355338
        %v2676 = vadd.f32 %v2675, %v892
        %v2677 = vsel %vm812, %v2676, -inf
        %2678 = vmax.xlane.f32.xlu0 %v2677
        %v2679 = vpop.xlane.xlu0 %2678
        %v2680 = vsub.f32 %v2676, %v2679
        %v2681 = vmul.f32 %v2680, 1.442695
        %v2682 = vpow.pop %v2681
        %v2683 = vsel %vm812, %v2682, 0.0
        %2684 = vadd.xlane.f32.xlu0 %v2683
        %v2685 = vpop.xlane.xlu0 %2684
        %v2686 = vrcp.pop %v2685
        %v2687 = vmul.f32 %v2682, %v2686
        %2688 = vrot.lane.b32.xlu0 %v2110, 48
        %v2689 = vpop.permute.xlu0 %2688
        %v2692 = vsel %vm812, %v2687, 0
        %2694 = vmatprep.subr.mxu0 0.0
        %2695 = vmatpush1.msra.mxu0 %v2689
        %2696 = vmatprep.subr.mxu0 0.0
        %2697 = vmatpush1.msra.mxu0 0.0
        %2698 = vmatprep.subr.mxu0 0.0
        %2699 = vmatpush1.msra.mxu0 0.0
        %2700 = vmatprep.subr.mxu0 0.0
        %2701 = vmatpush1.msra.mxu0 0.0
        %2702 = vmatprep.subr.mxu0 0.0
        %2703 = vmatpush1.msra.mxu0 0.0
        %2704 = vmatprep.subr.mxu0 0.0
        %2705 = vmatpush1.msra.mxu0 0.0
        %2706 = vmatprep.subr.mxu0 0.0
        %2707 = vmatpush1.msra.mxu0 0.0
        %2708 = vmatprep.subr.mxu0 0.0
        %2709 = vmatpush1.msra.mxu0 0.0
        %2710 = vmatprep.subr.mxu0 0.0
        %2711 = vmatpush1.msra.mxu0 0.0
        %2712 = vmatprep.subr.mxu0 0.0
        %2713 = vmatpush1.msra.mxu0 0.0
        %2714 = vmatprep.subr.mxu0 0.0
        %2715 = vmatpush1.msra.mxu0 0.0
        %2716 = vmatprep.subr.mxu0 0.0
        %2717 = vmatpush1.msra.mxu0 0.0
        %2718 = vmatprep.subr.mxu0 0.0
        %2719 = vmatpush1.msra.mxu0 0.0
        %2720 = vmatprep.subr.mxu0 0.0
        %2721 = vmatpush1.msra.mxu0 0.0
        %2722 = vmatprep.subr.mxu0 0.0
        %2723 = vmatpush1.msra.mxu0 0.0
        %2724 = vmatprep.subr.mxu0 0.0
        %2725 = vmatpush1.msra.mxu0 0.0
        %2726 = vmatprep.subr.mxu0 0.0
        %2727 = vmatpush1.msra.mxu0 0.0
        %2728 = vmatprep.subr.mxu0 0.0
        %2729 = vmatpush1.msra.mxu0 0.0
        %2730 = vmatprep.subr.mxu0 0.0
        %2731 = vmatpush1.msra.mxu0 0.0
        %2732 = vmatprep.subr.mxu0 0.0
        %2733 = vmatpush1.msra.mxu0 0.0
        %2734 = vmatprep.subr.mxu0 0.0
        %2735 = vmatpush1.msra.mxu0 0.0
        %2736 = vmatprep.subr.mxu0 0.0
        %2737 = vmatpush1.msra.mxu0 0.0
        %2738 = vmatprep.subr.mxu0 0.0
        %2739 = vmatpush1.msra.mxu0 0.0
        %2740 = vmatprep.subr.mxu0 0.0
        %2741 = vmatpush1.msra.mxu0 0.0
        %2742 = vmatprep.subr.mxu0 0.0
        %2743 = vmatpush1.msra.mxu0 0.0
        %2744 = vmatprep.subr.mxu0 0.0
        %2745 = vmatpush1.msra.mxu0 0.0
        %2746 = vmatprep.subr.mxu0 0.0
        %2747 = vmatpush1.msra.mxu0 0.0
        %2748 = vmatprep.subr.mxu0 0.0
        %2749 = vmatpush1.msra.mxu0 0.0
        %2750 = vmatprep.subr.mxu0 0.0
        %2751 = vmatpush1.msra.mxu0 0.0
        %2752 = vmatprep.subr.mxu0 0.0
        %2753 = vmatpush1.msra.mxu0 0.0
        %2754 = vmatprep.subr.mxu0 0.0
        %2755 = vmatpush1.msra.mxu0 0.0
        %2756 = vmatprep.subr.mxu0 0.0
        %2757 = vmatpush1.msra.mxu0 0.0
        %2758 = vmatprep.mubr.f32.mxu0 0.0
        %2759 = vmatmul.mubr.f32.gmra.mrb[0].mxu0 %v2692
        %v2760 = vpop.f32.mrb[0].mxu0
        %v2761 = vadd.f32 0.0, %v2760
        %v2762 = vpop.f32.mrb[0].mxu0
        %2763 = vdwg.mxu0
        %v2765 = vsel %vm812, %v2761, 0
        %2767 = vmatprep.subr.mxu0 0.0
        %2768 = vmatpush1.msra.mxu0 %v2116
        %2769 = vmatprep.subr.mxu0 0.0
        %2770 = vmatpush1.msra.mxu0 0.0
        %2771 = vmatprep.subr.mxu0 0.0
        %2772 = vmatpush1.msra.mxu0 0.0
        %2773 = vmatprep.subr.mxu0 0.0
        %2774 = vmatpush1.msra.mxu0 0.0
        %2775 = vmatprep.subr.mxu0 0.0
        %2776 = vmatpush1.msra.mxu0 0.0
        %2777 = vmatprep.subr.mxu0 0.0
        %2778 = vmatpush1.msra.mxu0 0.0
        %2779 = vmatprep.subr.mxu0 0.0
        %2780 = vmatpush1.msra.mxu0 0.0
        %2781 = vmatprep.subr.mxu0 0.0
        %2782 = vmatpush1.msra.mxu0 0.0
        %2783 = vmatprep.subr.mxu0 0.0
        %2784 = vmatpush1.msra.mxu0 0.0
        %2785 = vmatprep.subr.mxu0 0.0
        %2786 = vmatpush1.msra.mxu0 0.0
        %2787 = vmatprep.subr.mxu0 0.0
        %2788 = vmatpush1.msra.mxu0 0.0
        %2789 = vmatprep.subr.mxu0 0.0
        %2790 = vmatpush1.msra.mxu0 0.0
        %2791 = vmatprep.subr.mxu0 0.0
        %2792 = vmatpush1.msra.mxu0 0.0
        %2793 = vmatprep.subr.mxu0 0.0
        %2794 = vmatpush1.msra.mxu0 0.0
        %2795 = vmatprep.subr.mxu0 0.0
        %2796 = vmatpush1.msra.mxu0 0.0
        %2797 = vmatprep.subr.mxu0 0.0
        %2798 = vmatpush1.msra.mxu0 0.0
        %2799 = vmatprep.subr.mxu0 0.0
        %2800 = vmatpush1.msra.mxu0 0.0
        %2801 = vmatprep.subr.mxu0 0.0
        %2802 = vmatpush1.msra.mxu0 0.0
        %2803 = vmatprep.subr.mxu0 0.0
        %2804 = vmatpush1.msra.mxu0 0.0
        %2805 = vmatprep.subr.mxu0 0.0
        %2806 = vmatpush1.msra.mxu0 0.0
        %2807 = vmatprep.subr.mxu0 0.0
        %2808 = vmatpush1.msra.mxu0 0.0
        %2809 = vmatprep.subr.mxu0 0.0
        %2810 = vmatpush1.msra.mxu0 0.0
        %2811 = vmatprep.subr.mxu0 0.0
        %2812 = vmatpush1.msra.mxu0 0.0
        %2813 = vmatprep.subr.mxu0 0.0
        %2814 = vmatpush1.msra.mxu0 0.0
        %2815 = vmatprep.subr.mxu0 0.0
        %2816 = vmatpush1.msra.mxu0 0.0
        %2817 = vmatprep.subr.mxu0 0.0
        %2818 = vmatpush1.msra.mxu0 0.0
        %2819 = vmatprep.subr.mxu0 0.0
        %2820 = vmatpush1.msra.mxu0 0.0
        %2821 = vmatprep.subr.mxu0 0.0
        %2822 = vmatpush1.msra.mxu0 0.0
        %2823 = vmatprep.subr.mxu0 0.0
        %2824 = vmatpush1.msra.mxu0 0.0
        %2825 = vmatprep.subr.mxu0 0.0
        %2826 = vmatpush1.msra.mxu0 0.0
        %2827 = vmatprep.subr.mxu0 0.0
        %2828 = vmatpush1.msra.mxu0 0.0
        %2829 = vmatprep.subr.mxu0 0.0
        %2830 = vmatpush1.msra.mxu0 0.0
        %2831 = vmatprep.mubr.f32.mxu0 0.0
        %2832 = vmatmul.mubr.f32.gmra.mrb[0].mxu0 %v2765
        %v2833 = vpop.f32.mrb[0].mxu0
        %v2834 = vadd.f32 0.0, %v2833
        %v2835 = vpop.f32.mrb[0].mxu0
        %2836 = vdwg.mxu0
        %v2837 = vadd.f32 %v2594, %v2834
        %2838 = vrot.lane.b32.xlu0 %v2110, 104
        %v2839 = vpop.permute.xlu0 %2838
        %2840 = vrot.lane.b32.xlu0 %v2110, 72
        %v2841 = vpop.permute.xlu0 %2840
        %v2842 = vsel %vm812, %v2839, 0
        %v2844 = vsel %vm812, %v2841, 0
        %2846 = vmatprep.subr.mxu0 0.0
        %2847 = vmatpush1.xpose.msra.mxu0 %v2844
        %2848 = vmatprep.subr.mxu0 0.0
        %2849 = vmatpush1.xpose.msra.mxu0 0.0
        %2850 = vmatprep.subr.mxu0 0.0
        %2851 = vmatpush1.xpose.msra.mxu0 0.0
        %2852 = vmatprep.subr.mxu0 0.0
        %2853 = vmatpush1.xpose.msra.mxu0 0.0
        %2854 = vmatprep.subr.mxu0 0.0
        %2855 = vmatpush1.xpose.msra.mxu0 0.0
        %2856 = vmatprep.subr.mxu0 0.0
        %2857 = vmatpush1.xpose.msra.mxu0 0.0
        %2858 = vmatprep.subr.mxu0 0.0
        %2859 = vmatpush1.xpose.msra.mxu0 0.0
        %2860 = vmatprep.subr.mxu0 0.0
        %2861 = vmatpush1.xpose.msra.mxu0 0.0
        %2862 = vmatprep.subr.mxu0 0.0
        %2863 = vmatpush1.xpose.msra.mxu0 0.0
        %2864 = vmatprep.subr.mxu0 0.0
        %2865 = vmatpush1.xpose.msra.mxu0 0.0
        %2866 = vmatprep.subr.mxu0 0.0
        %2867 = vmatpush1.xpose.msra.mxu0 0.0
        %2868 = vmatprep.subr.mxu0 0.0
        %2869 = vmatpush1.xpose.msra.mxu0 0.0
        %2870 = vmatprep.subr.mxu0 0.0
        %2871 = vmatpush1.xpose.msra.mxu0 0.0
        %2872 = vmatprep.subr.mxu0 0.0
        %2873 = vmatpush1.xpose.msra.mxu0 0.0
        %2874 = vmatprep.subr.mxu0 0.0
        %2875 = vmatpush1.xpose.msra.mxu0 0.0
        %2876 = vmatprep.subr.mxu0 0.0
        %2877 = vmatpush1.xpose.msra.mxu0 0.0
        %2878 = vmatprep.subr.mxu0 0.0
        %2879 = vmatpush1.xpose.msra.mxu0 0.0
        %2880 = vmatprep.subr.mxu0 0.0
        %2881 = vmatpush1.xpose.msra.mxu0 0.0
        %2882 = vmatprep.subr.mxu0 0.0
        %2883 = vmatpush1.xpose.msra.mxu0 0.0
        %2884 = vmatprep.subr.mxu0 0.0
        %2885 = vmatpush1.xpose.msra.mxu0 0.0
        %2886 = vmatprep.subr.mxu0 0.0
        %2887 = vmatpush1.xpose.msra.mxu0 0.0
        %2888 = vmatprep.subr.mxu0 0.0
        %2889 = vmatpush1.xpose.msra.mxu0 0.0
        %2890 = vmatprep.subr.mxu0 0.0
        %2891 = vmatpush1.xpose.msra.mxu0 0.0
        %2892 = vmatprep.subr.mxu0 0.0
        %2893 = vmatpush1.xpose.msra.mxu0 0.0
        %2894 = vmatprep.subr.mxu0 0.0
        %2895 = vmatpush1.xpose.msra.mxu0 0.0
        %2896 = vmatprep.subr.mxu0 0.0
        %2897 = vmatpush1.xpose.msra.mxu0 0.0
        %2898 = vmatprep.subr.mxu0 0.0
        %2899 = vmatpush1.xpose.msra.mxu0 0.0
        %2900 = vmatprep.subr.mxu0 0.0
        %2901 = vmatpush1.xpose.msra.mxu0 0.0
        %2902 = vmatprep.subr.mxu0 0.0
        %2903 = vmatpush1.xpose.msra.mxu0 0.0
        %2904 = vmatprep.subr.mxu0 0.0
        %2905 = vmatpush1.xpose.msra.mxu0 0.0
        %2906 = vmatprep.subr.mxu0 0.0
        %2907 = vmatpush1.xpose.msra.mxu0 0.0
        %2908 = vmatprep.subr.mxu0 0.0
        %2909 = vmatpush1.xpose.msra.mxu0 0.0
        %2910 = vmatprep.mubr.f32.mxu0 0.0
        %2911 = vmatmul.mubr.f32.gmra.mrb[0].mxu0 %v2842
        %v2912 = vpop.f32.mrb[0].mxu0
        %v2913 = vadd.f32 0.0, %v2912
        %v2914 = vpop.f32.mrb[0].mxu0
        %2915 = vdwg.mxu0
        %v2916 = vmul.f32 %v2913, 0.35355338
        %v2917 = vadd.f32 %v2916, %v892
        %v2918 = vsel %vm812, %v2917, -inf
        %2919 = vmax.xlane.f32.xlu0 %v2918
        %v2920 = vpop.xlane.xlu0 %2919
        %v2921 = vsub.f32 %v2917, %v2920
        %v2922 = vmul.f32 %v2921, 1.442695
        %v2923 = vpow.pop %v2922
        %v2924 = vsel %vm812, %v2923, 0.0
        %2925 = vadd.xlane.f32.xlu0 %v2924
        %v2926 = vpop.xlane.xlu0 %2925
        %v2927 = vrcp.pop %v2926
        %v2928 = vmul.f32 %v2923, %v2927
        %2929 = vrot.lane.b32.xlu0 %v2110, 40
        %v2930 = vpop.permute.xlu0 %2929
        %v2933 = vsel %vm812, %v2928, 0
        %2935 = vmatprep.subr.mxu0 0.0
        %2936 = vmatpush1.msra.mxu0 %v2930
        %2937 = vmatprep.subr.mxu0 0.0
        %2938 = vmatpush1.msra.mxu0 0.0
        %2939 = vmatprep.subr.mxu0 0.0
        %2940 = vmatpush1.msra.mxu0 0.0
        %2941 = vmatprep.subr.mxu0 0.0
        %2942 = vmatpush1.msra.mxu0 0.0
        %2943 = vmatprep.subr.mxu0 0.0
        %2944 = vmatpush1.msra.mxu0 0.0
        %2945 = vmatprep.subr.mxu0 0.0
        %2946 = vmatpush1.msra.mxu0 0.0
        %2947 = vmatprep.subr.mxu0 0.0
        %2948 = vmatpush1.msra.mxu0 0.0
        %2949 = vmatprep.subr.mxu0 0.0
        %2950 = vmatpush1.msra.mxu0 0.0
        %2951 = vmatprep.subr.mxu0 0.0
        %2952 = vmatpush1.msra.mxu0 0.0
        %2953 = vmatprep.subr.mxu0 0.0
        %2954 = vmatpush1.msra.mxu0 0.0
        %2955 = vmatprep.subr.mxu0 0.0
        %2956 = vmatpush1.msra.mxu0 0.0
        %2957 = vmatprep.subr.mxu0 0.0
        %2958 = vmatpush1.msra.mxu0 0.0
        %2959 = vmatprep.subr.mxu0 0.0
        %2960 = vmatpush1.msra.mxu0 0.0
        %2961 = vmatprep.subr.mxu0 0.0
        %2962 = vmatpush1.msra.mxu0 0.0
        %2963 = vmatprep.subr.mxu0 0.0
        %2964 = vmatpush1.msra.mxu0 0.0
        %2965 = vmatprep.subr.mxu0 0.0
        %2966 = vmatpush1.msra.mxu0 0.0
        %2967 = vmatprep.subr.mxu0 0.0
        %2968 = vmatpush1.msra.mxu0 0.0
        %2969 = vmatprep.subr.mxu0 0.0
        %2970 = vmatpush1.msra.mxu0 0.0
        %2971 = vmatprep.subr.mxu0 0.0
        %2972 = vmatpush1.msra.mxu0 0.0
        %2973 = vmatprep.subr.mxu0 0.0
        %2974 = vmatpush1.msra.mxu0 0.0
        %2975 = vmatprep.subr.mxu0 0.0
        %2976 = vmatpush1.msra.mxu0 0.0
        %2977 = vmatprep.subr.mxu0 0.0
        %2978 = vmatpush1.msra.mxu0 0.0
        %2979 = vmatprep.subr.mxu0 0.0
        %2980 = vmatpush1.msra.mxu0 0.0
        %2981 = vmatprep.subr.mxu0 0.0
        %2982 = vmatpush1.msra.mxu0 0.0
        %2983 = vmatprep.subr.mxu0 0.0
        %2984 = vmatpush1.msra.mxu0 0.0
        %2985 = vmatprep.subr.mxu0 0.0
        %2986 = vmatpush1.msra.mxu0 0.0
        %2987 = vmatprep.subr.mxu0 0.0
        %2988 = vmatpush1.msra.mxu0 0.0
        %2989 = vmatprep.subr.mxu0 0.0
        %2990 = vmatpush1.msra.mxu0 0.0
        %2991 = vmatprep.subr.mxu0 0.0
        %2992 = vmatpush1.msra.mxu0 0.0
        %2993 = vmatprep.subr.mxu0 0.0
        %2994 = vmatpush1.msra.mxu0 0.0
        %2995 = vmatprep.subr.mxu0 0.0
        %2996 = vmatpush1.msra.mxu0 0.0
        %2997 = vmatprep.subr.mxu0 0.0
        %2998 = vmatpush1.msra.mxu0 0.0
        %2999 = vmatprep.mubr.f32.mxu0 0.0
        %3000 = vmatmul.mubr.f32.gmra.mrb[0].mxu0 %v2933
        %v3001 = vpop.f32.mrb[0].mxu0
        %v3002 = vadd.f32 0.0, %v3001
        %v3003 = vpop.f32.mrb[0].mxu0
        %3004 = vdwg.mxu0
        %v3006 = vsel %vm812, %v3002, 0
        %3008 = vmatprep.subr.mxu0 0.0
        %3009 = vmatpush1.msra.mxu0 %v2117
        %3010 = vmatprep.subr.mxu0 0.0
        %3011 = vmatpush1.msra.mxu0 0.0
        %3012 = vmatprep.subr.mxu0 0.0
        %3013 = vmatpush1.msra.mxu0 0.0
        %3014 = vmatprep.subr.mxu0 0.0
        %3015 = vmatpush1.msra.mxu0 0.0
        %3016 = vmatprep.subr.mxu0 0.0
        %3017 = vmatpush1.msra.mxu0 0.0
        %3018 = vmatprep.subr.mxu0 0.0
        %3019 = vmatpush1.msra.mxu0 0.0
        %3020 = vmatprep.subr.mxu0 0.0
        %3021 = vmatpush1.msra.mxu0 0.0
        %3022 = vmatprep.subr.mxu0 0.0
        %3023 = vmatpush1.msra.mxu0 0.0
        %3024 = vmatprep.subr.mxu0 0.0
        %3025 = vmatpush1.msra.mxu0 0.0
        %3026 = vmatprep.subr.mxu0 0.0
        %3027 = vmatpush1.msra.mxu0 0.0
        %3028 = vmatprep.subr.mxu0 0.0
        %3029 = vmatpush1.msra.mxu0 0.0
        %3030 = vmatprep.subr.mxu0 0.0
        %3031 = vmatpush1.msra.mxu0 0.0
        %3032 = vmatprep.subr.mxu0 0.0
        %3033 = vmatpush1.msra.mxu0 0.0
        %3034 = vmatprep.subr.mxu0 0.0
        %3035 = vmatpush1.msra.mxu0 0.0
        %3036 = vmatprep.subr.mxu0 0.0
        %3037 = vmatpush1.msra.mxu0 0.0
        %3038 = vmatprep.subr.mxu0 0.0
        %3039 = vmatpush1.msra.mxu0 0.0
        %3040 = vmatprep.subr.mxu0 0.0
        %3041 = vmatpush1.msra.mxu0 0.0
        %3042 = vmatprep.subr.mxu0 0.0
        %3043 = vmatpush1.msra.mxu0 0.0
        %3044 = vmatprep.subr.mxu0 0.0
        %3045 = vmatpush1.msra.mxu0 0.0
        %3046 = vmatprep.subr.mxu0 0.0
        %3047 = vmatpush1.msra.mxu0 0.0
        %3048 = vmatprep.subr.mxu0 0.0
        %3049 = vmatpush1.msra.mxu0 0.0
        %3050 = vmatprep.subr.mxu0 0.0
        %3051 = vmatpush1.msra.mxu0 0.0
        %3052 = vmatprep.subr.mxu0 0.0
        %3053 = vmatpush1.msra.mxu0 0.0
        %3054 = vmatprep.subr.mxu0 0.0
        %3055 = vmatpush1.msra.mxu0 0.0
        %3056 = vmatprep.subr.mxu0 0.0
        %3057 = vmatpush1.msra.mxu0 0.0
        %3058 = vmatprep.subr.mxu0 0.0
        %3059 = vmatpush1.msra.mxu0 0.0
        %3060 = vmatprep.subr.mxu0 0.0
        %3061 = vmatpush1.msra.mxu0 0.0
        %3062 = vmatprep.subr.mxu0 0.0
        %3063 = vmatpush1.msra.mxu0 0.0
        %3064 = vmatprep.subr.mxu0 0.0
        %3065 = vmatpush1.msra.mxu0 0.0
        %3066 = vmatprep.subr.mxu0 0.0
        %3067 = vmatpush1.msra.mxu0 0.0
        %3068 = vmatprep.subr.mxu0 0.0
        %3069 = vmatpush1.msra.mxu0 0.0
        %3070 = vmatprep.subr.mxu0 0.0
        %3071 = vmatpush1.msra.mxu0 0.0
        %3072 = vmatprep.mubr.f32.mxu0 0.0
        %3073 = vmatmul.mubr.f32.gmra.mrb[0].mxu0 %v3006
        %v3074 = vpop.f32.mrb[0].mxu0
        %v3075 = vadd.f32 0.0, %v3074
        %v3076 = vpop.f32.mrb[0].mxu0
        %3077 = vdwg.mxu0
        %v3078 = vadd.f32 %v2837, %v3075
        %s3079 = scalar_lea.vmem [#allocation10], 1
        %v3080 = vld [vmem:[%s3079] sm:$0x1]
        %v3082 = vlaneseq
        %v3083 = vshrl.u32 %v3082, 7
        %v3084 = vsub.s32 0, %v3083
        %v3085 = vrot.slane %v3080, %v3084
        %v3087 = vadd.f32 %v3078, %v3085
        %v3088 = vadd.f32 %v2026, %v3087
        %s3089 = scalar_lea.vmem [#allocation11], 1
        %v3090 = vld [vmem:[%s3089] sm:$0x1]
        %s3091 = scalar_lea.vmem [#allocation13], 1
        %v3092 = vld [vmem:[%s3091] sm:$0x1]
        %v3093 = vsel %vm691, %v3088, 0.0
        %3094 = vadd.xlane.f32.xlu0 %v3093
        %v3095 = vpop.xlane.xlu0 %3094
        %v3096 = vmul.f32 %v3095, %v695
        %v3097 = vsub.f32 %v3088, %v3096
        %v3098 = vmul.f32 %v3097, %v3097
        %v3099 = vsel %vm691, %v3098, 0.0
        %3100 = vadd.xlane.f32.xlu0 %v3099
        %v3101 = vpop.xlane.xlu0 %3100
        %v3102 = vmul.f32 %v3101, %v695
        %v3103 = vadd.f32 %v3102, 1e-12
        %v3104 = vrsqrt.pop %v3103
        %v3105 = vmul.f32 %v3097, %v3104
        %v3107 = vlaneseq
        %v3108 = vshrl.u32 %v3107, 7
        %v3109 = vsub.s32 0, %v3108
        %v3110 = vrot.slane %v3090, %v3109
        %v3112 = vmul.f32 %v3105, %v3110
        %v3114 = vlaneseq
        %v3115 = vshrl.u32 %v3114, 7
        %v3116 = vsub.s32 0, %v3115
        %v3117 = vrot.slane %v3092, %v3116
        %v3119 = vadd.f32 %v3112, %v3117
        %s3120 = scalar_lea.vmem %s10, 32
        %v3121 = vld [vmem:[%s3120] sm:$0xff]
        %v3122 = vld [vmem:[%s3120 + $0x8] sm:$0xff]
        %v3123 = vld [vmem:[%s3120 + $0x10] sm:$0xff]
        %v3124 = vld [vmem:[%s3120 + $0x18] sm:$0xff]
        %s3125 = scalar_lea.vmem %s11, 1
        %v3126 = vld [vmem:[%s3125] sm:$0x1]
        %v3128 = vlaneseq
        %v3129 = vshrl.u32 %v3128, 7
        %v3130 = vsub.s32 0, %v3129
        %v3131 = vrot.slane %v3126, %v3130
        %v3134 = vsel %vm691, %v3119, 0
        %3136 = vmatprep.subr.mxu0 0.0
        %3137 = vmatpush1.msra.mxu0 %v3121
        %3138 = vmatprep.subr.mxu0 0.0
        %3139 = vmatpush1.msra.mxu0 %v3122
        %3140 = vmatprep.subr.mxu0 0.0
        %3141 = vmatpush1.msra.mxu0 %v3123
        %3142 = vmatprep.subr.mxu0 0.0
        %3143 = vmatpush1.msra.mxu0 %v3124
        %3144 = vmatprep.subr.mxu0 0.0
        %3145 = vmatpush1.msra.mxu0 0.0
        %3146 = vmatprep.subr.mxu0 0.0
        %3147 = vmatpush1.msra.mxu0 0.0
        %3148 = vmatprep.subr.mxu0 0.0
        %3149 = vmatpush1.msra.mxu0 0.0
        %3150 = vmatprep.subr.mxu0 0.0
        %3151 = vmatpush1.msra.mxu0 0.0
        %3152 = vmatprep.subr.mxu0 0.0
        %3153 = vmatpush1.msra.mxu0 0.0
        %3154 = vmatprep.subr.mxu0 0.0
        %3155 = vmatpush1.msra.mxu0 0.0
        %3156 = vmatprep.subr.mxu0 0.0
        %3157 = vmatpush1.msra.mxu0 0.0
        %3158 = vmatprep.subr.mxu0 0.0
        %3159 = vmatpush1.msra.mxu0 0.0
        %3160 = vmatprep.subr.mxu0 0.0
        %3161 = vmatpush1.msra.mxu0 0.0
        %3162 = vmatprep.subr.mxu0 0.0
        %3163 = vmatpush1.msra.mxu0 0.0
        %3164 = vmatprep.subr.mxu0 0.0
        %3165 = vmatpush1.msra.mxu0 0.0
        %3166 = vmatprep.subr.mxu0 0.0
        %3167 = vmatpush1.msra.mxu0 0.0
        %3168 = vmatprep.subr.mxu0 0.0
        %3169 = vmatpush1.msra.mxu0 0.0
        %3170 = vmatprep.subr.mxu0 0.0
        %3171 = vmatpush1.msra.mxu0 0.0
        %3172 = vmatprep.subr.mxu0 0.0
        %3173 = vmatpush1.msra.mxu0 0.0
        %3174 = vmatprep.subr.mxu0 0.0
        %3175 = vmatpush1.msra.mxu0 0.0
        %3176 = vmatprep.subr.mxu0 0.0
        %3177 = vmatpush1.msra.mxu0 0.0
        %3178 = vmatprep.subr.mxu0 0.0
        %3179 = vmatpush1.msra.mxu0 0.0
        %3180 = vmatprep.subr.mxu0 0.0
        %3181 = vmatpush1.msra.mxu0 0.0
        %3182 = vmatprep.subr.mxu0 0.0
        %3183 = vmatpush1.msra.mxu0 0.0
        %3184 = vmatprep.subr.mxu0 0.0
        %3185 = vmatpush1.msra.mxu0 0.0
        %3186 = vmatprep.subr.mxu0 0.0
        %3187 = vmatpush1.msra.mxu0 0.0
        %3188 = vmatprep.subr.mxu0 0.0
        %3189 = vmatpush1.msra.mxu0 0.0
        %3190 = vmatprep.subr.mxu0 0.0
        %3191 = vmatpush1.msra.mxu0 0.0
        %3192 = vmatprep.subr.mxu0 0.0
        %3193 = vmatpush1.msra.mxu0 0.0
        %3194 = vmatprep.subr.mxu0 0.0
        %3195 = vmatpush1.msra.mxu0 0.0
        %3196 = vmatprep.subr.mxu0 0.0
        %3197 = vmatpush1.msra.mxu0 0.0
        %3198 = vmatprep.subr.mxu0 0.0
        %3199 = vmatpush1.msra.mxu0 0.0
        %3200 = vmatprep.mubr.f32.mxu0 0.0
        %3201 = vmatmul.mubr.f32.gmra.mrb[0].mxu0 %v3134
        %v3202 = vpop.f32.mrb[0].mxu0
        %v3203 = vadd.f32 %v3131, %v3202
        %v3204 = vpop.f32.mrb[0].mxu0
        %3205 = vdwg.mxu0
        %v3206 = vmul.f32 %v3203, 0.5
        %v3207 = vmul.f32 %v3203, 0.044715
        %v3208 = vmul.f32 %v3207, %v3203
        %v3209 = vmul.f32 %v3208, %v3203
        %v3210 = vadd.f32 %v3203, %v3209
        %v3211 = vmul.f32 %v3210, 0.7978846
        %v3212 = vtanh.pop %v3211
        %v3213 = vadd.f32 %v3212, 1.0
        %v3214 = vmul.f32 %v3206, %v3213
        %s3215 = scalar_lea.vmem %s12, 64
        %v3216 = vld [vmem:[%s3215] sm:$0xff]
        %v3217 = vld [vmem:[%s3215 + $0x8] sm:$0xff]
        %v3218 = vld [vmem:[%s3215 + $0x10] sm:$0xff]
        %v3219 = vld [vmem:[%s3215 + $0x18] sm:$0xff]
        %v3220 = vld [vmem:[%s3215 + $0x20] sm:$0xff]
        %v3221 = vld [vmem:[%s3215 + $0x28] sm:$0xff]
        %v3222 = vld [vmem:[%s3215 + $0x30] sm:$0xff]
        %v3223 = vld [vmem:[%s3215 + $0x38] sm:$0xff]
        %s3224 = scalar_lea.vmem %s13, 1
        %v3225 = vld [vmem:[%s3224] sm:$0x1]
        %v3227 = vlaneseq
        %v3228 = vshrl.u32 %v3227, 7
        %v3229 = vsub.s32 0, %v3228
        %v3230 = vrot.slane %v3225, %v3229
        %v3233 = vsel %vm1923, %v3214, 0
        %3235 = vmatprep.subr.mxu0 0.0
        %3236 = vmatpush1.msra.mxu0 %v3216
        %3237 = vmatprep.subr.mxu0 0.0
        %3238 = vmatpush1.msra.mxu0 %v3217
        %3239 = vmatprep.subr.mxu0 0.0
        %3240 = vmatpush1.msra.mxu0 %v3218
        %3241 = vmatprep.subr.mxu0 0.0
        %3242 = vmatpush1.msra.mxu0 %v3219
        %3243 = vmatprep.subr.mxu0 0.0
        %3244 = vmatpush1.msra.mxu0 %v3220
        %3245 = vmatprep.subr.mxu0 0.0
        %3246 = vmatpush1.msra.mxu0 %v3221
        %3247 = vmatprep.subr.mxu0 0.0
        %3248 = vmatpush1.msra.mxu0 %v3222
        %3249 = vmatprep.subr.mxu0 0.0
        %3250 = vmatpush1.msra.mxu0 %v3223
        %3251 = vmatprep.subr.mxu0 0.0
        %3252 = vmatpush1.msra.mxu0 0.0
        %3253 = vmatprep.subr.mxu0 0.0
        %3254 = vmatpush1.msra.mxu0 0.0
        %3255 = vmatprep.subr.mxu0 0.0
        %3256 = vmatpush1.msra.mxu0 0.0
        %3257 = vmatprep.subr.mxu0 0.0
        %3258 = vmatpush1.msra.mxu0 0.0
        %3259 = vmatprep.subr.mxu0 0.0
        %3260 = vmatpush1.msra.mxu0 0.0
        %3261 = vmatprep.subr.mxu0 0.0
        %3262 = vmatpush1.msra.mxu0 0.0
        %3263 = vmatprep.subr.mxu0 0.0
        %3264 = vmatpush1.msra.mxu0 0.0
        %3265 = vmatprep.subr.mxu0 0.0
        %3266 = vmatpush1.msra.mxu0 0.0
        %3267 = vmatprep.subr.mxu0 0.0
        %3268 = vmatpush1.msra.mxu0 0.0
        %3269 = vmatprep.subr.mxu0 0.0
        %3270 = vmatpush1.msra.mxu0 0.0
        %3271 = vmatprep.subr.mxu0 0.0
        %3272 = vmatpush1.msra.mxu0 0.0
        %3273 = vmatprep.subr.mxu0 0.0
        %3274 = vmatpush1.msra.mxu0 0.0
        %3275 = vmatprep.subr.mxu0 0.0
        %3276 = vmatpush1.msra.mxu0 0.0
        %3277 = vmatprep.subr.mxu0 0.0
        %3278 = vmatpush1.msra.mxu0 0.0
        %3279 = vmatprep.subr.mxu0 0.0
        %3280 = vmatpush1.msra.mxu0 0.0
        %3281 = vmatprep.subr.mxu0 0.0
        %3282 = vmatpush1.msra.mxu0 0.0
        %3283 = vmatprep.subr.mxu0 0.0
        %3284 = vmatpush1.msra.mxu0 0.0
        %3285 = vmatprep.subr.mxu0 0.0
        %3286 = vmatpush1.msra.mxu0 0.0
        %3287 = vmatprep.subr.mxu0 0.0
        %3288 = vmatpush1.msra.mxu0 0.0
        %3289 = vmatprep.subr.mxu0 0.0
        %3290 = vmatpush1.msra.mxu0 0.0
        %3291 = vmatprep.subr.mxu0 0.0
        %3292 = vmatpush1.msra.mxu0 0.0
        %3293 = vmatprep.subr.mxu0 0.0
        %3294 = vmatpush1.msra.mxu0 0.0
        %3295 = vmatprep.subr.mxu0 0.0
        %3296 = vmatpush1.msra.mxu0 0.0
        %3297 = vmatprep.subr.mxu0 0.0
        %3298 = vmatpush1.msra.mxu0 0.0
        %3299 = vmatprep.mubr.f32.mxu0 0.0
        %3300 = vmatmul.mubr.f32.gmra.mrb[0].mxu0 %v3233
        %v3301 = vpop.f32.mrb[0].mxu0
        %v3302 = vadd.f32 %v3230, %v3301
        %v3303 = vpop.f32.mrb[0].mxu0
        %3304 = vdwg.mxu0
        %v3305 = vadd.f32 %v3119, %v3302
        %s3306 = scalar_lea.vmem %s14, 1
        %v3307 = vld [vmem:[%s3306] sm:$0x1]
        %s3308 = scalar_lea.vmem %s15, 1
        %v3309 = vld [vmem:[%s3308] sm:$0x1]
        %v3310 = vsel %vm691, %v3305, 0.0
        %3311 = vadd.xlane.f32.xlu0 %v3310
        %v3312 = vpop.xlane.xlu0 %3311
        %v3313 = vmul.f32 %v3312, %v695
        %v3314 = vsub.f32 %v3305, %v3313
        %v3315 = vmul.f32 %v3314, %v3314
        %v3316 = vsel %vm691, %v3315, 0.0
        %3317 = vadd.xlane.f32.xlu0 %v3316
        %v3318 = vpop.xlane.xlu0 %3317
        %v3319 = vmul.f32 %v3318, %v695
        %v3320 = vadd.f32 %v3319, 1e-12
        %v3321 = vrsqrt.pop %v3320
        %v3322 = vmul.f32 %v3314, %v3321
        %v3324 = vlaneseq
        %v3325 = vshrl.u32 %v3324, 7
        %v3326 = vsub.s32 0, %v3325
        %v3327 = vrot.slane %v3307, %v3326
        %v3329 = vmul.f32 %v3322, %v3327
        %v3331 = vlaneseq
        %v3332 = vshrl.u32 %v3331, 7
        %v3333 = vsub.s32 0, %v3332
        %v3334 = vrot.slane %v3309, %v3333
        %v3336 = vadd.f32 %v3329, %v3334
        %v3337 = vld [vmem:[%s16] sm:$0xff]
        %v3338 = vld [vmem:[%s16 + $0x8] sm:$0xff]
        %v3339 = vld [vmem:[%s16 + $0x10] sm:$0xff]
        %v3340 = vld [vmem:[%s16 + $0x18] sm:$0xff]
        %v3341 = vld [vmem:[%s17] sm:$0x1]
        %v3343 = vlaneseq
        %v3344 = vshrl.u32 %v3343, 7
        %v3345 = vsub.s32 0, %v3344
        %v3346 = vrot.slane %v3341, %v3345
        %v3349 = vsel %vm691, %v3336, 0
        %3351 = vmatprep.subr.mxu0 0.0
        %3352 = vmatpush1.msra.mxu0 %v3337
        %3353 = vmatprep.subr.mxu0 0.0
        %3354 = vmatpush1.msra.mxu0 %v3338
        %3355 = vmatprep.subr.mxu0 0.0
        %3356 = vmatpush1.msra.mxu0 %v3339
        %3357 = vmatprep.subr.mxu0 0.0
        %3358 = vmatpush1.msra.mxu0 %v3340
        %3359 = vmatprep.subr.mxu0 0.0
        %3360 = vmatpush1.msra.mxu0 0.0
        %3361 = vmatprep.subr.mxu0 0.0
        %3362 = vmatpush1.msra.mxu0 0.0
        %3363 = vmatprep.subr.mxu0 0.0
        %3364 = vmatpush1.msra.mxu0 0.0
        %3365 = vmatprep.subr.mxu0 0.0
        %3366 = vmatpush1.msra.mxu0 0.0
        %3367 = vmatprep.subr.mxu0 0.0
        %3368 = vmatpush1.msra.mxu0 0.0
        %3369 = vmatprep.subr.mxu0 0.0
        %3370 = vmatpush1.msra.mxu0 0.0
        %3371 = vmatprep.subr.mxu0 0.0
        %3372 = vmatpush1.msra.mxu0 0.0
        %3373 = vmatprep.subr.mxu0 0.0
        %3374 = vmatpush1.msra.mxu0 0.0
        %3375 = vmatprep.subr.mxu0 0.0
        %3376 = vmatpush1.msra.mxu0 0.0
        %3377 = vmatprep.subr.mxu0 0.0
        %3378 = vmatpush1.msra.mxu0 0.0
        %3379 = vmatprep.subr.mxu0 0.0
        %3380 = vmatpush1.msra.mxu0 0.0
        %3381 = vmatprep.subr.mxu0 0.0
        %3382 = vmatpush1.msra.mxu0 0.0
        %3383 = vmatprep.subr.mxu0 0.0
        %3384 = vmatpush1.msra.mxu0 0.0
        %3385 = vmatprep.subr.mxu0 0.0
        %3386 = vmatpush1.msra.mxu0 0.0
        %3387 = vmatprep.subr.mxu0 0.0
        %3388 = vmatpush1.msra.mxu0 0.0
        %3389 = vmatprep.subr.mxu0 0.0
        %3390 = vmatpush1.msra.mxu0 0.0
        %3391 = vmatprep.subr.mxu0 0.0
        %3392 = vmatpush1.msra.mxu0 0.0
        %3393 = vmatprep.subr.mxu0 0.0
        %3394 = vmatpush1.msra.mxu0 0.0
        %3395 = vmatprep.subr.mxu0 0.0
        %3396 = vmatpush1.msra.mxu0 0.0
        %3397 = vmatprep.subr.mxu0 0.0
        %3398 = vmatpush1.msra.mxu0 0.0
        %3399 = vmatprep.subr.mxu0 0.0
        %3400 = vmatpush1.msra.mxu0 0.0
        %3401 = vmatprep.subr.mxu0 0.0
        %3402 = vmatpush1.msra.mxu0 0.0
        %3403 = vmatprep.subr.mxu0 0.0
        %3404 = vmatpush1.msra.mxu0 0.0
        %3405 = vmatprep.subr.mxu0 0.0
        %3406 = vmatpush1.msra.mxu0 0.0
        %3407 = vmatprep.subr.mxu0 0.0
        %3408 = vmatpush1.msra.mxu0 0.0
        %3409 = vmatprep.subr.mxu0 0.0
        %3410 = vmatpush1.msra.mxu0 0.0
        %3411 = vmatprep.subr.mxu0 0.0
        %3412 = vmatpush1.msra.mxu0 0.0
        %3413 = vmatprep.subr.mxu0 0.0
        %3414 = vmatpush1.msra.mxu0 0.0
        %3415 = vmatprep.mubr.f32.mxu0 0.0
        %3416 = vmatmul.mubr.f32.gmra.mrb[0].mxu0 %v3349
        %v3417 = vpop.f32.mrb[0].mxu0
        %v3418 = vadd.f32 %v3346, %v3417
        %v3419 = vpop.f32.mrb[0].mxu0
        %3420 = vdwg.mxu0
        %3421 = vst [vmem:[%s684] sm:$0xff] %v3418
        %s3422 = sand.u32 %s434, 1
        %s3423 = scalar_lea.sflag [#allocation4], %s3422
        %s3424 = sand.u32 %s434, 1
        %s3425 = smul.addr %s3424, 8
        %s3426 = scalar_lea.vmem [#allocation14], %s3425
        // Predicated region
        $region121: #{tpu_custom_call.1} parent=91 // pred_check
          %p3427 = pneg %p444
        $region122: #{tpu_custom_call.1} parent=91 // pred_check_branch
          %3429 = sbr.rel (%p3427) target = $region124
        $region123: #{tpu_custom_call.1} parent=91 // pred_region
          %s3431 = ssub.s32 128, 128
          %3432 = vsyncadd %s3423, %s3431
          %s3433 = smul.addr %s38, 128
          %s3434 = scalar_lea.hbm %s18, %s3433
          %s3436 = sshll.u32 %s3426, 4
          %s3437 = int_to_ptr.vmem [resolvable:$true] %s3436
          %3439 = dma.vmem_to_hbm [thread:$0]  %s3437, 128, %s3434, %s3423
        $region124: #{tpu_custom_call.1} parent=91 // pred_fallthru
          _
      $region92: #{tpu_custom_call.1} parent=5 // pred_fallthru
        _
      %p3440 = scmp.le.s32.totalorder 2, %s33
      // Predicated region
      $region125: #{tpu_custom_call.1} parent=5 // pred_check
        %p3441 = pneg %p3440
      $region126: #{tpu_custom_call.1} parent=5 // pred_check_branch
        %3443 = sbr.rel (%p3441) target = $region128
      $region127: #{tpu_custom_call.1} parent=5 // pred_region
        %s3444 = ssub.s32 %s33, 2
        // Predicated region
        $region129: #{tpu_custom_call.1} parent=127 // pred_check
          %p3445 = pneg %p450
        $region130: #{tpu_custom_call.1} parent=127 // pred_check_branch
          %3447 = sbr.rel (%p3445) target = $region132
        $region131: #{tpu_custom_call.1} parent=127 // pred_region
          %s3448 = sand.u32 %s435, 1
          %s3449 = scalar_lea.sflag [#allocation4], %s3448
          %s3450 = sand.u32 %s435, 1
          %s3451 = smul.addr %s3450, 8
          %s3452 = scalar_lea.vmem [#allocation14], %s3451
          %3453 = dma.done %s3449, 128
        $region132: #{tpu_custom_call.1} parent=127 // pred_fallthru
          _
      $region128: #{tpu_custom_call.1} parent=5 // pred_fallthru
        _
    $region6: #{tpu_custom_call.1} parent=1 // loop_footer
      %s37 = sadd.s32 1, %s33
    $region7: #{tpu_custom_call.1} parent=1 // loop_footer_branch
      %32 = sbr.rel target = $region3
    $region8: #{tpu_custom_call.1} parent=1 // loop_exit
      _
    %3454 = vsyncpa [#allocation3], 1
    %s3455 = scalar_lea.sflag [#allocation3], 1
    %3456 = vsyncpa %s3455, 1
    %3457 = vsyncpa [#allocation6], 1
    %3458 = vsyncpa [#allocation9], 1
    %3459 = vsyncpa [#allocation12], 1
    %3460 = vsyncpa [#allocation4], 1
    %s3461 = scalar_lea.sflag [#allocation4], 1
    %3462 = vsyncpa %s3461, 1

</llo_original>
